<compile_context>
chip_gen: v7x
topology: tpu7x:2x2x1
jax: 0.10.0
libtpu: 0.0.40
codegen_flags: <defaults>
</compile_context>

<pallas_src>
import functools
import math

import jax
import jax.numpy as jnp
from jax.experimental import pallas as pl
from jax.experimental.pallas import tpu as pltpu

_MiB = 1024 * 1024
_VMEM_CAP = 64 * _MiB          # <= physical VMEM on every generation (v7x=64MiB)
_TILE_BUDGET = 28 * _MiB       # double-buffered working-set target per dense


# ----------------------------------------------------------------------------
# helpers
# ----------------------------------------------------------------------------

def _gelu_tanh(x):
    # BERT-style tanh GELU approximation (EUP tanh).
    c = math.sqrt(2.0 / math.pi)
    return 0.5 * x * (1.0 + jnp.tanh(c * (x + 0.044715 * x * x * x)))


def _layernorm(x, g, b, eps):
    mu = jnp.mean(x, axis=-1, keepdims=True)
    cx = x - mu
    var = jnp.mean(cx * cx, axis=-1, keepdims=True)
    return cx * jax.lax.rsqrt(var + eps) * g + b


def _pick_tile(dim, prefs):
    """Largest preferred tile that divides dim; else the full dim (always legal)."""
    for p in prefs:
        if dim % p == 0:
            return p
    return dim


def _vmem_limit(est_bytes):
    # explicit scoped-VMEM limit sized from the tile estimate, never below the
    # v6e/v7x default (32 MiB) and never above v7x physical (64 MiB).
    return int(min(_VMEM_CAP, max(32 * _MiB, 2 * est_bytes)))


def _dense_tiles(M, N, K, has_ln, x_bytes, out_bytes, has_res,
                 budget=_TILE_BUDGET):
    """Pick (tm, tn, tk) so the double-buffered working set fits `budget`."""
    tm_opts = [t for t in (512, 256, 128) if M % t == 0] or [M]
    tn_opts = [t for t in (512, 256, 128) if N % t == 0] or [N]
    if has_ln or K <= 1536:          # LN needs the full feature dim per row
        tk_opts = [K]
    else:
        tk_opts = [t for t in (1536, 1024, 768, 512, 256) if K % t == 0] or [K]

    def est(tm, tn, tk):
        b = 2 * 2 * tm * tk * x_bytes          # xr/xi blocks, double-buffered
        b += 2 * 2 * tk * tn * 2               # wr/wi blocks (bf16), dbl-buffered
        b += 2 * 2 * tn * 4                    # biases
        if has_ln:
            b += 4 * 2 * K * 4                 # LN gamma/beta (re, im)
        if has_res:
            b += 2 * 2 * tm * tn * 4           # residual re/im (f32)
        b += 2 * 2 * tm * tn * out_bytes       # outputs re/im
        b += 2 * tm * tn * 4                   # f32 accumulator scratch
        return b

    # prefer shrinking tm, then tn, then tk
    for tk in tk_opts:
        for tn in tn_opts:
            for tm in tm_opts:
                if est(tm, tn, tk) <= budget:
                    return tm, tn, tk, est(tm, tn, tk)
    tm, tn, tk = tm_opts[-1], tn_opts[-1], tk_opts[-1]
    return tm, tn, tk, est(tm, tn, tk)


# ----------------------------------------------------------------------------
# fused LayerNorm + complex dense (+ GELU) (+ residual) kernel
#   grid = (N//tn, M//tm, K//tk); K innermost ("arbitrary"); weight block is
#   resident across the inner M axis when K fits in one block.
# ----------------------------------------------------------------------------

def _ln_cdense_kernel(*refs, has_ln, has_res, activation, eps, single_k):
    it = iter(refs)
    xr_ref, xi_ref = next(it), next(it)
    if has_ln:
        gr_ref, b0r_ref = next(it), next(it)
        gi_ref, b0i_ref = next(it), next(it)
    wr_ref, wi_ref, br_ref, bi_ref = next(it), next(it), next(it), next(it)
    if has_res:
        rr_ref, ri_ref = next(it), next(it)
    yr_ref, yi_ref = next(it), next(it)
    if not single_k:
        accr_ref, acci_ref = next(it), next(it)

    xr = xr_ref[...]
    xi = xi_ref[...]
    if has_ln:                               # LN stats in f32 over full K
        xr = _layernorm(xr.astype(jnp.float32), gr_ref[...], b0r_ref[...], eps)
        xi = _layernorm(xi.astype(jnp.float32), gi_ref[...], b0i_ref[...], eps)
    xr_b = xr.astype(jnp.bfloat16)
    xi_b = xi.astype(jnp.bfloat16)
    wr = wr_ref[...]                         # bf16 (cast in wrapper)
    wi = wi_ref[...]

    # Direct 4-multiply complex product (avoids the Gauss-trick bf16
    # cancellation on the imaginary part), f32 accumulation on the MXU.
    prr = jnp.dot(xr_b, wr, preferred_element_type=jnp.float32)
    pii = jnp.dot(xi_b, wi, preferred_element_type=jnp.float32)
    pri = jnp.dot(xr_b, wi, preferred_element_type=jnp.float32)
    pir = jnp.dot(xi_b, wr, preferred_element_type=jnp.float32)
    part_r = prr - pii
    part_i = pri + pir

    def epilogue(yr, yi):
        yr = yr + br_ref[...]
        yi = yi + bi_ref[...]
        if activation == "gelu":
            yr = _gelu_tanh(yr)
            yi = _gelu_tanh(yi)
        if has_res:
            yr = yr + rr_ref[...]
            yi = yi + ri_ref[...]
        yr_ref[...] = yr.astype(yr_ref.dtype)
        yi_ref[...] = yi.astype(yi_ref.dtype)

    if single_k:
        epilogue(part_r, part_i)
    else:
        k_id = pl.program_id(2)

        @pl.when(k_id == 0)
        def _():
            accr_ref[...] = jnp.zeros_like(accr_ref)
            acci_ref[...] = jnp.zeros_like(acci_ref)

        accr_ref[...] += part_r
        acci_ref[...] += part_i

        @pl.when(k_id == pl.num_programs(2) - 1)
        def _():
            epilogue(accr_ref[...], acci_ref[...])


def ln_complex_dense(xr, xi, dense_params, ln=None, residual=None,
                     activation=None, out_dtype=jnp.float32, eps=1e-5):
    """y = [LN(x)] @ (wr + i wi) + b [+ gelu] [+ residual]; x, y split re/im."""
    wr, wi, br, bi = dense_params
    M, K = xr.shape
    N = wr.shape[1]
    has_ln = ln is not None
    has_res = residual is not None

    tm, tn, tk, est = _dense_tiles(
        M, N, K, has_ln,
        x_bytes=jnp.dtype(xr.dtype).itemsize,
        out_bytes=jnp.dtype(out_dtype).itemsize,
        has_res=has_res)
    nk = K // tk
    single_k = nk == 1

    wr_b = wr.astype(jnp.bfloat16)           # halve weight HBM traffic
    wi_b = wi.astype(jnp.bfloat16)

    x_spec = pl.BlockSpec((tm, tk), lambda j, i, k: (i, k))
    w_spec = pl.BlockSpec((tk, tn), lambda j, i, k: (k, j))
    b_spec = pl.BlockSpec((1, tn), lambda j, i, k: (0, j))
    y_spec = pl.BlockSpec((tm, tn), lambda j, i, k: (i, j))

    in_specs = [x_spec, x_spec]
    args = [xr, xi]
    if has_ln:
        g_r, be_r, g_i, be_i = ln
        ln_spec = pl.BlockSpec((1, K), lambda j, i, k: (0, 0))
        in_specs += [ln_spec, ln_spec, ln_spec, ln_spec]
        args += [g_r.reshape(1, K), be_r.reshape(1, K),
                 g_i.reshape(1, K), be_i.reshape(1, K)]
    in_specs += [w_spec, w_spec, b_spec, b_spec]
    args += [wr_b, wi_b, br.reshape(1, N), bi.reshape(1, N)]
    if has_res:
        rr, ri = residual
        in_specs += [y_spec, y_spec]
        args += [rr, ri]

    scratch_shapes = [] if single_k else [pltpu.VMEM((tm, tn), jnp.float32),
                                          pltpu.VMEM((tm, tn), jnp.float32)]

    kernel = functools.partial(_ln_cdense_kernel, has_ln=has_ln,
                               has_res=has_res, activation=activation,
                               eps=eps, single_k=single_k)
    grid_spec = pltpu.PrefetchScalarGridSpec(
        num_scalar_prefetch=0,
        grid=(N // tn, M // tm, nk),
        in_specs=in_specs,
        out_specs=(y_spec, y_spec),
        scratch_shapes=scratch_shapes)

    yr, yi = pl.pallas_call(
        kernel,
        out_shape=(jax.ShapeDtypeStruct((M, N), out_dtype),
                   jax.ShapeDtypeStruct((M, N), out_dtype)),
        grid_spec=grid_spec,
        compiler_params=pltpu.CompilerParams(
            dimension_semantics=("parallel", "parallel", "arbitrary"),
            vmem_limit_bytes=_vmem_limit(est)),
    )(*args)
    return yr, yi


# ----------------------------------------------------------------------------
# flash-style complex attention.
#   scores(h) = Re(Q_h conj(K_h)^T) = [qr|qi] . [kr|ki]  (one 2d-wide matmul)
#   Reads the fused QKV buffer [B, S, 3H] directly (full-width blocks, so the
#   BlockSpec last dim is always the full array dim -> layout-safe for any H)
#   and writes a lane-dense [B, S, H] bf16 output with heads merged in-kernel.
# ----------------------------------------------------------------------------

def _cattn_kernel(qx_r_ref, qx_i_ref, kvx_r_ref, kvx_i_ref, bias_ref,
                  or_ref, oi_ref, m_sc, l_sc, acc_sc, *, nheads, hidden, scale):
    nh, H = nheads, hidden
    d = H // nh
    kv = pl.program_id(2)

    @pl.when(kv == 0)
    def _():
        m_sc[...] = jnp.full_like(m_sc, -jnp.inf)
        l_sc[...] = jnp.zeros_like(l_sc)
        acc_sc[...] = jnp.zeros_like(acc_sc)

    bias = bias_ref[...]                     # (1, tkv) additive key mask

    for h in range(nh):                      # static unroll over heads
        qs = slice(h * d, (h + 1) * d)
        ks = slice(H + h * d, H + (h + 1) * d)
        vs = slice(2 * H + h * d, 2 * H + (h + 1) * d)
        # pack re|im along the feature axis -> one 2d-wide contraction
        q_h = jnp.concatenate([qx_r_ref[:, qs], qx_i_ref[:, qs]], axis=-1)
        k_h = jnp.concatenate([kvx_r_ref[:, ks], kvx_i_ref[:, ks]], axis=-1)
        v_h = jnp.concatenate([kvx_r_ref[:, vs], kvx_i_ref[:, vs]], axis=-1)

        s = jax.lax.dot_general(q_h, k_h, (((1,), (1,)), ((), ())),
                                preferred_element_type=jnp.float32)
        s = s * scale + bias

        m_prev = m_sc[h]
        m_new = jnp.maximum(m_prev, jnp.max(s, axis=-1, keepdims=True))
        alpha = jnp.exp(m_prev - m_new)
        p = jnp.exp(s - m_new)
        l_sc[h] = alpha * l_sc[h] + jnp.sum(p, axis=-1, keepdims=True)
        # fused re|im PV: one matmul, one (tq, 2d) accumulator per head
        acc_sc[h] = alpha * acc_sc[h] + jnp.dot(
            p.astype(jnp.bfloat16), v_h, preferred_element_type=jnp.float32)
        m_sc[h] = m_new

    @pl.when(kv == pl.num_programs(2) - 1)
    def _():
        parts_r, parts_i = [], []
        for h in range(nh):
            inv = pl.reciprocal(l_sc[h], approx=True)
            o_h = acc_sc[h] * inv            # (tq, 2d)
            parts_r.append(o_h[:, :d])
            parts_i.append(o_h[:, d:])
        # heads merged in-kernel -> lane-dense [tq, H] bf16 store
        or_ref[...] = jnp.concatenate(parts_r, axis=-1).astype(or_ref.dtype)
        oi_ref[...] = jnp.concatenate(parts_i, axis=-1).astype(oi_ref.dtype)


def complex_attention(qkv_r, qkv_i, key_bias, nheads):
    """qkv_*: [B, S, 3H] (bf16) laid out as [Q | K | V]; key_bias: [B, 1, S] f32."""
    B, S, H3 = qkv_r.shape
    H = H3 // 3
    d = H // nheads
    scale = 1.0 / math.sqrt(d)
    tq = _pick_tile(S, (256, 128))
    tkv = _pick_tile(S, (256, 128))

    q_spec = pl.BlockSpec((None, tq, H3), lambda b, q, k: (b, q, 0))
    kv_spec = pl.BlockSpec((None, tkv, H3), lambda b, q, k: (b, k, 0))
    bias_spec = pl.BlockSpec((None, 1, tkv), lambda b, q, k: (b, 0, k))
    o_spec = pl.BlockSpec((None, tq, H), lambda b, q, k: (b, q, 0))

    x_bytes = jnp.dtype(qkv_r.dtype).itemsize
    est = (2 * 2 * tq * H3 * x_bytes          # q-row views (re/im), dbl-buffered
           + 2 * 2 * tkv * H3 * x_bytes       # kv-row views (re/im)
           + 2 * tkv * 4                      # key bias
           + 2 * 2 * tq * H * 2               # bf16 outputs
           + nheads * tq * (2 + 2 * d) * 4    # m/l/acc scratch
           + 2 * tq * tkv * 4)                # per-head score/p temporaries

    grid_spec = pltpu.PrefetchScalarGridSpec(
        num_scalar_prefetch=0,
        grid=(B, S // tq, S // tkv),
        in_specs=[q_spec, q_spec, kv_spec, kv_spec, bias_spec],
        out_specs=(o_spec, o_spec),
        scratch_shapes=[pltpu.VMEM((nheads, tq, 1), jnp.float32),
                        pltpu.VMEM((nheads, tq, 1), jnp.float32),
                        pltpu.VMEM((nheads, tq, 2 * d), jnp.float32)])

    return pl.pallas_call(
        functools.partial(_cattn_kernel, nheads=nheads, hidden=H, scale=scale),
        out_shape=(jax.ShapeDtypeStruct((B, S, H), jnp.bfloat16),
                   jax.ShapeDtypeStruct((B, S, H), jnp.bfloat16)),
        grid_spec=grid_spec,
        compiler_params=pltpu.CompilerParams(
            dimension_semantics=("parallel", "parallel", "arbitrary"),
            vmem_limit_bytes=_vmem_limit(est)),
    )(qkv_r, qkv_i, qkv_r, qkv_i, key_bias)


# ----------------------------------------------------------------------------
# model glue (only free reshapes between kernels; no transposes)
# ----------------------------------------------------------------------------

def transformer_polar_block(real, img, key_bias, lp, nheads):
    B, S, H = real.shape
    M = B * S
    xr = real.reshape(M, H)
    xi = img.reshape(M, H)

    # attention sublayer: fused LN1 + QKV projection -> bf16 [M, 3H]
    qkv_r, qkv_i = ln_complex_dense(xr, xi, lp["qkv"], ln=lp["ln1"],
                                    out_dtype=jnp.bfloat16)

    ar, ai = complex_attention(qkv_r.reshape(B, S, 3 * H),
                               qkv_i.reshape(B, S, 3 * H),
                               key_bias, nheads)          # [B, S, H] bf16

    # O projection with fused residual add (dropout = identity)
    sr, si = ln_complex_dense(ar.reshape(M, H), ai.reshape(M, H), lp["o"],
                              residual=(xr, xi))

    # feed-forward sublayer: fused LN2 + FF1 + GELU (bf16 out), then FF2 + residual
    hr, hi = ln_complex_dense(sr, si, lp["ff1"], ln=lp["ln2"],
                              activation="gelu", out_dtype=jnp.bfloat16)
    fr, fi = ln_complex_dense(hr, hi, lp["ff2"], residual=(sr, si))

    return fr.reshape(B, S, H), fi.reshape(B, S, H)


def bert_polar_forward(params, x, attn_heads):
    B, S = x.shape
    # mask = (x > 0) broadcast over keys -> additive bias [B, 1, S] (no SxS DMA)
    key_bias = jnp.where(x > 0, 0.0, -1e9).astype(jnp.float32)[:, None, :]

    # polar / complex word-order embedding: amp * e^{i(pos*freq + phase)}
    amp = params["amp_emb"][x]          # [B, S, H]
    freq = params["freq_emb"][x]
    phase = params["phase_emb"][x]
    pos = jnp.arange(S, dtype=jnp.float32)[None, :, None]
    ang = pos * freq + phase
    real = amp * jnp.cos(ang)
    img = amp * jnp.sin(ang)

    for lp in params["layers"]:
        real, img = transformer_polar_block(real, img, key_bias, lp, attn_heads)
    return real, img


def _normal(key, shape, scale=0.02):
    return scale * jax.random.normal(key, shape, dtype=jnp.float32)


def init_params(key, vocab_size, hidden, n_layers):
    ff = hidden * 4
    keys = iter(jax.random.split(key, 3 + n_layers * 8))

    def nk():
        return next(keys)

    def clinear(nin, nout):
        return (_normal(nk(), (nin, nout)), _normal(nk(), (nin, nout)),
                jnp.zeros((nout,), jnp.float32), jnp.zeros((nout,), jnp.float32))

    def ln(n):
        # (gamma_r, beta_r, gamma_i, beta_i)
        return (jnp.ones((n,), jnp.float32), jnp.zeros((n,), jnp.float32),
                jnp.ones((n,), jnp.float32), jnp.zeros((n,), jnp.float32))

    params = {
        "amp_emb": _normal(nk(), (vocab_size, hidden), 1.0),
        "freq_emb": _normal(nk(), (vocab_size, hidden), 0.1),
        "phase_emb": _normal(nk(), (vocab_size, hidden), 0.1),
        "layers": [],
    }
    for _ in range(n_layers):
        params["layers"].append({
            "qkv": clinear(hidden, 3 * hidden),   # fused [Q | K | V] projection
            "o": clinear(hidden, hidden),
            "ff1": clinear(hidden, ff),
            "ff2": clinear(ff, hidden),
            "ln1": ln(hidden),
            "ln2": ln(hidden),
        })
    return params


if __name__ == "__main__":
    vocab_size = 50
    hidden = 32
    n_layers = 2
    attn_heads = 4
    B, S = 2, 8

    key = jax.random.PRNGKey(0)
    pkey, xkey = jax.random.split(key)
    params = init_params(pkey, vocab_size, hidden, n_layers)
    # token ids; id 0 acts as padding (masked out), matching (x > 0).
    x = jax.random.randint(xkey, (B, S), 0, vocab_size, dtype=jnp.int32)

    fwd = jax.jit(bert_polar_forward, static_argnums=(2,))
    real, img = fwd(params, x, attn_heads)
    jax.block_until_ready((real, img))
    assert real.shape == (B, S, hidden) and img.shape == (B, S, hidden)
    assert real.dtype == jnp.float32 and img.dtype == jnp.float32
    assert bool(jnp.all(jnp.isfinite(real))) and bool(jnp.all(jnp.isfinite(img)))
    print("KERNEL_OK")
</pallas_src>

<mosaic_0001>
module attributes {stable_mosaic.version = 11 : i64} {
  func.func @_ln_cdense_kernel(%arg0: i32, %arg1: i32, %arg2: i32, %arg3: memref<16x32xf32, #tpu.memory_space<vmem>>, %arg4: memref<16x32xf32, #tpu.memory_space<vmem>>, %arg5: memref<1x32xf32, #tpu.memory_space<vmem>>, %arg6: memref<1x32xf32, #tpu.memory_space<vmem>>, %arg7: memref<1x32xf32, #tpu.memory_space<vmem>>, %arg8: memref<1x32xf32, #tpu.memory_space<vmem>>, %arg9: memref<32x96xbf16, #tpu.memory_space<vmem>>, %arg10: memref<32x96xbf16, #tpu.memory_space<vmem>>, %arg11: memref<1x96xf32, #tpu.memory_space<vmem>>, %arg12: memref<1x96xf32, #tpu.memory_space<vmem>>, %arg13: memref<16x96xbf16, #tpu.memory_space<vmem>>, %arg14: memref<16x96xbf16, #tpu.memory_space<vmem>>) attributes {dimension_semantics = [#tpu.dimension_semantics<parallel>, #tpu.dimension_semantics<parallel>, #tpu.dimension_semantics<arbitrary>], iteration_bounds = array<i64: 1, 1, 1>, scalar_prefetch = 0 : i64, scratch_operands = 0 : i64, tpu.core_type = #tpu.core_type<tc>, window_params = [{transform_indices = @transform_0, window_bounds = array<i64: 16, 32>}, {transform_indices = @transform_1, window_bounds = array<i64: 16, 32>}, {pipeline_mode = #tpu.pipeline_mode<synchronous>, transform_indices = @transform_2, window_bounds = array<i64: 1, 32>}, {pipeline_mode = #tpu.pipeline_mode<synchronous>, transform_indices = @transform_3, window_bounds = array<i64: 1, 32>}, {pipeline_mode = #tpu.pipeline_mode<synchronous>, transform_indices = @transform_4, window_bounds = array<i64: 1, 32>}, {pipeline_mode = #tpu.pipeline_mode<synchronous>, transform_indices = @transform_5, window_bounds = array<i64: 1, 32>}, {transform_indices = @transform_6, window_bounds = array<i64: 32, 96>}, {transform_indices = @transform_7, window_bounds = array<i64: 32, 96>}, {transform_indices = @transform_8, window_bounds = array<i64: 1, 96>}, {transform_indices = @transform_9, window_bounds = array<i64: 1, 96>}, {transform_indices = @transform_10, window_bounds = array<i64: 16, 96>}, {transform_indices = @transform_11, window_bounds = array<i64: 16, 96>}]} {
    %c0 = arith.constant 0 : index
    %c0_0 = arith.constant 0 : index
    %0 = vector.load %arg3[%c0, %c0_0] : memref<16x32xf32, #tpu.memory_space<vmem>>, vector<16x32xf32>
    %c0_1 = arith.constant 0 : index
    %c0_2 = arith.constant 0 : index
    %1 = vector.load %arg4[%c0_1, %c0_2] : memref<16x32xf32, #tpu.memory_space<vmem>>, vector<16x32xf32>
    %c0_3 = arith.constant 0 : index
    %c0_4 = arith.constant 0 : index
    %2 = vector.load %arg5[%c0_3, %c0_4] : memref<1x32xf32, #tpu.memory_space<vmem>>, vector<1x32xf32>
    %c0_5 = arith.constant 0 : index
    %c0_6 = arith.constant 0 : index
    %3 = vector.load %arg6[%c0_5, %c0_6] : memref<1x32xf32, #tpu.memory_space<vmem>>, vector<1x32xf32>
    %cst = arith.constant dense<0.000000e+00> : vector<16xf32>
    %4 = vector.multi_reduction <add>, %0, %cst [1] : vector<16x32xf32> to vector<16xf32>
    %5 = vector.shape_cast %4 : vector<16xf32> to vector<16x1xf32>
    %cst_7 = arith.constant 3.200000e+01 : f32
    %6 = vector.broadcast %cst_7 : f32 to vector<16x1xf32>
    %7 = arith.divf %5, %6 : vector<16x1xf32>
    %8 = vector.broadcast %7 : vector<16x1xf32> to vector<16x32xf32>
    %9 = arith.subf %0, %8 : vector<16x32xf32>
    %10 = arith.mulf %9, %9 : vector<16x32xf32>
    %cst_8 = arith.constant dense<0.000000e+00> : vector<16xf32>
    %11 = vector.multi_reduction <add>, %10, %cst_8 [1] : vector<16x32xf32> to vector<16xf32>
    %12 = vector.shape_cast %11 : vector<16xf32> to vector<16x1xf32>
    %cst_9 = arith.constant 3.200000e+01 : f32
    %13 = vector.broadcast %cst_9 : f32 to vector<16x1xf32>
    %14 = arith.divf %12, %13 : vector<16x1xf32>
    %cst_10 = arith.constant 9.99999974E-6 : f32
    %15 = vector.broadcast %cst_10 : f32 to vector<16x1xf32>
    %16 = arith.addf %14, %15 : vector<16x1xf32>
    %17 = math.rsqrt %16 : vector<16x1xf32>
    %18 = vector.broadcast %17 : vector<16x1xf32> to vector<16x32xf32>
    %19 = arith.mulf %9, %18 : vector<16x32xf32>
    %20 = vector.broadcast %2 : vector<1x32xf32> to vector<16x32xf32>
    %21 = arith.mulf %19, %20 : vector<16x32xf32>
    %22 = vector.broadcast %3 : vector<1x32xf32> to vector<16x32xf32>
    %23 = arith.addf %21, %22 : vector<16x32xf32>
    %c0_11 = arith.constant 0 : index
    %c0_12 = arith.constant 0 : index
    %24 = vector.load %arg7[%c0_11, %c0_12] : memref<1x32xf32, #tpu.memory_space<vmem>>, vector<1x32xf32>
    %c0_13 = arith.constant 0 : index
    %c0_14 = arith.constant 0 : index
    %25 = vector.load %arg8[%c0_13, %c0_14] : memref<1x32xf32, #tpu.memory_space<vmem>>, vector<1x32xf32>
    %cst_15 = arith.constant dense<0.000000e+00> : vector<16xf32>
    %26 = vector.multi_reduction <add>, %1, %cst_15 [1] : vector<16x32xf32> to vector<16xf32>
    %27 = vector.shape_cast %26 : vector<16xf32> to vector<16x1xf32>
    %cst_16 = arith.constant 3.200000e+01 : f32
    %28 = vector.broadcast %cst_16 : f32 to vector<16x1xf32>
    %29 = arith.divf %27, %28 : vector<16x1xf32>
    %30 = vector.broadcast %29 : vector<16x1xf32> to vector<16x32xf32>
    %31 = arith.subf %1, %30 : vector<16x32xf32>
    %32 = arith.mulf %31, %31 : vector<16x32xf32>
    %cst_17 = arith.constant dense<0.000000e+00> : vector<16xf32>
    %33 = vector.multi_reduction <add>, %32, %cst_17 [1] : vector<16x32xf32> to vector<16xf32>
    %34 = vector.shape_cast %33 : vector<16xf32> to vector<16x1xf32>
    %cst_18 = arith.constant 3.200000e+01 : f32
    %35 = vector.broadcast %cst_18 : f32 to vector<16x1xf32>
    %36 = arith.divf %34, %35 : vector<16x1xf32>
    %cst_19 = arith.constant 9.99999974E-6 : f32
    %37 = vector.broadcast %cst_19 : f32 to vector<16x1xf32>
    %38 = arith.addf %36, %37 : vector<16x1xf32>
    %39 = math.rsqrt %38 : vector<16x1xf32>
    %40 = vector.broadcast %39 : vector<16x1xf32> to vector<16x32xf32>
    %41 = arith.mulf %31, %40 : vector<16x32xf32>
    %42 = vector.broadcast %24 : vector<1x32xf32> to vector<16x32xf32>
    %43 = arith.mulf %41, %42 : vector<16x32xf32>
    %44 = vector.broadcast %25 : vector<1x32xf32> to vector<16x32xf32>
    %45 = arith.addf %43, %44 : vector<16x32xf32>
    %46 = arith.truncf %23 : vector<16x32xf32> to vector<16x32xbf16>
    %47 = arith.truncf %45 : vector<16x32xf32> to vector<16x32xbf16>
    %c0_20 = arith.constant 0 : index
    %c0_21 = arith.constant 0 : index
    %48 = vector.load %arg9[%c0_20, %c0_21] : memref<32x96xbf16, #tpu.memory_space<vmem>>, vector<32x96xbf16>
    %c0_22 = arith.constant 0 : index
    %c0_23 = arith.constant 0 : index
    %49 = vector.load %arg10[%c0_22, %c0_23] : memref<32x96xbf16, #tpu.memory_space<vmem>>, vector<32x96xbf16>
    %cst_24 = arith.constant dense<0.000000e+00> : vector<16x96xf32>
    %50 = tpu.matmul %46, %48, %cst_24 {dimension_numbers = #tpu.dot_dimension_numbers<[1], [0], [0], [1], [0, 0, 1, 1], [], []>} : vector<16x32xbf16>, vector<32x96xbf16>, vector<16x96xf32> -> vector<16x96xf32>
    %cst_25 = arith.constant dense<0.000000e+00> : vector<16x96xf32>
    %51 = tpu.matmul %47, %49, %cst_25 {dimension_numbers = #tpu.dot_dimension_numbers<[1], [0], [0], [1], [0, 0, 1, 1], [], []>} : vector<16x32xbf16>, vector<32x96xbf16>, vector<16x96xf32> -> vector<16x96xf32>
    %cst_26 = arith.constant dense<0.000000e+00> : vector<16x96xf32>
    %52 = tpu.matmul %46, %49, %cst_26 {dimension_numbers = #tpu.dot_dimension_numbers<[1], [0], [0], [1], [0, 0, 1, 1], [], []>} : vector<16x32xbf16>, vector<32x96xbf16>, vector<16x96xf32> -> vector<16x96xf32>
    %cst_27 = arith.constant dense<0.000000e+00> : vector<16x96xf32>
    %53 = tpu.matmul %47, %48, %cst_27 {dimension_numbers = #tpu.dot_dimension_numbers<[1], [0], [0], [1], [0, 0, 1, 1], [], []>} : vector<16x32xbf16>, vector<32x96xbf16>, vector<16x96xf32> -> vector<16x96xf32>
    %54 = arith.subf %50, %51 : vector<16x96xf32>
    %55 = arith.addf %52, %53 : vector<16x96xf32>
    %c0_28 = arith.constant 0 : index
    %c0_29 = arith.constant 0 : index
    %56 = vector.load %arg11[%c0_28, %c0_29] : memref<1x96xf32, #tpu.memory_space<vmem>>, vector<1x96xf32>
    %57 = vector.broadcast %56 : vector<1x96xf32> to vector<16x96xf32>
    %58 = arith.addf %54, %57 : vector<16x96xf32>
    %c0_30 = arith.constant 0 : index
    %c0_31 = arith.constant 0 : index
    %59 = vector.load %arg12[%c0_30, %c0_31] : memref<1x96xf32, #tpu.memory_space<vmem>>, vector<1x96xf32>
    %60 = vector.broadcast %59 : vector<1x96xf32> to vector<16x96xf32>
    %61 = arith.addf %55, %60 : vector<16x96xf32>
    %62 = arith.truncf %58 : vector<16x96xf32> to vector<16x96xbf16>
    %c0_32 = arith.constant 0 : index
    %c0_33 = arith.constant 0 : index
    %63 = vector.load %arg13[%c0_32, %c0_33] : memref<16x96xbf16, #tpu.memory_space<vmem>>, vector<16x96xbf16>
    tpu.vector_store %arg13[%c0_32, %c0_33], %62 {strides = array<i32>} : memref<16x96xbf16, #tpu.memory_space<vmem>>, vector<16x96xbf16>,
    %64 = arith.truncf %61 : vector<16x96xf32> to vector<16x96xbf16>
    %c0_34 = arith.constant 0 : index
    %c0_35 = arith.constant 0 : index
    %65 = vector.load %arg14[%c0_34, %c0_35] : memref<16x96xbf16, #tpu.memory_space<vmem>>, vector<16x96xbf16>
    tpu.vector_store %arg14[%c0_34, %c0_35], %64 {strides = array<i32>} : memref<16x96xbf16, #tpu.memory_space<vmem>>, vector<16x96xbf16>,
    return
  }
  func.func @transform_0(%arg0: i32, %arg1: i32, %arg2: i32) -> (i32, i32) {
    %c0_i32 = arith.constant 0 : i32
    return %arg1, %arg2 : i32, i32
  }
  func.func @transform_1(%arg0: i32, %arg1: i32, %arg2: i32) -> (i32, i32) {
    %c0_i32 = arith.constant 0 : i32
    return %arg1, %arg2 : i32, i32
  }
  func.func @transform_2(%arg0: i32, %arg1: i32, %arg2: i32) -> (i32, i32) {
    %c0_i32 = arith.constant 0 : i32
    %c0_i32_0 = arith.constant 0 : i32
    %c0_i32_1 = arith.constant 0 : i32
    return %c0_i32, %c0_i32_0 : i32, i32
  }
  func.func @transform_3(%arg0: i32, %arg1: i32, %arg2: i32) -> (i32, i32) {
    %c0_i32 = arith.constant 0 : i32
    %c0_i32_0 = arith.constant 0 : i32
    %c0_i32_1 = arith.constant 0 : i32
    return %c0_i32, %c0_i32_0 : i32, i32
  }
  func.func @transform_4(%arg0: i32, %arg1: i32, %arg2: i32) -> (i32, i32) {
    %c0_i32 = arith.constant 0 : i32
    %c0_i32_0 = arith.constant 0 : i32
    %c0_i32_1 = arith.constant 0 : i32
    return %c0_i32, %c0_i32_0 : i32, i32
  }
  func.func @transform_5(%arg0: i32, %arg1: i32, %arg2: i32) -> (i32, i32) {
    %c0_i32 = arith.constant 0 : i32
    %c0_i32_0 = arith.constant 0 : i32
    %c0_i32_1 = arith.constant 0 : i32
    return %c0_i32, %c0_i32_0 : i32, i32
  }
  func.func @transform_6(%arg0: i32, %arg1: i32, %arg2: i32) -> (i32, i32) {
    %c0_i32 = arith.constant 0 : i32
    return %arg2, %arg0 : i32, i32
  }
  func.func @transform_7(%arg0: i32, %arg1: i32, %arg2: i32) -> (i32, i32) {
    %c0_i32 = arith.constant 0 : i32
    return %arg2, %arg0 : i32, i32
  }
  func.func @transform_8(%arg0: i32, %arg1: i32, %arg2: i32) -> (i32, i32) {
    %c0_i32 = arith.constant 0 : i32
    %c0_i32_0 = arith.constant 0 : i32
    return %c0_i32, %arg0 : i32, i32
  }
  func.func @transform_9(%arg0: i32, %arg1: i32, %arg2: i32) -> (i32, i32) {
    %c0_i32 = arith.constant 0 : i32
    %c0_i32_0 = arith.constant 0 : i32
    return %c0_i32, %arg0 : i32, i32
  }
  func.func @transform_10(%arg0: i32, %arg1: i32, %arg2: i32) -> (i32, i32) {
    %c0_i32 = arith.constant 0 : i32
    return %arg1, %arg0 : i32, i32
  }
  func.func @transform_11(%arg0: i32, %arg1: i32, %arg2: i32) -> (i32, i32) {
    %c0_i32 = arith.constant 0 : i32
    return %arg1, %arg0 : i32, i32
  }
}

module attributes {stable_mosaic.version = 11 : i64} {
  func.func @_ln_cdense_kernel(%arg0: i32, %arg1: i32, %arg2: i32, %arg3: memref<16x32xbf16, #tpu.memory_space<vmem>>, %arg4: memref<16x32xbf16, #tpu.memory_space<vmem>>, %arg5: memref<32x32xbf16, #tpu.memory_space<vmem>>, %arg6: memref<32x32xbf16, #tpu.memory_space<vmem>>, %arg7: memref<1x32xf32, #tpu.memory_space<vmem>>, %arg8: memref<1x32xf32, #tpu.memory_space<vmem>>, %arg9: memref<16x32xf32, #tpu.memory_space<vmem>>, %arg10: memref<16x32xf32, #tpu.memory_space<vmem>>, %arg11: memref<16x32xf32, #tpu.memory_space<vmem>>, %arg12: memref<16x32xf32, #tpu.memory_space<vmem>>) attributes {dimension_semantics = [#tpu.dimension_semantics<parallel>, #tpu.dimension_semantics<parallel>, #tpu.dimension_semantics<arbitrary>], iteration_bounds = array<i64: 1, 1, 1>, scalar_prefetch = 0 : i64, scratch_operands = 0 : i64, tpu.core_type = #tpu.core_type<tc>, window_params = [{transform_indices = @transform_0, window_bounds = array<i64: 16, 32>}, {transform_indices = @transform_1, window_bounds = array<i64: 16, 32>}, {transform_indices = @transform_2, window_bounds = array<i64: 32, 32>}, {transform_indices = @transform_3, window_bounds = array<i64: 32, 32>}, {transform_indices = @transform_4, window_bounds = array<i64: 1, 32>}, {transform_indices = @transform_5, window_bounds = array<i64: 1, 32>}, {transform_indices = @transform_6, window_bounds = array<i64: 16, 32>}, {transform_indices = @transform_7, window_bounds = array<i64: 16, 32>}, {transform_indices = @transform_8, window_bounds = array<i64: 16, 32>}, {transform_indices = @transform_9, window_bounds = array<i64: 16, 32>}]} {
    %c0 = arith.constant 0 : index
    %c0_0 = arith.constant 0 : index
    %0 = vector.load %arg3[%c0, %c0_0] : memref<16x32xbf16, #tpu.memory_space<vmem>>, vector<16x32xbf16>
    %c0_1 = arith.constant 0 : index
    %c0_2 = arith.constant 0 : index
    %1 = vector.load %arg4[%c0_1, %c0_2] : memref<16x32xbf16, #tpu.memory_space<vmem>>, vector<16x32xbf16>
    %c0_3 = arith.constant 0 : index
    %c0_4 = arith.constant 0 : index
    %2 = vector.load %arg5[%c0_3, %c0_4] : memref<32x32xbf16, #tpu.memory_space<vmem>>, vector<32x32xbf16>
    %c0_5 = arith.constant 0 : index
    %c0_6 = arith.constant 0 : index
    %3 = vector.load %arg6[%c0_5, %c0_6] : memref<32x32xbf16, #tpu.memory_space<vmem>>, vector<32x32xbf16>
    %cst = arith.constant dense<0.000000e+00> : vector<16x32xf32>
    %4 = tpu.matmul %0, %2, %cst {dimension_numbers = #tpu.dot_dimension_numbers<[1], [0], [0], [1], [0, 0, 1, 1], [], []>} : vector<16x32xbf16>, vector<32x32xbf16>, vector<16x32xf32> -> vector<16x32xf32>
    %cst_7 = arith.constant dense<0.000000e+00> : vector<16x32xf32>
    %5 = tpu.matmul %1, %3, %cst_7 {dimension_numbers = #tpu.dot_dimension_numbers<[1], [0], [0], [1], [0, 0, 1, 1], [], []>} : vector<16x32xbf16>, vector<32x32xbf16>, vector<16x32xf32> -> vector<16x32xf32>
    %cst_8 = arith.constant dense<0.000000e+00> : vector<16x32xf32>
    %6 = tpu.matmul %0, %3, %cst_8 {dimension_numbers = #tpu.dot_dimension_numbers<[1], [0], [0], [1], [0, 0, 1, 1], [], []>} : vector<16x32xbf16>, vector<32x32xbf16>, vector<16x32xf32> -> vector<16x32xf32>
    %cst_9 = arith.constant dense<0.000000e+00> : vector<16x32xf32>
    %7 = tpu.matmul %1, %2, %cst_9 {dimension_numbers = #tpu.dot_dimension_numbers<[1], [0], [0], [1], [0, 0, 1, 1], [], []>} : vector<16x32xbf16>, vector<32x32xbf16>, vector<16x32xf32> -> vector<16x32xf32>
    %8 = arith.subf %4, %5 : vector<16x32xf32>
    %9 = arith.addf %6, %7 : vector<16x32xf32>
    %c0_10 = arith.constant 0 : index
    %c0_11 = arith.constant 0 : index
    %10 = vector.load %arg7[%c0_10, %c0_11] : memref<1x32xf32, #tpu.memory_space<vmem>>, vector<1x32xf32>
    %11 = vector.broadcast %10 : vector<1x32xf32> to vector<16x32xf32>
    %12 = arith.addf %8, %11 : vector<16x32xf32>
    %c0_12 = arith.constant 0 : index
    %c0_13 = arith.constant 0 : index
    %13 = vector.load %arg8[%c0_12, %c0_13] : memref<1x32xf32, #tpu.memory_space<vmem>>, vector<1x32xf32>
    %14 = vector.broadcast %13 : vector<1x32xf32> to vector<16x32xf32>
    %15 = arith.addf %9, %14 : vector<16x32xf32>
    %c0_14 = arith.constant 0 : index
    %c0_15 = arith.constant 0 : index
    %16 = vector.load %arg9[%c0_14, %c0_15] : memref<16x32xf32, #tpu.memory_space<vmem>>, vector<16x32xf32>
    %17 = arith.addf %12, %16 : vector<16x32xf32>
    %c0_16 = arith.constant 0 : index
    %c0_17 = arith.constant 0 : index
    %18 = vector.load %arg10[%c0_16, %c0_17] : memref<16x32xf32, #tpu.memory_space<vmem>>, vector<16x32xf32>
    %19 = arith.addf %15, %18 : vector<16x32xf32>
    %c0_18 = arith.constant 0 : index
    %c0_19 = arith.constant 0 : index
    %20 = vector.load %arg11[%c0_18, %c0_19] : memref<16x32xf32, #tpu.memory_space<vmem>>, vector<16x32xf32>
    tpu.vector_store %arg11[%c0_18, %c0_19], %17 {strides = array<i32>} : memref<16x32xf32, #tpu.memory_space<vmem>>, vector<16x32xf32>,
    %c0_20 = arith.constant 0 : index
    %c0_21 = arith.constant 0 : index
    %21 = vector.load %arg12[%c0_20, %c0_21] : memref<16x32xf32, #tpu.memory_space<vmem>>, vector<16x32xf32>
    tpu.vector_store %arg12[%c0_20, %c0_21], %19 {strides = array<i32>} : memref<16x32xf32, #tpu.memory_space<vmem>>, vector<16x32xf32>,
    return
  }
  func.func @transform_0(%arg0: i32, %arg1: i32, %arg2: i32) -> (i32, i32) {
    %c0_i32 = arith.constant 0 : i32
    return %arg1, %arg2 : i32, i32
  }
  func.func @transform_1(%arg0: i32, %arg1: i32, %arg2: i32) -> (i32, i32) {
    %c0_i32 = arith.constant 0 : i32
    return %arg1, %arg2 : i32, i32
  }
  func.func @transform_2(%arg0: i32, %arg1: i32, %arg2: i32) -> (i32, i32) {
    %c0_i32 = arith.constant 0 : i32
    return %arg2, %arg0 : i32, i32
  }
  func.func @transform_3(%arg0: i32, %arg1: i32, %arg2: i32) -> (i32, i32) {
    %c0_i32 = arith.constant 0 : i32
    return %arg2, %arg0 : i32, i32
  }
  func.func @transform_4(%arg0: i32, %arg1: i32, %arg2: i32) -> (i32, i32) {
    %c0_i32 = arith.constant 0 : i32
    %c0_i32_0 = arith.constant 0 : i32
    return %c0_i32, %arg0 : i32, i32
  }
  func.func @transform_5(%arg0: i32, %arg1: i32, %arg2: i32) -> (i32, i32) {
    %c0_i32 = arith.constant 0 : i32
    %c0_i32_0 = arith.constant 0 : i32
    return %c0_i32, %arg0 : i32, i32
  }
  func.func @transform_6(%arg0: i32, %arg1: i32, %arg2: i32) -> (i32, i32) {
    %c0_i32 = arith.constant 0 : i32
    return %arg1, %arg0 : i32, i32
  }
  func.func @transform_7(%arg0: i32, %arg1: i32, %arg2: i32) -> (i32, i32) {
    %c0_i32 = arith.constant 0 : i32
    return %arg1, %arg0 : i32, i32
  }
  func.func @transform_8(%arg0: i32, %arg1: i32, %arg2: i32) -> (i32, i32) {
    %c0_i32 = arith.constant 0 : i32
    return %arg1, %arg0 : i32, i32
  }
  func.func @transform_9(%arg0: i32, %arg1: i32, %arg2: i32) -> (i32, i32) {
    %c0_i32 = arith.constant 0 : i32
    return %arg1, %arg0 : i32, i32
  }
}

module attributes {stable_mosaic.version = 11 : i64} {
  func.func @_ln_cdense_kernel(%arg0: i32, %arg1: i32, %arg2: i32, %arg3: memref<16x32xf32, #tpu.memory_space<vmem>>, %arg4: memref<16x32xf32, #tpu.memory_space<vmem>>, %arg5: memref<1x32xf32, #tpu.memory_space<vmem>>, %arg6: memref<1x32xf32, #tpu.memory_space<vmem>>, %arg7: memref<1x32xf32, #tpu.memory_space<vmem>>, %arg8: memref<1x32xf32, #tpu.memory_space<vmem>>, %arg9: memref<32x128xbf16, #tpu.memory_space<vmem>>, %arg10: memref<32x128xbf16, #tpu.memory_space<vmem>>, %arg11: memref<1x128xf32, #tpu.memory_space<vmem>>, %arg12: memref<1x128xf32, #tpu.memory_space<vmem>>, %arg13: memref<16x128xbf16, #tpu.memory_space<vmem>>, %arg14: memref<16x128xbf16, #tpu.memory_space<vmem>>) attributes {dimension_semantics = [#tpu.dimension_semantics<parallel>, #tpu.dimension_semantics<parallel>, #tpu.dimension_semantics<arbitrary>], iteration_bounds = array<i64: 1, 1, 1>, scalar_prefetch = 0 : i64, scratch_operands = 0 : i64, tpu.core_type = #tpu.core_type<tc>, window_params = [{transform_indices = @transform_0, window_bounds = array<i64: 16, 32>}, {transform_indices = @transform_1, window_bounds = array<i64: 16, 32>}, {pipeline_mode = #tpu.pipeline_mode<synchronous>, transform_indices = @transform_2, window_bounds = array<i64: 1, 32>}, {pipeline_mode = #tpu.pipeline_mode<synchronous>, transform_indices = @transform_3, window_bounds = array<i64: 1, 32>}, {pipeline_mode = #tpu.pipeline_mode<synchronous>, transform_indices = @transform_4, window_bounds = array<i64: 1, 32>}, {pipeline_mode = #tpu.pipeline_mode<synchronous>, transform_indices = @transform_5, window_bounds = array<i64: 1, 32>}, {transform_indices = @transform_6, window_bounds = array<i64: 32, 128>}, {transform_indices = @transform_7, window_bounds = array<i64: 32, 128>}, {transform_indices = @transform_8, window_bounds = array<i64: 1, 128>}, {transform_indices = @transform_9, window_bounds = array<i64: 1, 128>}, {transform_indices = @transform_10, window_bounds = array<i64: 16, 128>}, {transform_indices = @transform_11, window_bounds = array<i64: 16, 128>}]} {
    %c0 = arith.constant 0 : index
    %c0_0 = arith.constant 0 : index
    %0 = vector.load %arg3[%c0, %c0_0] : memref<16x32xf32, #tpu.memory_space<vmem>>, vector<16x32xf32>
    %c0_1 = arith.constant 0 : index
    %c0_2 = arith.constant 0 : index
    %1 = vector.load %arg4[%c0_1, %c0_2] : memref<16x32xf32, #tpu.memory_space<vmem>>, vector<16x32xf32>
    %c0_3 = arith.constant 0 : index
    %c0_4 = arith.constant 0 : index
    %2 = vector.load %arg5[%c0_3, %c0_4] : memref<1x32xf32, #tpu.memory_space<vmem>>, vector<1x32xf32>
    %c0_5 = arith.constant 0 : index
    %c0_6 = arith.constant 0 : index
    %3 = vector.load %arg6[%c0_5, %c0_6] : memref<1x32xf32, #tpu.memory_space<vmem>>, vector<1x32xf32>
    %cst = arith.constant dense<0.000000e+00> : vector<16xf32>
    %4 = vector.multi_reduction <add>, %0, %cst [1] : vector<16x32xf32> to vector<16xf32>
    %5 = vector.shape_cast %4 : vector<16xf32> to vector<16x1xf32>
    %cst_7 = arith.constant 3.200000e+01 : f32
    %6 = vector.broadcast %cst_7 : f32 to vector<16x1xf32>
    %7 = arith.divf %5, %6 : vector<16x1xf32>
    %8 = vector.broadcast %7 : vector<16x1xf32> to vector<16x32xf32>
    %9 = arith.subf %0, %8 : vector<16x32xf32>
    %10 = arith.mulf %9, %9 : vector<16x32xf32>
    %cst_8 = arith.constant dense<0.000000e+00> : vector<16xf32>
    %11 = vector.multi_reduction <add>, %10, %cst_8 [1] : vector<16x32xf32> to vector<16xf32>
    %12 = vector.shape_cast %11 : vector<16xf32> to vector<16x1xf32>
    %cst_9 = arith.constant 3.200000e+01 : f32
    %13 = vector.broadcast %cst_9 : f32 to vector<16x1xf32>
    %14 = arith.divf %12, %13 : vector<16x1xf32>
    %cst_10 = arith.constant 9.99999974E-6 : f32
    %15 = vector.broadcast %cst_10 : f32 to vector<16x1xf32>
    %16 = arith.addf %14, %15 : vector<16x1xf32>
    %17 = math.rsqrt %16 : vector<16x1xf32>
    %18 = vector.broadcast %17 : vector<16x1xf32> to vector<16x32xf32>
    %19 = arith.mulf %9, %18 : vector<16x32xf32>
    %20 = vector.broadcast %2 : vector<1x32xf32> to vector<16x32xf32>
    %21 = arith.mulf %19, %20 : vector<16x32xf32>
    %22 = vector.broadcast %3 : vector<1x32xf32> to vector<16x32xf32>
    %23 = arith.addf %21, %22 : vector<16x32xf32>
    %c0_11 = arith.constant 0 : index
    %c0_12 = arith.constant 0 : index
    %24 = vector.load %arg7[%c0_11, %c0_12] : memref<1x32xf32, #tpu.memory_space<vmem>>, vector<1x32xf32>
    %c0_13 = arith.constant 0 : index
    %c0_14 = arith.constant 0 : index
    %25 = vector.load %arg8[%c0_13, %c0_14] : memref<1x32xf32, #tpu.memory_space<vmem>>, vector<1x32xf32>
    %cst_15 = arith.constant dense<0.000000e+00> : vector<16xf32>
    %26 = vector.multi_reduction <add>, %1, %cst_15 [1] : vector<16x32xf32> to vector<16xf32>
    %27 = vector.shape_cast %26 : vector<16xf32> to vector<16x1xf32>
    %cst_16 = arith.constant 3.200000e+01 : f32
    %28 = vector.broadcast %cst_16 : f32 to vector<16x1xf32>
    %29 = arith.divf %27, %28 : vector<16x1xf32>
    %30 = vector.broadcast %29 : vector<16x1xf32> to vector<16x32xf32>
    %31 = arith.subf %1, %30 : vector<16x32xf32>
    %32 = arith.mulf %31, %31 : vector<16x32xf32>
    %cst_17 = arith.constant dense<0.000000e+00> : vector<16xf32>
    %33 = vector.multi_reduction <add>, %32, %cst_17 [1] : vector<16x32xf32> to vector<16xf32>
    %34 = vector.shape_cast %33 : vector<16xf32> to vector<16x1xf32>
    %cst_18 = arith.constant 3.200000e+01 : f32
    %35 = vector.broadcast %cst_18 : f32 to vector<16x1xf32>
    %36 = arith.divf %34, %35 : vector<16x1xf32>
    %cst_19 = arith.constant 9.99999974E-6 : f32
    %37 = vector.broadcast %cst_19 : f32 to vector<16x1xf32>
    %38 = arith.addf %36, %37 : vector<16x1xf32>
    %39 = math.rsqrt %38 : vector<16x1xf32>
    %40 = vector.broadcast %39 : vector<16x1xf32> to vector<16x32xf32>
    %41 = arith.mulf %31, %40 : vector<16x32xf32>
    %42 = vector.broadcast %24 : vector<1x32xf32> to vector<16x32xf32>
    %43 = arith.mulf %41, %42 : vector<16x32xf32>
    %44 = vector.broadcast %25 : vector<1x32xf32> to vector<16x32xf32>
    %45 = arith.addf %43, %44 : vector<16x32xf32>
    %46 = arith.truncf %23 : vector<16x32xf32> to vector<16x32xbf16>
    %47 = arith.truncf %45 : vector<16x32xf32> to vector<16x32xbf16>
    %c0_20 = arith.constant 0 : index
    %c0_21 = arith.constant 0 : index
    %48 = vector.load %arg9[%c0_20, %c0_21] : memref<32x128xbf16, #tpu.memory_space<vmem>>, vector<32x128xbf16>
    %c0_22 = arith.constant 0 : index
    %c0_23 = arith.constant 0 : index
    %49 = vector.load %arg10[%c0_22, %c0_23] : memref<32x128xbf16, #tpu.memory_space<vmem>>, vector<32x128xbf16>
    %cst_24 = arith.constant dense<0.000000e+00> : vector<16x128xf32>
    %50 = tpu.matmul %46, %48, %cst_24 {dimension_numbers = #tpu.dot_dimension_numbers<[1], [0], [0], [1], [0, 0, 1, 1], [], []>} : vector<16x32xbf16>, vector<32x128xbf16>, vector<16x128xf32> -> vector<16x128xf32>
    %cst_25 = arith.constant dense<0.000000e+00> : vector<16x128xf32>
    %51 = tpu.matmul %47, %49, %cst_25 {dimension_numbers = #tpu.dot_dimension_numbers<[1], [0], [0], [1], [0, 0, 1, 1], [], []>} : vector<16x32xbf16>, vector<32x128xbf16>, vector<16x128xf32> -> vector<16x128xf32>
    %cst_26 = arith.constant dense<0.000000e+00> : vector<16x128xf32>
    %52 = tpu.matmul %46, %49, %cst_26 {dimension_numbers = #tpu.dot_dimension_numbers<[1], [0], [0], [1], [0, 0, 1, 1], [], []>} : vector<16x32xbf16>, vector<32x128xbf16>, vector<16x128xf32> -> vector<16x128xf32>
    %cst_27 = arith.constant dense<0.000000e+00> : vector<16x128xf32>
    %53 = tpu.matmul %47, %48, %cst_27 {dimension_numbers = #tpu.dot_dimension_numbers<[1], [0], [0], [1], [0, 0, 1, 1], [], []>} : vector<16x32xbf16>, vector<32x128xbf16>, vector<16x128xf32> -> vector<16x128xf32>
    %54 = arith.subf %50, %51 : vector<16x128xf32>
    %55 = arith.addf %52, %53 : vector<16x128xf32>
    %c0_28 = arith.constant 0 : index
    %c0_29 = arith.constant 0 : index
    %56 = vector.load %arg11[%c0_28, %c0_29] : memref<1x128xf32, #tpu.memory_space<vmem>>, vector<1x128xf32>
    %57 = vector.broadcast %56 : vector<1x128xf32> to vector<16x128xf32>
    %58 = arith.addf %54, %57 : vector<16x128xf32>
    %c0_30 = arith.constant 0 : index
    %c0_31 = arith.constant 0 : index
    %59 = vector.load %arg12[%c0_30, %c0_31] : memref<1x128xf32, #tpu.memory_space<vmem>>, vector<1x128xf32>
    %60 = vector.broadcast %59 : vector<1x128xf32> to vector<16x128xf32>
    %61 = arith.addf %55, %60 : vector<16x128xf32>
    %cst_32 = arith.constant 5.000000e-01 : f32
    %62 = vector.broadcast %cst_32 : f32 to vector<16x128xf32>
    %63 = arith.mulf %62, %58 : vector<16x128xf32>
    %cst_33 = arith.constant 4.471500e-02 : f32
    %64 = vector.broadcast %cst_33 : f32 to vector<16x128xf32>
    %65 = arith.mulf %64, %58 : vector<16x128xf32>
    %66 = arith.mulf %65, %58 : vector<16x128xf32>
    %67 = arith.mulf %66, %58 : vector<16x128xf32>
    %68 = arith.addf %58, %67 : vector<16x128xf32>
    %cst_34 = arith.constant 0.797884583 : f32
    %69 = vector.broadcast %cst_34 : f32 to vector<16x128xf32>
    %70 = arith.mulf %69, %68 : vector<16x128xf32>
    %71 = math.tanh %70 : vector<16x128xf32>
    %cst_35 = arith.constant 1.000000e+00 : f32
    %72 = vector.broadcast %cst_35 : f32 to vector<16x128xf32>
    %73 = arith.addf %72, %71 : vector<16x128xf32>
    %74 = arith.mulf %63, %73 : vector<16x128xf32>
    %cst_36 = arith.constant 5.000000e-01 : f32
    %75 = vector.broadcast %cst_36 : f32 to vector<16x128xf32>
    %76 = arith.mulf %75, %61 : vector<16x128xf32>
    %cst_37 = arith.constant 4.471500e-02 : f32
    %77 = vector.broadcast %cst_37 : f32 to vector<16x128xf32>
    %78 = arith.mulf %77, %61 : vector<16x128xf32>
    %79 = arith.mulf %78, %61 : vector<16x128xf32>
    %80 = arith.mulf %79, %61 : vector<16x128xf32>
    %81 = arith.addf %61, %80 : vector<16x128xf32>
    %cst_38 = arith.constant 0.797884583 : f32
    %82 = vector.broadcast %cst_38 : f32 to vector<16x128xf32>
    %83 = arith.mulf %82, %81 : vector<16x128xf32>
    %84 = math.tanh %83 : vector<16x128xf32>
    %cst_39 = arith.constant 1.000000e+00 : f32
    %85 = vector.broadcast %cst_39 : f32 to vector<16x128xf32>
    %86 = arith.addf %85, %84 : vector<16x128xf32>
    %87 = arith.mulf %76, %86 : vector<16x128xf32>
    %88 = arith.truncf %74 : vector<16x128xf32> to vector<16x128xbf16>
    %c0_40 = arith.constant 0 : index
    %c0_41 = arith.constant 0 : index
    %89 = vector.load %arg13[%c0_40, %c0_41] : memref<16x128xbf16, #tpu.memory_space<vmem>>, vector<16x128xbf16>
    tpu.vector_store %arg13[%c0_40, %c0_41], %88 {strides = array<i32>} : memref<16x128xbf16, #tpu.memory_space<vmem>>, vector<16x128xbf16>,
    %90 = arith.truncf %87 : vector<16x128xf32> to vector<16x128xbf16>
    %c0_42 = arith.constant 0 : index
    %c0_43 = arith.constant 0 : index
    %91 = vector.load %arg14[%c0_42, %c0_43] : memref<16x128xbf16, #tpu.memory_space<vmem>>, vector<16x128xbf16>
    tpu.vector_store %arg14[%c0_42, %c0_43], %90 {strides = array<i32>} : memref<16x128xbf16, #tpu.memory_space<vmem>>, vector<16x128xbf16>,
    return
  }
  func.func @transform_0(%arg0: i32, %arg1: i32, %arg2: i32) -> (i32, i32) {
    %c0_i32 = arith.constant 0 : i32
    return %arg1, %arg2 : i32, i32
  }
  func.func @transform_1(%arg0: i32, %arg1: i32, %arg2: i32) -> (i32, i32) {
    %c0_i32 = arith.constant 0 : i32
    return %arg1, %arg2 : i32, i32
  }
  func.func @transform_2(%arg0: i32, %arg1: i32, %arg2: i32) -> (i32, i32) {
    %c0_i32 = arith.constant 0 : i32
    %c0_i32_0 = arith.constant 0 : i32
    %c0_i32_1 = arith.constant 0 : i32
    return %c0_i32, %c0_i32_0 : i32, i32
  }
  func.func @transform_3(%arg0: i32, %arg1: i32, %arg2: i32) -> (i32, i32) {
    %c0_i32 = arith.constant 0 : i32
    %c0_i32_0 = arith.constant 0 : i32
    %c0_i32_1 = arith.constant 0 : i32
    return %c0_i32, %c0_i32_0 : i32, i32
  }
  func.func @transform_4(%arg0: i32, %arg1: i32, %arg2: i32) -> (i32, i32) {
    %c0_i32 = arith.constant 0 : i32
    %c0_i32_0 = arith.constant 0 : i32
    %c0_i32_1 = arith.constant 0 : i32
    return %c0_i32, %c0_i32_0 : i32, i32
  }
  func.func @transform_5(%arg0: i32, %arg1: i32, %arg2: i32) -> (i32, i32) {
    %c0_i32 = arith.constant 0 : i32
    %c0_i32_0 = arith.constant 0 : i32
    %c0_i32_1 = arith.constant 0 : i32
    return %c0_i32, %c0_i32_0 : i32, i32
  }
  func.func @transform_6(%arg0: i32, %arg1: i32, %arg2: i32) -> (i32, i32) {
    %c0_i32 = arith.constant 0 : i32
    return %arg2, %arg0 : i32, i32
  }
  func.func @transform_7(%arg0: i32, %arg1: i32, %arg2: i32) -> (i32, i32) {
    %c0_i32 = arith.constant 0 : i32
    return %arg2, %arg0 : i32, i32
  }
  func.func @transform_8(%arg0: i32, %arg1: i32, %arg2: i32) -> (i32, i32) {
    %c0_i32 = arith.constant 0 : i32
    %c0_i32_0 = arith.constant 0 : i32
    return %c0_i32, %arg0 : i32, i32
  }
  func.func @transform_9(%arg0: i32, %arg1: i32, %arg2: i32) -> (i32, i32) {
    %c0_i32 = arith.constant 0 : i32
    %c0_i32_0 = arith.constant 0 : i32
    return %c0_i32, %arg0 : i32, i32
  }
  func.func @transform_10(%arg0: i32, %arg1: i32, %arg2: i32) -> (i32, i32) {
    %c0_i32 = arith.constant 0 : i32
    return %arg1, %arg0 : i32, i32
  }
  func.func @transform_11(%arg0: i32, %arg1: i32, %arg2: i32) -> (i32, i32) {
    %c0_i32 = arith.constant 0 : i32
    return %arg1, %arg0 : i32, i32
  }
}

module attributes {stable_mosaic.version = 11 : i64} {
  func.func @_cattn_kernel(%arg0: i32, %arg1: i32, %arg2: i32, %arg3: memref<1x8x96xbf16, #tpu.memory_space<vmem>>, %arg4: memref<1x8x96xbf16, #tpu.memory_space<vmem>>, %arg5: memref<1x8x96xbf16, #tpu.memory_space<vmem>>, %arg6: memref<1x8x96xbf16, #tpu.memory_space<vmem>>, %arg7: memref<1x1x8xf32, #tpu.memory_space<vmem>>, %arg8: memref<1x8x32xbf16, #tpu.memory_space<vmem>>, %arg9: memref<1x8x32xbf16, #tpu.memory_space<vmem>>, %arg10: memref<4x8x1xf32, #tpu.memory_space<vmem>>, %arg11: memref<4x8x1xf32, #tpu.memory_space<vmem>>, %arg12: memref<4x8x16xf32, #tpu.memory_space<vmem>>) attributes {dimension_semantics = [#tpu.dimension_semantics<parallel>, #tpu.dimension_semantics<parallel>, #tpu.dimension_semantics<arbitrary>], iteration_bounds = array<i64: 2, 1, 1>, scalar_prefetch = 0 : i64, scratch_operands = 3 : i64, tpu.core_type = #tpu.core_type<tc>, window_params = [{transform_indices = @transform_0, window_bounds = array<i64: 1, 8, 96>}, {transform_indices = @transform_1, window_bounds = array<i64: 1, 8, 96>}, {transform_indices = @transform_2, window_bounds = array<i64: 1, 8, 96>}, {transform_indices = @transform_3, window_bounds = array<i64: 1, 8, 96>}, {transform_indices = @transform_4, window_bounds = array<i64: 1, 1, 8>}, {transform_indices = @transform_5, window_bounds = array<i64: 1, 8, 32>}, {transform_indices = @transform_6, window_bounds = array<i64: 1, 8, 32>}]} {
    %c0_i32 = arith.constant 0 : i32
    %0 = arith.cmpi eq, %arg2, %c0_i32 : i32
    %1 = arith.extui %0 : i1 to i32
    %c0_i32_0 = arith.constant 0 : i32
    %2 = arith.cmpi ne, %1, %c0_i32_0 : i32
    scf.if %2 {
      %cst_154 = arith.constant 0xFF800000 : f32
      %216 = vector.broadcast %cst_154 : f32 to vector<4x8x1xf32>
      %c0_155 = arith.constant 0 : index
      %c0_156 = arith.constant 0 : index
      %c0_157 = arith.constant 0 : index
      %217 = vector.load %arg10[%c0_155, %c0_156, %c0_157] : memref<4x8x1xf32, #tpu.memory_space<vmem>>, vector<4x8x1xf32>
      tpu.vector_store %arg10[%c0_155, %c0_156, %c0_157], %216 {strides = array<i32>} : memref<4x8x1xf32, #tpu.memory_space<vmem>>, vector<4x8x1xf32>,
      %cst_158 = arith.constant 0.000000e+00 : f32
      %218 = vector.broadcast %cst_158 : f32 to vector<4x8x1xf32>
      %c0_159 = arith.constant 0 : index
      %c0_160 = arith.constant 0 : index
      %c0_161 = arith.constant 0 : index
      %219 = vector.load %arg11[%c0_159, %c0_160, %c0_161] : memref<4x8x1xf32, #tpu.memory_space<vmem>>, vector<4x8x1xf32>
      tpu.vector_store %arg11[%c0_159, %c0_160, %c0_161], %218 {strides = array<i32>} : memref<4x8x1xf32, #tpu.memory_space<vmem>>, vector<4x8x1xf32>,
      %cst_162 = arith.constant 0.000000e+00 : f32
      %220 = vector.broadcast %cst_162 : f32 to vector<4x8x16xf32>
      %c0_163 = arith.constant 0 : index
      %c0_164 = arith.constant 0 : index
      %c0_165 = arith.constant 0 : index
      %221 = vector.load %arg12[%c0_163, %c0_164, %c0_165] : memref<4x8x16xf32, #tpu.memory_space<vmem>>, vector<4x8x16xf32>
      tpu.vector_store %arg12[%c0_163, %c0_164, %c0_165], %220 {strides = array<i32>} : memref<4x8x16xf32, #tpu.memory_space<vmem>>, vector<4x8x16xf32>,
    } else {
    }
    %c0 = arith.constant 0 : index
    %c0_1 = arith.constant 0 : index
    %c0_2 = arith.constant 0 : index
    %3 = vector.load %arg7[%c0, %c0_1, %c0_2] : memref<1x1x8xf32, #tpu.memory_space<vmem>>, vector<1x1x8xf32>
    %4 = vector.shape_cast %3 : vector<1x1x8xf32> to vector<1x8xf32>
    %c0_3 = arith.constant 0 : index
    %c0_4 = arith.constant 0 : index
    %c0_5 = arith.constant 0 : index
    %5 = vector.load %arg3[%c0_3, %c0_4, %c0_5] : memref<1x8x96xbf16, #tpu.memory_space<vmem>>, vector<1x8x8xbf16>
    %6 = vector.shape_cast %5 : vector<1x8x8xbf16> to vector<8x8xbf16>
    %c0_6 = arith.constant 0 : index
    %c0_7 = arith.constant 0 : index
    %c0_8 = arith.constant 0 : index
    %7 = vector.load %arg4[%c0_6, %c0_7, %c0_8] : memref<1x8x96xbf16, #tpu.memory_space<vmem>>, vector<1x8x8xbf16>
    %8 = vector.shape_cast %7 : vector<1x8x8xbf16> to vector<8x8xbf16>
    %9 = tpu.concatenate %6, %8 in 1 : vector<8x8xbf16>, vector<8x8xbf16> -> vector<8x16xbf16>
    %c0_9 = arith.constant 0 : index
    %c0_10 = arith.constant 0 : index
    %c32 = arith.constant 32 : index
    %10 = vector.load %arg5[%c0_9, %c0_10, %c32] : memref<1x8x96xbf16, #tpu.memory_space<vmem>>, vector<1x8x8xbf16>
    %11 = vector.shape_cast %10 : vector<1x8x8xbf16> to vector<8x8xbf16>
    %c0_11 = arith.constant 0 : index
    %c0_12 = arith.constant 0 : index
    %c32_13 = arith.constant 32 : index
    %12 = vector.load %arg6[%c0_11, %c0_12, %c32_13] : memref<1x8x96xbf16, #tpu.memory_space<vmem>>, vector<1x8x8xbf16>
    %13 = vector.shape_cast %12 : vector<1x8x8xbf16> to vector<8x8xbf16>
    %14 = tpu.concatenate %11, %13 in 1 : vector<8x8xbf16>, vector<8x8xbf16> -> vector<8x16xbf16>
    %c0_14 = arith.constant 0 : index
    %c0_15 = arith.constant 0 : index
    %c64 = arith.constant 64 : index
    %15 = vector.load %arg5[%c0_14, %c0_15, %c64] : memref<1x8x96xbf16, #tpu.memory_space<vmem>>, vector<1x8x8xbf16>
    %16 = vector.shape_cast %15 : vector<1x8x8xbf16> to vector<8x8xbf16>
    %c0_16 = arith.constant 0 : index
    %c0_17 = arith.constant 0 : index
    %c64_18 = arith.constant 64 : index
    %17 = vector.load %arg6[%c0_16, %c0_17, %c64_18] : memref<1x8x96xbf16, #tpu.memory_space<vmem>>, vector<1x8x8xbf16>
    %18 = vector.shape_cast %17 : vector<1x8x8xbf16> to vector<8x8xbf16>
    %19 = tpu.concatenate %16, %18 in 1 : vector<8x8xbf16>, vector<8x8xbf16> -> vector<8x16xbf16>
    %cst = arith.constant dense<0.000000e+00> : vector<8x8xf32>
    %20 = tpu.matmul %9, %14, %cst {dimension_numbers = #tpu.dot_dimension_numbers<[1], [1], [0], [0], [0, 0, 1, 0], [], []>} : vector<8x16xbf16>, vector<8x16xbf16>, vector<8x8xf32> -> vector<8x8xf32>
    %cst_19 = arith.constant 0.353553385 : f32
    %21 = vector.broadcast %cst_19 : f32 to vector<8x8xf32>
    %22 = arith.mulf %20, %21 : vector<8x8xf32>
    %23 = vector.broadcast %4 : vector<1x8xf32> to vector<8x8xf32>
    %24 = arith.addf %22, %23 : vector<8x8xf32>
    %c0_20 = arith.constant 0 : index
    %c0_21 = arith.constant 0 : index
    %c0_22 = arith.constant 0 : index
    %25 = vector.load %arg10[%c0_20, %c0_21, %c0_22] : memref<4x8x1xf32, #tpu.memory_space<vmem>>, vector<1x8x1xf32>
    %26 = vector.shape_cast %25 : vector<1x8x1xf32> to vector<8x1xf32>
    %cst_23 = arith.constant dense<0xFF800000> : vector<8xf32>
    %27 = vector.multi_reduction <maximumf>, %24, %cst_23 [1] : vector<8x8xf32> to vector<8xf32>
    %28 = vector.shape_cast %27 : vector<8xf32> to vector<8x1xf32>
    %29 = arith.maximumf %26, %28 : vector<8x1xf32>
    %30 = arith.subf %26, %29 : vector<8x1xf32>
    %31 = math.exp %30 : vector<8x1xf32>
    %32 = vector.broadcast %29 : vector<8x1xf32> to vector<8x8xf32>
    %33 = arith.subf %24, %32 : vector<8x8xf32>
    %34 = math.exp %33 : vector<8x8xf32>
    %c0_24 = arith.constant 0 : index
    %c0_25 = arith.constant 0 : index
    %c0_26 = arith.constant 0 : index
    %35 = vector.load %arg11[%c0_24, %c0_25, %c0_26] : memref<4x8x1xf32, #tpu.memory_space<vmem>>, vector<1x8x1xf32>
    %36 = vector.shape_cast %35 : vector<1x8x1xf32> to vector<8x1xf32>
    %37 = arith.mulf %31, %36 : vector<8x1xf32>
    %cst_27 = arith.constant dense<0.000000e+00> : vector<8xf32>
    %38 = vector.multi_reduction <add>, %34, %cst_27 [1] : vector<8x8xf32> to vector<8xf32>
    %39 = vector.shape_cast %38 : vector<8xf32> to vector<8x1xf32>
    %40 = arith.addf %37, %39 : vector<8x1xf32>
    %c0_28 = arith.constant 0 : index
    %c0_29 = arith.constant 0 : index
    %c0_30 = arith.constant 0 : index
    %41 = vector.load %arg11[%c0_28, %c0_29, %c0_30] : memref<4x8x1xf32, #tpu.memory_space<vmem>>, vector<1x8x1xf32>
    %42 = vector.shape_cast %41 : vector<1x8x1xf32> to vector<8x1xf32>
    %43 = vector.shape_cast %40 : vector<8x1xf32> to vector<1x8x1xf32>
    tpu.vector_store %arg11[%c0_28, %c0_29, %c0_30], %43 {strides = array<i32>} : memref<4x8x1xf32, #tpu.memory_space<vmem>>, vector<1x8x1xf32>,
    %c0_31 = arith.constant 0 : index
    %c0_32 = arith.constant 0 : index
    %c0_33 = arith.constant 0 : index
    %44 = vector.load %arg12[%c0_31, %c0_32, %c0_33] : memref<4x8x16xf32, #tpu.memory_space<vmem>>, vector<1x8x16xf32>
    %45 = vector.shape_cast %44 : vector<1x8x16xf32> to vector<8x16xf32>
    %46 = vector.broadcast %31 : vector<8x1xf32> to vector<8x16xf32>
    %47 = arith.mulf %46, %45 : vector<8x16xf32>
    %48 = arith.truncf %34 : vector<8x8xf32> to vector<8x8xbf16>
    %cst_34 = arith.constant dense<0.000000e+00> : vector<8x16xf32>
    %49 = tpu.matmul %48, %19, %cst_34 {dimension_numbers = #tpu.dot_dimension_numbers<[1], [0], [0], [1], [0, 0, 1, 1], [], []>} : vector<8x8xbf16>, vector<8x16xbf16>, vector<8x16xf32> -> vector<8x16xf32>
    %50 = arith.addf %47, %49 : vector<8x16xf32>
    %c0_35 = arith.constant 0 : index
    %c0_36 = arith.constant 0 : index
    %c0_37 = arith.constant 0 : index
    %51 = vector.load %arg12[%c0_35, %c0_36, %c0_37] : memref<4x8x16xf32, #tpu.memory_space<vmem>>, vector<1x8x16xf32>
    %52 = vector.shape_cast %51 : vector<1x8x16xf32> to vector<8x16xf32>
    %53 = vector.shape_cast %50 : vector<8x16xf32> to vector<1x8x16xf32>
    tpu.vector_store %arg12[%c0_35, %c0_36, %c0_37], %53 {strides = array<i32>} : memref<4x8x16xf32, #tpu.memory_space<vmem>>, vector<1x8x16xf32>,
    %c0_38 = arith.constant 0 : index
    %c0_39 = arith.constant 0 : index
    %c0_40 = arith.constant 0 : index
    %54 = vector.load %arg10[%c0_38, %c0_39, %c0_40] : memref<4x8x1xf32, #tpu.memory_space<vmem>>, vector<1x8x1xf32>
    %55 = vector.shape_cast %54 : vector<1x8x1xf32> to vector<8x1xf32>
    %56 = vector.shape_cast %29 : vector<8x1xf32> to vector<1x8x1xf32>
    tpu.vector_store %arg10[%c0_38, %c0_39, %c0_40], %56 {strides = array<i32>} : memref<4x8x1xf32, #tpu.memory_space<vmem>>, vector<1x8x1xf32>,
    %c0_41 = arith.constant 0 : index
    %c0_42 = arith.constant 0 : index
    %c8 = arith.constant 8 : index
    %57 = vector.load %arg3[%c0_41, %c0_42, %c8] : memref<1x8x96xbf16, #tpu.memory_space<vmem>>, vector<1x8x8xbf16>
    %58 = vector.shape_cast %57 : vector<1x8x8xbf16> to vector<8x8xbf16>
    %c0_43 = arith.constant 0 : index
    %c0_44 = arith.constant 0 : index
    %c8_45 = arith.constant 8 : index
    %59 = vector.load %arg4[%c0_43, %c0_44, %c8_45] : memref<1x8x96xbf16, #tpu.memory_space<vmem>>, vector<1x8x8xbf16>
    %60 = vector.shape_cast %59 : vector<1x8x8xbf16> to vector<8x8xbf16>
    %61 = tpu.concatenate %58, %60 in 1 : vector<8x8xbf16>, vector<8x8xbf16> -> vector<8x16xbf16>
    %c0_46 = arith.constant 0 : index
    %c0_47 = arith.constant 0 : index
    %c40 = arith.constant 40 : index
    %62 = vector.load %arg5[%c0_46, %c0_47, %c40] : memref<1x8x96xbf16, #tpu.memory_space<vmem>>, vector<1x8x8xbf16>
    %63 = vector.shape_cast %62 : vector<1x8x8xbf16> to vector<8x8xbf16>
    %c0_48 = arith.constant 0 : index
    %c0_49 = arith.constant 0 : index
    %c40_50 = arith.constant 40 : index
    %64 = vector.load %arg6[%c0_48, %c0_49, %c40_50] : memref<1x8x96xbf16, #tpu.memory_space<vmem>>, vector<1x8x8xbf16>
    %65 = vector.shape_cast %64 : vector<1x8x8xbf16> to vector<8x8xbf16>
    %66 = tpu.concatenate %63, %65 in 1 : vector<8x8xbf16>, vector<8x8xbf16> -> vector<8x16xbf16>
    %c0_51 = arith.constant 0 : index
    %c0_52 = arith.constant 0 : index
    %c72 = arith.constant 72 : index
    %67 = vector.load %arg5[%c0_51, %c0_52, %c72] : memref<1x8x96xbf16, #tpu.memory_space<vmem>>, vector<1x8x8xbf16>
    %68 = vector.shape_cast %67 : vector<1x8x8xbf16> to vector<8x8xbf16>
    %c0_53 = arith.constant 0 : index
    %c0_54 = arith.constant 0 : index
    %c72_55 = arith.constant 72 : index
    %69 = vector.load %arg6[%c0_53, %c0_54, %c72_55] : memref<1x8x96xbf16, #tpu.memory_space<vmem>>, vector<1x8x8xbf16>
    %70 = vector.shape_cast %69 : vector<1x8x8xbf16> to vector<8x8xbf16>
    %71 = tpu.concatenate %68, %70 in 1 : vector<8x8xbf16>, vector<8x8xbf16> -> vector<8x16xbf16>
    %cst_56 = arith.constant dense<0.000000e+00> : vector<8x8xf32>
    %72 = tpu.matmul %61, %66, %cst_56 {dimension_numbers = #tpu.dot_dimension_numbers<[1], [1], [0], [0], [0, 0, 1, 0], [], []>} : vector<8x16xbf16>, vector<8x16xbf16>, vector<8x8xf32> -> vector<8x8xf32>
    %cst_57 = arith.constant 0.353553385 : f32
    %73 = vector.broadcast %cst_57 : f32 to vector<8x8xf32>
    %74 = arith.mulf %72, %73 : vector<8x8xf32>
    %75 = vector.broadcast %4 : vector<1x8xf32> to vector<8x8xf32>
    %76 = arith.addf %74, %75 : vector<8x8xf32>
    %c1 = arith.constant 1 : index
    %c0_58 = arith.constant 0 : index
    %c0_59 = arith.constant 0 : index
    %77 = vector.load %arg10[%c1, %c0_58, %c0_59] : memref<4x8x1xf32, #tpu.memory_space<vmem>>, vector<1x8x1xf32>
    %78 = vector.shape_cast %77 : vector<1x8x1xf32> to vector<8x1xf32>
    %cst_60 = arith.constant dense<0xFF800000> : vector<8xf32>
    %79 = vector.multi_reduction <maximumf>, %76, %cst_60 [1] : vector<8x8xf32> to vector<8xf32>
    %80 = vector.shape_cast %79 : vector<8xf32> to vector<8x1xf32>
    %81 = arith.maximumf %78, %80 : vector<8x1xf32>
    %82 = arith.subf %78, %81 : vector<8x1xf32>
    %83 = math.exp %82 : vector<8x1xf32>
    %84 = vector.broadcast %81 : vector<8x1xf32> to vector<8x8xf32>
    %85 = arith.subf %76, %84 : vector<8x8xf32>
    %86 = math.exp %85 : vector<8x8xf32>
    %c1_61 = arith.constant 1 : index
    %c0_62 = arith.constant 0 : index
    %c0_63 = arith.constant 0 : index
    %87 = vector.load %arg11[%c1_61, %c0_62, %c0_63] : memref<4x8x1xf32, #tpu.memory_space<vmem>>, vector<1x8x1xf32>
    %88 = vector.shape_cast %87 : vector<1x8x1xf32> to vector<8x1xf32>
    %89 = arith.mulf %83, %88 : vector<8x1xf32>
    %cst_64 = arith.constant dense<0.000000e+00> : vector<8xf32>
    %90 = vector.multi_reduction <add>, %86, %cst_64 [1] : vector<8x8xf32> to vector<8xf32>
    %91 = vector.shape_cast %90 : vector<8xf32> to vector<8x1xf32>
    %92 = arith.addf %89, %91 : vector<8x1xf32>
    %c1_65 = arith.constant 1 : index
    %c0_66 = arith.constant 0 : index
    %c0_67 = arith.constant 0 : index
    %93 = vector.load %arg11[%c1_65, %c0_66, %c0_67] : memref<4x8x1xf32, #tpu.memory_space<vmem>>, vector<1x8x1xf32>
    %94 = vector.shape_cast %93 : vector<1x8x1xf32> to vector<8x1xf32>
    %95 = vector.shape_cast %92 : vector<8x1xf32> to vector<1x8x1xf32>
    tpu.vector_store %arg11[%c1_65, %c0_66, %c0_67], %95 {strides = array<i32>} : memref<4x8x1xf32, #tpu.memory_space<vmem>>, vector<1x8x1xf32>,
    %c1_68 = arith.constant 1 : index
    %c0_69 = arith.constant 0 : index
    %c0_70 = arith.constant 0 : index
    %96 = vector.load %arg12[%c1_68, %c0_69, %c0_70] : memref<4x8x16xf32, #tpu.memory_space<vmem>>, vector<1x8x16xf32>
    %97 = vector.shape_cast %96 : vector<1x8x16xf32> to vector<8x16xf32>
    %98 = vector.broadcast %83 : vector<8x1xf32> to vector<8x16xf32>
    %99 = arith.mulf %98, %97 : vector<8x16xf32>
    %100 = arith.truncf %86 : vector<8x8xf32> to vector<8x8xbf16>
    %cst_71 = arith.constant dense<0.000000e+00> : vector<8x16xf32>
    %101 = tpu.matmul %100, %71, %cst_71 {dimension_numbers = #tpu.dot_dimension_numbers<[1], [0], [0], [1], [0, 0, 1, 1], [], []>} : vector<8x8xbf16>, vector<8x16xbf16>, vector<8x16xf32> -> vector<8x16xf32>
    %102 = arith.addf %99, %101 : vector<8x16xf32>
    %c1_72 = arith.constant 1 : index
    %c0_73 = arith.constant 0 : index
    %c0_74 = arith.constant 0 : index
    %103 = vector.load %arg12[%c1_72, %c0_73, %c0_74] : memref<4x8x16xf32, #tpu.memory_space<vmem>>, vector<1x8x16xf32>
    %104 = vector.shape_cast %103 : vector<1x8x16xf32> to vector<8x16xf32>
    %105 = vector.shape_cast %102 : vector<8x16xf32> to vector<1x8x16xf32>
    tpu.vector_store %arg12[%c1_72, %c0_73, %c0_74], %105 {strides = array<i32>} : memref<4x8x16xf32, #tpu.memory_space<vmem>>, vector<1x8x16xf32>,
    %c1_75 = arith.constant 1 : index
    %c0_76 = arith.constant 0 : index
    %c0_77 = arith.constant 0 : index
    %106 = vector.load %arg10[%c1_75, %c0_76, %c0_77] : memref<4x8x1xf32, #tpu.memory_space<vmem>>, vector<1x8x1xf32>
    %107 = vector.shape_cast %106 : vector<1x8x1xf32> to vector<8x1xf32>
    %108 = vector.shape_cast %81 : vector<8x1xf32> to vector<1x8x1xf32>
    tpu.vector_store %arg10[%c1_75, %c0_76, %c0_77], %108 {strides = array<i32>} : memref<4x8x1xf32, #tpu.memory_space<vmem>>, vector<1x8x1xf32>,
    %c0_78 = arith.constant 0 : index
    %c0_79 = arith.constant 0 : index
    %c16 = arith.constant 16 : index
    %109 = vector.load %arg3[%c0_78, %c0_79, %c16] : memref<1x8x96xbf16, #tpu.memory_space<vmem>>, vector<1x8x8xbf16>
    %110 = vector.shape_cast %109 : vector<1x8x8xbf16> to vector<8x8xbf16>
    %c0_80 = arith.constant 0 : index
    %c0_81 = arith.constant 0 : index
    %c16_82 = arith.constant 16 : index
    %111 = vector.load %arg4[%c0_80, %c0_81, %c16_82] : memref<1x8x96xbf16, #tpu.memory_space<vmem>>, vector<1x8x8xbf16>
    %112 = vector.shape_cast %111 : vector<1x8x8xbf16> to vector<8x8xbf16>
    %113 = tpu.concatenate %110, %112 in 1 : vector<8x8xbf16>, vector<8x8xbf16> -> vector<8x16xbf16>
    %c0_83 = arith.constant 0 : index
    %c0_84 = arith.constant 0 : index
    %c48 = arith.constant 48 : index
    %114 = vector.load %arg5[%c0_83, %c0_84, %c48] : memref<1x8x96xbf16, #tpu.memory_space<vmem>>, vector<1x8x8xbf16>
    %115 = vector.shape_cast %114 : vector<1x8x8xbf16> to vector<8x8xbf16>
    %c0_85 = arith.constant 0 : index
    %c0_86 = arith.constant 0 : index
    %c48_87 = arith.constant 48 : index
    %116 = vector.load %arg6[%c0_85, %c0_86, %c48_87] : memref<1x8x96xbf16, #tpu.memory_space<vmem>>, vector<1x8x8xbf16>
    %117 = vector.shape_cast %116 : vector<1x8x8xbf16> to vector<8x8xbf16>
    %118 = tpu.concatenate %115, %117 in 1 : vector<8x8xbf16>, vector<8x8xbf16> -> vector<8x16xbf16>
    %c0_88 = arith.constant 0 : index
    %c0_89 = arith.constant 0 : index
    %c80 = arith.constant 80 : index
    %119 = vector.load %arg5[%c0_88, %c0_89, %c80] : memref<1x8x96xbf16, #tpu.memory_space<vmem>>, vector<1x8x8xbf16>
    %120 = vector.shape_cast %119 : vector<1x8x8xbf16> to vector<8x8xbf16>
    %c0_90 = arith.constant 0 : index
    %c0_91 = arith.constant 0 : index
    %c80_92 = arith.constant 80 : index
    %121 = vector.load %arg6[%c0_90, %c0_91, %c80_92] : memref<1x8x96xbf16, #tpu.memory_space<vmem>>, vector<1x8x8xbf16>
    %122 = vector.shape_cast %121 : vector<1x8x8xbf16> to vector<8x8xbf16>
    %123 = tpu.concatenate %120, %122 in 1 : vector<8x8xbf16>, vector<8x8xbf16> -> vector<8x16xbf16>
    %cst_93 = arith.constant dense<0.000000e+00> : vector<8x8xf32>
    %124 = tpu.matmul %113, %118, %cst_93 {dimension_numbers = #tpu.dot_dimension_numbers<[1], [1], [0], [0], [0, 0, 1, 0], [], []>} : vector<8x16xbf16>, vector<8x16xbf16>, vector<8x8xf32> -> vector<8x8xf32>
    %cst_94 = arith.constant 0.353553385 : f32
    %125 = vector.broadcast %cst_94 : f32 to vector<8x8xf32>
    %126 = arith.mulf %124, %125 : vector<8x8xf32>
    %127 = vector.broadcast %4 : vector<1x8xf32> to vector<8x8xf32>
    %128 = arith.addf %126, %127 : vector<8x8xf32>
    %c2 = arith.constant 2 : index
    %c0_95 = arith.constant 0 : index
    %c0_96 = arith.constant 0 : index
    %129 = vector.load %arg10[%c2, %c0_95, %c0_96] : memref<4x8x1xf32, #tpu.memory_space<vmem>>, vector<1x8x1xf32>
    %130 = vector.shape_cast %129 : vector<1x8x1xf32> to vector<8x1xf32>
    %cst_97 = arith.constant dense<0xFF800000> : vector<8xf32>
    %131 = vector.multi_reduction <maximumf>, %128, %cst_97 [1] : vector<8x8xf32> to vector<8xf32>
    %132 = vector.shape_cast %131 : vector<8xf32> to vector<8x1xf32>
    %133 = arith.maximumf %130, %132 : vector<8x1xf32>
    %134 = arith.subf %130, %133 : vector<8x1xf32>
    %135 = math.exp %134 : vector<8x1xf32>
    %136 = vector.broadcast %133 : vector<8x1xf32> to vector<8x8xf32>
    %137 = arith.subf %128, %136 : vector<8x8xf32>
    %138 = math.exp %137 : vector<8x8xf32>
    %c2_98 = arith.constant 2 : index
    %c0_99 = arith.constant 0 : index
    %c0_100 = arith.constant 0 : index
    %139 = vector.load %arg11[%c2_98, %c0_99, %c0_100] : memref<4x8x1xf32, #tpu.memory_space<vmem>>, vector<1x8x1xf32>
    %140 = vector.shape_cast %139 : vector<1x8x1xf32> to vector<8x1xf32>
    %141 = arith.mulf %135, %140 : vector<8x1xf32>
    %cst_101 = arith.constant dense<0.000000e+00> : vector<8xf32>
    %142 = vector.multi_reduction <add>, %138, %cst_101 [1] : vector<8x8xf32> to vector<8xf32>
    %143 = vector.shape_cast %142 : vector<8xf32> to vector<8x1xf32>
    %144 = arith.addf %141, %143 : vector<8x1xf32>
    %c2_102 = arith.constant 2 : index
    %c0_103 = arith.constant 0 : index
    %c0_104 = arith.constant 0 : index
    %145 = vector.load %arg11[%c2_102, %c0_103, %c0_104] : memref<4x8x1xf32, #tpu.memory_space<vmem>>, vector<1x8x1xf32>
    %146 = vector.shape_cast %145 : vector<1x8x1xf32> to vector<8x1xf32>
    %147 = vector.shape_cast %144 : vector<8x1xf32> to vector<1x8x1xf32>
    tpu.vector_store %arg11[%c2_102, %c0_103, %c0_104], %147 {strides = array<i32>} : memref<4x8x1xf32, #tpu.memory_space<vmem>>, vector<1x8x1xf32>,
    %c2_105 = arith.constant 2 : index
    %c0_106 = arith.constant 0 : index
    %c0_107 = arith.constant 0 : index
    %148 = vector.load %arg12[%c2_105, %c0_106, %c0_107] : memref<4x8x16xf32, #tpu.memory_space<vmem>>, vector<1x8x16xf32>
    %149 = vector.shape_cast %148 : vector<1x8x16xf32> to vector<8x16xf32>
    %150 = vector.broadcast %135 : vector<8x1xf32> to vector<8x16xf32>
    %151 = arith.mulf %150, %149 : vector<8x16xf32>
    %152 = arith.truncf %138 : vector<8x8xf32> to vector<8x8xbf16>
    %cst_108 = arith.constant dense<0.000000e+00> : vector<8x16xf32>
    %153 = tpu.matmul %152, %123, %cst_108 {dimension_numbers = #tpu.dot_dimension_numbers<[1], [0], [0], [1], [0, 0, 1, 1], [], []>} : vector<8x8xbf16>, vector<8x16xbf16>, vector<8x16xf32> -> vector<8x16xf32>
    %154 = arith.addf %151, %153 : vector<8x16xf32>
    %c2_109 = arith.constant 2 : index
    %c0_110 = arith.constant 0 : index
    %c0_111 = arith.constant 0 : index
    %155 = vector.load %arg12[%c2_109, %c0_110, %c0_111] : memref<4x8x16xf32, #tpu.memory_space<vmem>>, vector<1x8x16xf32>
    %156 = vector.shape_cast %155 : vector<1x8x16xf32> to vector<8x16xf32>
    %157 = vector.shape_cast %154 : vector<8x16xf32> to vector<1x8x16xf32>
    tpu.vector_store %arg12[%c2_109, %c0_110, %c0_111], %157 {strides = array<i32>} : memref<4x8x16xf32, #tpu.memory_space<vmem>>, vector<1x8x16xf32>,
    %c2_112 = arith.constant 2 : index
    %c0_113 = arith.constant 0 : index
    %c0_114 = arith.constant 0 : index
    %158 = vector.load %arg10[%c2_112, %c0_113, %c0_114] : memref<4x8x1xf32, #tpu.memory_space<vmem>>, vector<1x8x1xf32>
    %159 = vector.shape_cast %158 : vector<1x8x1xf32> to vector<8x1xf32>
    %160 = vector.shape_cast %133 : vector<8x1xf32> to vector<1x8x1xf32>
    tpu.vector_store %arg10[%c2_112, %c0_113, %c0_114], %160 {strides = array<i32>} : memref<4x8x1xf32, #tpu.memory_space<vmem>>, vector<1x8x1xf32>,
    %c0_115 = arith.constant 0 : index
    %c0_116 = arith.constant 0 : index
    %c24 = arith.constant 24 : index
    %161 = vector.load %arg3[%c0_115, %c0_116, %c24] : memref<1x8x96xbf16, #tpu.memory_space<vmem>>, vector<1x8x8xbf16>
    %162 = vector.shape_cast %161 : vector<1x8x8xbf16> to vector<8x8xbf16>
    %c0_117 = arith.constant 0 : index
    %c0_118 = arith.constant 0 : index
    %c24_119 = arith.constant 24 : index
    %163 = vector.load %arg4[%c0_117, %c0_118, %c24_119] : memref<1x8x96xbf16, #tpu.memory_space<vmem>>, vector<1x8x8xbf16>
    %164 = vector.shape_cast %163 : vector<1x8x8xbf16> to vector<8x8xbf16>
    %165 = tpu.concatenate %162, %164 in 1 : vector<8x8xbf16>, vector<8x8xbf16> -> vector<8x16xbf16>
    %c0_120 = arith.constant 0 : index
    %c0_121 = arith.constant 0 : index
    %c56 = arith.constant 56 : index
    %166 = vector.load %arg5[%c0_120, %c0_121, %c56] : memref<1x8x96xbf16, #tpu.memory_space<vmem>>, vector<1x8x8xbf16>
    %167 = vector.shape_cast %166 : vector<1x8x8xbf16> to vector<8x8xbf16>
    %c0_122 = arith.constant 0 : index
    %c0_123 = arith.constant 0 : index
    %c56_124 = arith.constant 56 : index
    %168 = vector.load %arg6[%c0_122, %c0_123, %c56_124] : memref<1x8x96xbf16, #tpu.memory_space<vmem>>, vector<1x8x8xbf16>
    %169 = vector.shape_cast %168 : vector<1x8x8xbf16> to vector<8x8xbf16>
    %170 = tpu.concatenate %167, %169 in 1 : vector<8x8xbf16>, vector<8x8xbf16> -> vector<8x16xbf16>
    %c0_125 = arith.constant 0 : index
    %c0_126 = arith.constant 0 : index
    %c88 = arith.constant 88 : index
    %171 = vector.load %arg5[%c0_125, %c0_126, %c88] : memref<1x8x96xbf16, #tpu.memory_space<vmem>>, vector<1x8x8xbf16>
    %172 = vector.shape_cast %171 : vector<1x8x8xbf16> to vector<8x8xbf16>
    %c0_127 = arith.constant 0 : index
    %c0_128 = arith.constant 0 : index
    %c88_129 = arith.constant 88 : index
    %173 = vector.load %arg6[%c0_127, %c0_128, %c88_129] : memref<1x8x96xbf16, #tpu.memory_space<vmem>>, vector<1x8x8xbf16>
    %174 = vector.shape_cast %173 : vector<1x8x8xbf16> to vector<8x8xbf16>
    %175 = tpu.concatenate %172, %174 in 1 : vector<8x8xbf16>, vector<8x8xbf16> -> vector<8x16xbf16>
    %cst_130 = arith.constant dense<0.000000e+00> : vector<8x8xf32>
    %176 = tpu.matmul %165, %170, %cst_130 {dimension_numbers = #tpu.dot_dimension_numbers<[1], [1], [0], [0], [0, 0, 1, 0], [], []>} : vector<8x16xbf16>, vector<8x16xbf16>, vector<8x8xf32> -> vector<8x8xf32>
    %cst_131 = arith.constant 0.353553385 : f32
    %177 = vector.broadcast %cst_131 : f32 to vector<8x8xf32>
    %178 = arith.mulf %176, %177 : vector<8x8xf32>
    %179 = vector.broadcast %4 : vector<1x8xf32> to vector<8x8xf32>
    %180 = arith.addf %178, %179 : vector<8x8xf32>
    %c3 = arith.constant 3 : index
    %c0_132 = arith.constant 0 : index
    %c0_133 = arith.constant 0 : index
    %181 = vector.load %arg10[%c3, %c0_132, %c0_133] : memref<4x8x1xf32, #tpu.memory_space<vmem>>, vector<1x8x1xf32>
    %182 = vector.shape_cast %181 : vector<1x8x1xf32> to vector<8x1xf32>
    %cst_134 = arith.constant dense<0xFF800000> : vector<8xf32>
    %183 = vector.multi_reduction <maximumf>, %180, %cst_134 [1] : vector<8x8xf32> to vector<8xf32>
    %184 = vector.shape_cast %183 : vector<8xf32> to vector<8x1xf32>
    %185 = arith.maximumf %182, %184 : vector<8x1xf32>
    %186 = arith.subf %182, %185 : vector<8x1xf32>
    %187 = math.exp %186 : vector<8x1xf32>
    %188 = vector.broadcast %185 : vector<8x1xf32> to vector<8x8xf32>
    %189 = arith.subf %180, %188 : vector<8x8xf32>
    %190 = math.exp %189 : vector<8x8xf32>
    %c3_135 = arith.constant 3 : index
    %c0_136 = arith.constant 0 : index
    %c0_137 = arith.constant 0 : index
    %191 = vector.load %arg11[%c3_135, %c0_136, %c0_137] : memref<4x8x1xf32, #tpu.memory_space<vmem>>, vector<1x8x1xf32>
    %192 = vector.shape_cast %191 : vector<1x8x1xf32> to vector<8x1xf32>
    %193 = arith.mulf %187, %192 : vector<8x1xf32>
    %cst_138 = arith.constant dense<0.000000e+00> : vector<8xf32>
    %194 = vector.multi_reduction <add>, %190, %cst_138 [1] : vector<8x8xf32> to vector<8xf32>
    %195 = vector.shape_cast %194 : vector<8xf32> to vector<8x1xf32>
    %196 = arith.addf %193, %195 : vector<8x1xf32>
    %c3_139 = arith.constant 3 : index
    %c0_140 = arith.constant 0 : index
    %c0_141 = arith.constant 0 : index
    %197 = vector.load %arg11[%c3_139, %c0_140, %c0_141] : memref<4x8x1xf32, #tpu.memory_space<vmem>>, vector<1x8x1xf32>
    %198 = vector.shape_cast %197 : vector<1x8x1xf32> to vector<8x1xf32>
    %199 = vector.shape_cast %196 : vector<8x1xf32> to vector<1x8x1xf32>
    tpu.vector_store %arg11[%c3_139, %c0_140, %c0_141], %199 {strides = array<i32>} : memref<4x8x1xf32, #tpu.memory_space<vmem>>, vector<1x8x1xf32>,
    %c3_142 = arith.constant 3 : index
    %c0_143 = arith.constant 0 : index
    %c0_144 = arith.constant 0 : index
    %200 = vector.load %arg12[%c3_142, %c0_143, %c0_144] : memref<4x8x16xf32, #tpu.memory_space<vmem>>, vector<1x8x16xf32>
    %201 = vector.shape_cast %200 : vector<1x8x16xf32> to vector<8x16xf32>
    %202 = vector.broadcast %187 : vector<8x1xf32> to vector<8x16xf32>
    %203 = arith.mulf %202, %201 : vector<8x16xf32>
    %204 = arith.truncf %190 : vector<8x8xf32> to vector<8x8xbf16>
    %cst_145 = arith.constant dense<0.000000e+00> : vector<8x16xf32>
    %205 = tpu.matmul %204, %175, %cst_145 {dimension_numbers = #tpu.dot_dimension_numbers<[1], [0], [0], [1], [0, 0, 1, 1], [], []>} : vector<8x8xbf16>, vector<8x16xbf16>, vector<8x16xf32> -> vector<8x16xf32>
    %206 = arith.addf %203, %205 : vector<8x16xf32>
    %c3_146 = arith.constant 3 : index
    %c0_147 = arith.constant 0 : index
    %c0_148 = arith.constant 0 : index
    %207 = vector.load %arg12[%c3_146, %c0_147, %c0_148] : memref<4x8x16xf32, #tpu.memory_space<vmem>>, vector<1x8x16xf32>
    %208 = vector.shape_cast %207 : vector<1x8x16xf32> to vector<8x16xf32>
    %209 = vector.shape_cast %206 : vector<8x16xf32> to vector<1x8x16xf32>
    tpu.vector_store %arg12[%c3_146, %c0_147, %c0_148], %209 {strides = array<i32>} : memref<4x8x16xf32, #tpu.memory_space<vmem>>, vector<1x8x16xf32>,
    %c3_149 = arith.constant 3 : index
    %c0_150 = arith.constant 0 : index
    %c0_151 = arith.constant 0 : index
    %210 = vector.load %arg10[%c3_149, %c0_150, %c0_151] : memref<4x8x1xf32, #tpu.memory_space<vmem>>, vector<1x8x1xf32>
    %211 = vector.shape_cast %210 : vector<1x8x1xf32> to vector<8x1xf32>
    %212 = vector.shape_cast %185 : vector<8x1xf32> to vector<1x8x1xf32>
    tpu.vector_store %arg10[%c3_149, %c0_150, %c0_151], %212 {strides = array<i32>} : memref<4x8x1xf32, #tpu.memory_space<vmem>>, vector<1x8x1xf32>,
    %c0_i32_152 = arith.constant 0 : i32
    %213 = arith.cmpi eq, %arg2, %c0_i32_152 : i32
    %214 = arith.extui %213 : i1 to i32
    %c0_i32_153 = arith.constant 0 : i32
    %215 = arith.cmpi ne, %214, %c0_i32_153 : i32
    scf.if %215 {
      %c0_154 = arith.constant 0 : index
      %c0_155 = arith.constant 0 : index
      %c0_156 = arith.constant 0 : index
      %216 = vector.load %arg11[%c0_154, %c0_155, %c0_156] : memref<4x8x1xf32, #tpu.memory_space<vmem>>, vector<1x8x1xf32>
      %217 = vector.shape_cast %216 : vector<1x8x1xf32> to vector<8x1xf32>
      %218 = tpu.reciprocal %217 {approx = true} : vector<8x1xf32> -> vector<8x1xf32>
      %c0_157 = arith.constant 0 : index
      %c0_158 = arith.constant 0 : index
      %c0_159 = arith.constant 0 : index
      %219 = vector.load %arg12[%c0_157, %c0_158, %c0_159] : memref<4x8x16xf32, #tpu.memory_space<vmem>>, vector<1x8x16xf32>
      %220 = vector.shape_cast %219 : vector<1x8x16xf32> to vector<8x16xf32>
      %221 = vector.broadcast %218 : vector<8x1xf32> to vector<8x16xf32>
      %222 = arith.mulf %220, %221 : vector<8x16xf32>
      %223 = vector.extract_strided_slice %222 {offsets = [0, 0], sizes = [8, 8], strides = [1, 1]} : vector<8x16xf32> to vector<8x8xf32>
      %224 = vector.extract_strided_slice %222 {offsets = [0, 8], sizes = [8, 8], strides = [1, 1]} : vector<8x16xf32> to vector<8x8xf32>
      %c1_160 = arith.constant 1 : index
      %c0_161 = arith.constant 0 : index
      %c0_162 = arith.constant 0 : index
      %225 = vector.load %arg11[%c1_160, %c0_161, %c0_162] : memref<4x8x1xf32, #tpu.memory_space<vmem>>, vector<1x8x1xf32>
      %226 = vector.shape_cast %225 : vector<1x8x1xf32> to vector<8x1xf32>
      %227 = tpu.reciprocal %226 {approx = true} : vector<8x1xf32> -> vector<8x1xf32>
      %c1_163 = arith.constant 1 : index
      %c0_164 = arith.constant 0 : index
      %c0_165 = arith.constant 0 : index
      %228 = vector.load %arg12[%c1_163, %c0_164, %c0_165] : memref<4x8x16xf32, #tpu.memory_space<vmem>>, vector<1x8x16xf32>
      %229 = vector.shape_cast %228 : vector<1x8x16xf32> to vector<8x16xf32>
      %230 = vector.broadcast %227 : vector<8x1xf32> to vector<8x16xf32>
      %231 = arith.mulf %229, %230 : vector<8x16xf32>
      %232 = vector.extract_strided_slice %231 {offsets = [0, 0], sizes = [8, 8], strides = [1, 1]} : vector<8x16xf32> to vector<8x8xf32>
      %233 = vector.extract_strided_slice %231 {offsets = [0, 8], sizes = [8, 8], strides = [1, 1]} : vector<8x16xf32> to vector<8x8xf32>
      %c2_166 = arith.constant 2 : index
      %c0_167 = arith.constant 0 : index
      %c0_168 = arith.constant 0 : index
      %234 = vector.load %arg11[%c2_166, %c0_167, %c0_168] : memref<4x8x1xf32, #tpu.memory_space<vmem>>, vector<1x8x1xf32>
      %235 = vector.shape_cast %234 : vector<1x8x1xf32> to vector<8x1xf32>
      %236 = tpu.reciprocal %235 {approx = true} : vector<8x1xf32> -> vector<8x1xf32>
      %c2_169 = arith.constant 2 : index
      %c0_170 = arith.constant 0 : index
      %c0_171 = arith.constant 0 : index
      %237 = vector.load %arg12[%c2_169, %c0_170, %c0_171] : memref<4x8x16xf32, #tpu.memory_space<vmem>>, vector<1x8x16xf32>
      %238 = vector.shape_cast %237 : vector<1x8x16xf32> to vector<8x16xf32>
      %239 = vector.broadcast %236 : vector<8x1xf32> to vector<8x16xf32>
      %240 = arith.mulf %238, %239 : vector<8x16xf32>
      %241 = vector.extract_strided_slice %240 {offsets = [0, 0], sizes = [8, 8], strides = [1, 1]} : vector<8x16xf32> to vector<8x8xf32>
      %242 = vector.extract_strided_slice %240 {offsets = [0, 8], sizes = [8, 8], strides = [1, 1]} : vector<8x16xf32> to vector<8x8xf32>
      %c3_172 = arith.constant 3 : index
      %c0_173 = arith.constant 0 : index
      %c0_174 = arith.constant 0 : index
      %243 = vector.load %arg11[%c3_172, %c0_173, %c0_174] : memref<4x8x1xf32, #tpu.memory_space<vmem>>, vector<1x8x1xf32>
      %244 = vector.shape_cast %243 : vector<1x8x1xf32> to vector<8x1xf32>
      %245 = tpu.reciprocal %244 {approx = true} : vector<8x1xf32> -> vector<8x1xf32>
      %c3_175 = arith.constant 3 : index
      %c0_176 = arith.constant 0 : index
      %c0_177 = arith.constant 0 : index
      %246 = vector.load %arg12[%c3_175, %c0_176, %c0_177] : memref<4x8x16xf32, #tpu.memory_space<vmem>>, vector<1x8x16xf32>
      %247 = vector.shape_cast %246 : vector<1x8x16xf32> to vector<8x16xf32>
      %248 = vector.broadcast %245 : vector<8x1xf32> to vector<8x16xf32>
      %249 = arith.mulf %247, %248 : vector<8x16xf32>
      %250 = vector.extract_strided_slice %249 {offsets = [0, 0], sizes = [8, 8], strides = [1, 1]} : vector<8x16xf32> to vector<8x8xf32>
      %251 = vector.extract_strided_slice %249 {offsets = [0, 8], sizes = [8, 8], strides = [1, 1]} : vector<8x16xf32> to vector<8x8xf32>
      %252 = tpu.concatenate %223, %232, %241, %250 in 1 : vector<8x8xf32>, vector<8x8xf32>, vector<8x8xf32>, vector<8x8xf32> -> vector<8x32xf32>
      %253 = arith.truncf %252 : vector<8x32xf32> to vector<8x32xbf16>
      %c0_178 = arith.constant 0 : index
      %c0_179 = arith.constant 0 : index
      %c0_180 = arith.constant 0 : index
      %254 = vector.load %arg8[%c0_178, %c0_179, %c0_180] : memref<1x8x32xbf16, #tpu.memory_space<vmem>>, vector<1x8x32xbf16>
      %255 = vector.shape_cast %254 : vector<1x8x32xbf16> to vector<8x32xbf16>
      %256 = vector.shape_cast %253 : vector<8x32xbf16> to vector<1x8x32xbf16>
      tpu.vector_store %arg8[%c0_178, %c0_179, %c0_180], %256 {strides = array<i32>} : memref<1x8x32xbf16, #tpu.memory_space<vmem>>, vector<1x8x32xbf16>,
      %257 = tpu.concatenate %224, %233, %242, %251 in 1 : vector<8x8xf32>, vector<8x8xf32>, vector<8x8xf32>, vector<8x8xf32> -> vector<8x32xf32>
      %258 = arith.truncf %257 : vector<8x32xf32> to vector<8x32xbf16>
      %c0_181 = arith.constant 0 : index
      %c0_182 = arith.constant 0 : index
      %c0_183 = arith.constant 0 : index
      %259 = vector.load %arg9[%c0_181, %c0_182, %c0_183] : memref<1x8x32xbf16, #tpu.memory_space<vmem>>, vector<1x8x32xbf16>
      %260 = vector.shape_cast %259 : vector<1x8x32xbf16> to vector<8x32xbf16>
      %261 = vector.shape_cast %258 : vector<8x32xbf16> to vector<1x8x32xbf16>
      tpu.vector_store %arg9[%c0_181, %c0_182, %c0_183], %261 {strides = array<i32>} : memref<1x8x32xbf16, #tpu.memory_space<vmem>>, vector<1x8x32xbf16>,
    } else {
    }
    return
  }
  func.func @transform_0(%arg0: i32, %arg1: i32, %arg2: i32) -> (i32, i32, i32) {
    %c0_i32 = arith.constant 0 : i32
    %c0_i32_0 = arith.constant 0 : i32
    return %arg0, %arg1, %c0_i32 : i32, i32, i32
  }
  func.func @transform_1(%arg0: i32, %arg1: i32, %arg2: i32) -> (i32, i32, i32) {
    %c0_i32 = arith.constant 0 : i32
    %c0_i32_0 = arith.constant 0 : i32
    return %arg0, %arg1, %c0_i32 : i32, i32, i32
  }
  func.func @transform_2(%arg0: i32, %arg1: i32, %arg2: i32) -> (i32, i32, i32) {
    %c0_i32 = arith.constant 0 : i32
    %c0_i32_0 = arith.constant 0 : i32
    return %arg0, %arg2, %c0_i32 : i32, i32, i32
  }
  func.func @transform_3(%arg0: i32, %arg1: i32, %arg2: i32) -> (i32, i32, i32) {
    %c0_i32 = arith.constant 0 : i32
    %c0_i32_0 = arith.constant 0 : i32
    return %arg0, %arg2, %c0_i32 : i32, i32, i32
  }
  func.func @transform_4(%arg0: i32, %arg1: i32, %arg2: i32) -> (i32, i32, i32) {
    %c0_i32 = arith.constant 0 : i32
    %c0_i32_0 = arith.constant 0 : i32
    return %arg0, %c0_i32, %arg2 : i32, i32, i32
  }
  func.func @transform_5(%arg0: i32, %arg1: i32, %arg2: i32) -> (i32, i32, i32) {
    %c0_i32 = arith.constant 0 : i32
    %c0_i32_0 = arith.constant 0 : i32
    return %arg0, %arg1, %c0_i32 : i32, i32, i32
  }
  func.func @transform_6(%arg0: i32, %arg1: i32, %arg2: i32) -> (i32, i32, i32) {
    %c0_i32 = arith.constant 0 : i32
    %c0_i32_0 = arith.constant 0 : i32
    return %arg0, %arg1, %c0_i32 : i32, i32, i32
  }
}

module attributes {stable_mosaic.version = 11 : i64} {
  func.func @_ln_cdense_kernel(%arg0: i32, %arg1: i32, %arg2: i32, %arg3: memref<16x128xbf16, #tpu.memory_space<vmem>>, %arg4: memref<16x128xbf16, #tpu.memory_space<vmem>>, %arg5: memref<128x32xbf16, #tpu.memory_space<vmem>>, %arg6: memref<128x32xbf16, #tpu.memory_space<vmem>>, %arg7: memref<1x32xf32, #tpu.memory_space<vmem>>, %arg8: memref<1x32xf32, #tpu.memory_space<vmem>>, %arg9: memref<16x32xf32, #tpu.memory_space<vmem>>, %arg10: memref<16x32xf32, #tpu.memory_space<vmem>>, %arg11: memref<16x32xf32, #tpu.memory_space<vmem>>, %arg12: memref<16x32xf32, #tpu.memory_space<vmem>>) attributes {dimension_semantics = [#tpu.dimension_semantics<parallel>, #tpu.dimension_semantics<parallel>, #tpu.dimension_semantics<arbitrary>], iteration_bounds = array<i64: 1, 1, 1>, scalar_prefetch = 0 : i64, scratch_operands = 0 : i64, tpu.core_type = #tpu.core_type<tc>, window_params = [{transform_indices = @transform_0, window_bounds = array<i64: 16, 128>}, {transform_indices = @transform_1, window_bounds = array<i64: 16, 128>}, {transform_indices = @transform_2, window_bounds = array<i64: 128, 32>}, {transform_indices = @transform_3, window_bounds = array<i64: 128, 32>}, {transform_indices = @transform_4, window_bounds = array<i64: 1, 32>}, {transform_indices = @transform_5, window_bounds = array<i64: 1, 32>}, {transform_indices = @transform_6, window_bounds = array<i64: 16, 32>}, {transform_indices = @transform_7, window_bounds = array<i64: 16, 32>}, {transform_indices = @transform_8, window_bounds = array<i64: 16, 32>}, {transform_indices = @transform_9, window_bounds = array<i64: 16, 32>}]} {
    %c0 = arith.constant 0 : index
    %c0_0 = arith.constant 0 : index
    %0 = vector.load %arg3[%c0, %c0_0] : memref<16x128xbf16, #tpu.memory_space<vmem>>, vector<16x128xbf16>
    %c0_1 = arith.constant 0 : index
    %c0_2 = arith.constant 0 : index
    %1 = vector.load %arg4[%c0_1, %c0_2] : memref<16x128xbf16, #tpu.memory_space<vmem>>, vector<16x128xbf16>
    %c0_3 = arith.constant 0 : index
    %c0_4 = arith.constant 0 : index
    %2 = vector.load %arg5[%c0_3, %c0_4] : memref<128x32xbf16, #tpu.memory_space<vmem>>, vector<128x32xbf16>
    %c0_5 = arith.constant 0 : index
    %c0_6 = arith.constant 0 : index
    %3 = vector.load %arg6[%c0_5, %c0_6] : memref<128x32xbf16, #tpu.memory_space<vmem>>, vector<128x32xbf16>
    %cst = arith.constant dense<0.000000e+00> : vector<16x32xf32>
    %4 = tpu.matmul %0, %2, %cst {dimension_numbers = #tpu.dot_dimension_numbers<[1], [0], [0], [1], [0, 0, 1, 1], [], []>} : vector<16x128xbf16>, vector<128x32xbf16>, vector<16x32xf32> -> vector<16x32xf32>
    %cst_7 = arith.constant dense<0.000000e+00> : vector<16x32xf32>
    %5 = tpu.matmul %1, %3, %cst_7 {dimension_numbers = #tpu.dot_dimension_numbers<[1], [0], [0], [1], [0, 0, 1, 1], [], []>} : vector<16x128xbf16>, vector<128x32xbf16>, vector<16x32xf32> -> vector<16x32xf32>
    %cst_8 = arith.constant dense<0.000000e+00> : vector<16x32xf32>
    %6 = tpu.matmul %0, %3, %cst_8 {dimension_numbers = #tpu.dot_dimension_numbers<[1], [0], [0], [1], [0, 0, 1, 1], [], []>} : vector<16x128xbf16>, vector<128x32xbf16>, vector<16x32xf32> -> vector<16x32xf32>
    %cst_9 = arith.constant dense<0.000000e+00> : vector<16x32xf32>
    %7 = tpu.matmul %1, %2, %cst_9 {dimension_numbers = #tpu.dot_dimension_numbers<[1], [0], [0], [1], [0, 0, 1, 1], [], []>} : vector<16x128xbf16>, vector<128x32xbf16>, vector<16x32xf32> -> vector<16x32xf32>
    %8 = arith.subf %4, %5 : vector<16x32xf32>
    %9 = arith.addf %6, %7 : vector<16x32xf32>
    %c0_10 = arith.constant 0 : index
    %c0_11 = arith.constant 0 : index
    %10 = vector.load %arg7[%c0_10, %c0_11] : memref<1x32xf32, #tpu.memory_space<vmem>>, vector<1x32xf32>
    %11 = vector.broadcast %10 : vector<1x32xf32> to vector<16x32xf32>
    %12 = arith.addf %8, %11 : vector<16x32xf32>
    %c0_12 = arith.constant 0 : index
    %c0_13 = arith.constant 0 : index
    %13 = vector.load %arg8[%c0_12, %c0_13] : memref<1x32xf32, #tpu.memory_space<vmem>>, vector<1x32xf32>
    %14 = vector.broadcast %13 : vector<1x32xf32> to vector<16x32xf32>
    %15 = arith.addf %9, %14 : vector<16x32xf32>
    %c0_14 = arith.constant 0 : index
    %c0_15 = arith.constant 0 : index
    %16 = vector.load %arg9[%c0_14, %c0_15] : memref<16x32xf32, #tpu.memory_space<vmem>>, vector<16x32xf32>
    %17 = arith.addf %12, %16 : vector<16x32xf32>
    %c0_16 = arith.constant 0 : index
    %c0_17 = arith.constant 0 : index
    %18 = vector.load %arg10[%c0_16, %c0_17] : memref<16x32xf32, #tpu.memory_space<vmem>>, vector<16x32xf32>
    %19 = arith.addf %15, %18 : vector<16x32xf32>
    %c0_18 = arith.constant 0 : index
    %c0_19 = arith.constant 0 : index
    %20 = vector.load %arg11[%c0_18, %c0_19] : memref<16x32xf32, #tpu.memory_space<vmem>>, vector<16x32xf32>
    tpu.vector_store %arg11[%c0_18, %c0_19], %17 {strides = array<i32>} : memref<16x32xf32, #tpu.memory_space<vmem>>, vector<16x32xf32>,
    %c0_20 = arith.constant 0 : index
    %c0_21 = arith.constant 0 : index
    %21 = vector.load %arg12[%c0_20, %c0_21] : memref<16x32xf32, #tpu.memory_space<vmem>>, vector<16x32xf32>
    tpu.vector_store %arg12[%c0_20, %c0_21], %19 {strides = array<i32>} : memref<16x32xf32, #tpu.memory_space<vmem>>, vector<16x32xf32>,
    return
  }
  func.func @transform_0(%arg0: i32, %arg1: i32, %arg2: i32) -> (i32, i32) {
    %c0_i32 = arith.constant 0 : i32
    return %arg1, %arg2 : i32, i32
  }
  func.func @transform_1(%arg0: i32, %arg1: i32, %arg2: i32) -> (i32, i32) {
    %c0_i32 = arith.constant 0 : i32
    return %arg1, %arg2 : i32, i32
  }
  func.func @transform_2(%arg0: i32, %arg1: i32, %arg2: i32) -> (i32, i32) {
    %c0_i32 = arith.constant 0 : i32
    return %arg2, %arg0 : i32, i32
  }
  func.func @transform_3(%arg0: i32, %arg1: i32, %arg2: i32) -> (i32, i32) {
    %c0_i32 = arith.constant 0 : i32
    return %arg2, %arg0 : i32, i32
  }
  func.func @transform_4(%arg0: i32, %arg1: i32, %arg2: i32) -> (i32, i32) {
    %c0_i32 = arith.constant 0 : i32
    %c0_i32_0 = arith.constant 0 : i32
    return %c0_i32, %arg0 : i32, i32
  }
  func.func @transform_5(%arg0: i32, %arg1: i32, %arg2: i32) -> (i32, i32) {
    %c0_i32 = arith.constant 0 : i32
    %c0_i32_0 = arith.constant 0 : i32
    return %c0_i32, %arg0 : i32, i32
  }
  func.func @transform_6(%arg0: i32, %arg1: i32, %arg2: i32) -> (i32, i32) {
    %c0_i32 = arith.constant 0 : i32
    return %arg1, %arg0 : i32, i32
  }
  func.func @transform_7(%arg0: i32, %arg1: i32, %arg2: i32) -> (i32, i32) {
    %c0_i32 = arith.constant 0 : i32
    return %arg1, %arg0 : i32, i32
  }
  func.func @transform_8(%arg0: i32, %arg1: i32, %arg2: i32) -> (i32, i32) {
    %c0_i32 = arith.constant 0 : i32
    return %arg1, %arg0 : i32, i32
  }
  func.func @transform_9(%arg0: i32, %arg1: i32, %arg2: i32) -> (i32, i32) {
    %c0_i32 = arith.constant 0 : i32
    return %arg1, %arg0 : i32, i32
  }
}

module attributes {stable_mosaic.version = 11 : i64} {
  func.func @_ln_cdense_kernel(%arg0: i32, %arg1: i32, %arg2: i32, %arg3: memref<16x128xbf16, #tpu.memory_space<vmem>>, %arg4: memref<16x128xbf16, #tpu.memory_space<vmem>>, %arg5: memref<128x32xbf16, #tpu.memory_space<vmem>>, %arg6: memref<128x32xbf16, #tpu.memory_space<vmem>>, %arg7: memref<1x32xf32, #tpu.memory_space<vmem>>, %arg8: memref<1x32xf32, #tpu.memory_space<vmem>>, %arg9: memref<16x32xf32, #tpu.memory_space<vmem>>, %arg10: memref<16x32xf32, #tpu.memory_space<vmem>>, %arg11: memref<16x32xf32, #tpu.memory_space<vmem>>, %arg12: memref<16x32xf32, #tpu.memory_space<vmem>>) attributes {dimension_semantics = [#tpu.dimension_semantics<parallel>, #tpu.dimension_semantics<parallel>, #tpu.dimension_semantics<arbitrary>], iteration_bounds = array<i64: 1, 1, 1>, scalar_prefetch = 0 : i64, scratch_operands = 0 : i64, tpu.core_type = #tpu.core_type<tc>, window_params = [{transform_indices = @transform_0, window_bounds = array<i64: 16, 128>}, {transform_indices = @transform_1, window_bounds = array<i64: 16, 128>}, {transform_indices = @transform_2, window_bounds = array<i64: 128, 32>}, {transform_indices = @transform_3, window_bounds = array<i64: 128, 32>}, {transform_indices = @transform_4, window_bounds = array<i64: 1, 32>}, {transform_indices = @transform_5, window_bounds = array<i64: 1, 32>}, {transform_indices = @transform_6, window_bounds = array<i64: 16, 32>}, {transform_indices = @transform_7, window_bounds = array<i64: 16, 32>}, {transform_indices = @transform_8, window_bounds = array<i64: 16, 32>}, {transform_indices = @transform_9, window_bounds = array<i64: 16, 32>}]} {
    %c0 = arith.constant 0 : index
    %c0_0 = arith.constant 0 : index
    %0 = vector.load %arg3[%c0, %c0_0] : memref<16x128xbf16, #tpu.memory_space<vmem>>, vector<16x128xbf16>
    %c0_1 = arith.constant 0 : index
    %c0_2 = arith.constant 0 : index
    %1 = vector.load %arg4[%c0_1, %c0_2] : memref<16x128xbf16, #tpu.memory_space<vmem>>, vector<16x128xbf16>
    %c0_3 = arith.constant 0 : index
    %c0_4 = arith.constant 0 : index
    %2 = vector.load %arg5[%c0_3, %c0_4] : memref<128x32xbf16, #tpu.memory_space<vmem>>, vector<128x32xbf16>
    %c0_5 = arith.constant 0 : index
    %c0_6 = arith.constant 0 : index
    %3 = vector.load %arg6[%c0_5, %c0_6] : memref<128x32xbf16, #tpu.memory_space<vmem>>, vector<128x32xbf16>
    %cst = arith.constant dense<0.000000e+00> : vector<16x32xf32>
    %4 = tpu.matmul %0, %2, %cst {dimension_numbers = #tpu.dot_dimension_numbers<[1], [0], [0], [1], [0, 0, 1, 1], [], []>} : vector<16x128xbf16>, vector<128x32xbf16>, vector<16x32xf32> -> vector<16x32xf32>
    %cst_7 = arith.constant dense<0.000000e+00> : vector<16x32xf32>
    %5 = tpu.matmul %1, %3, %cst_7 {dimension_numbers = #tpu.dot_dimension_numbers<[1], [0], [0], [1], [0, 0, 1, 1], [], []>} : vector<16x128xbf16>, vector<128x32xbf16>, vector<16x32xf32> -> vector<16x32xf32>
    %cst_8 = arith.constant dense<0.000000e+00> : vector<16x32xf32>
    %6 = tpu.matmul %0, %3, %cst_8 {dimension_numbers = #tpu.dot_dimension_numbers<[1], [0], [0], [1], [0, 0, 1, 1], [], []>} : vector<16x128xbf16>, vector<128x32xbf16>, vector<16x32xf32> -> vector<16x32xf32>
    %cst_9 = arith.constant dense<0.000000e+00> : vector<16x32xf32>
    %7 = tpu.matmul %1, %2, %cst_9 {dimension_numbers = #tpu.dot_dimension_numbers<[1], [0], [0], [1], [0, 0, 1, 1], [], []>} : vector<16x128xbf16>, vector<128x32xbf16>, vector<16x32xf32> -> vector<16x32xf32>
    %8 = arith.subf %4, %5 : vector<16x32xf32>
    %9 = arith.addf %6, %7 : vector<16x32xf32>
    %c0_10 = arith.constant 0 : index
    %c0_11 = arith.constant 0 : index
    %10 = vector.load %arg7[%c0_10, %c0_11] : memref<1x32xf32, #tpu.memory_space<vmem>>, vector<1x32xf32>
    %11 = vector.broadcast %10 : vector<1x32xf32> to vector<16x32xf32>
    %12 = arith.addf %8, %11 : vector<16x32xf32>
    %c0_12 = arith.constant 0 : index
    %c0_13 = arith.constant 0 : index
    %13 = vector.load %arg8[%c0_12, %c0_13] : memref<1x32xf32, #tpu.memory_space<vmem>>, vector<1x32xf32>
    %14 = vector.broadcast %13 : vector<1x32xf32> to vector<16x32xf32>
    %15 = arith.addf %9, %14 : vector<16x32xf32>
    %c0_14 = arith.constant 0 : index
    %c0_15 = arith.constant 0 : index
    %16 = vector.load %arg9[%c0_14, %c0_15] : memref<16x32xf32, #tpu.memory_space<vmem>>, vector<16x32xf32>
    %17 = arith.addf %12, %16 : vector<16x32xf32>
    %c0_16 = arith.constant 0 : index
    %c0_17 = arith.constant 0 : index
    %18 = vector.load %arg10[%c0_16, %c0_17] : memref<16x32xf32, #tpu.memory_space<vmem>>, vector<16x32xf32>
    %19 = arith.addf %15, %18 : vector<16x32xf32>
    %c0_18 = arith.constant 0 : index
    %c0_19 = arith.constant 0 : index
    %20 = vector.load %arg11[%c0_18, %c0_19] : memref<16x32xf32, #tpu.memory_space<vmem>>, vector<16x32xf32>
    tpu.vector_store %arg11[%c0_18, %c0_19], %17 {strides = array<i32>} : memref<16x32xf32, #tpu.memory_space<vmem>>, vector<16x32xf32>,
    %c0_20 = arith.constant 0 : index
    %c0_21 = arith.constant 0 : index
    %21 = vector.load %arg12[%c0_20, %c0_21] : memref<16x32xf32, #tpu.memory_space<vmem>>, vector<16x32xf32>
    tpu.vector_store %arg12[%c0_20, %c0_21], %19 {strides = array<i32>} : memref<16x32xf32, #tpu.memory_space<vmem>>, vector<16x32xf32>,
    return
  }
  func.func @transform_0(%arg0: i32, %arg1: i32, %arg2: i32) -> (i32, i32) {
    %c0_i32 = arith.constant 0 : i32
    return %arg1, %arg2 : i32, i32
  }
  func.func @transform_1(%arg0: i32, %arg1: i32, %arg2: i32) -> (i32, i32) {
    %c0_i32 = arith.constant 0 : i32
    return %arg1, %arg2 : i32, i32
  }
  func.func @transform_2(%arg0: i32, %arg1: i32, %arg2: i32) -> (i32, i32) {
    %c0_i32 = arith.constant 0 : i32
    return %arg2, %arg0 : i32, i32
  }
  func.func @transform_3(%arg0: i32, %arg1: i32, %arg2: i32) -> (i32, i32) {
    %c0_i32 = arith.constant 0 : i32
    return %arg2, %arg0 : i32, i32
  }
  func.func @transform_4(%arg0: i32, %arg1: i32, %arg2: i32) -> (i32, i32) {
    %c0_i32 = arith.constant 0 : i32
    %c0_i32_0 = arith.constant 0 : i32
    return %c0_i32, %arg0 : i32, i32
  }
  func.func @transform_5(%arg0: i32, %arg1: i32, %arg2: i32) -> (i32, i32) {
    %c0_i32 = arith.constant 0 : i32
    %c0_i32_0 = arith.constant 0 : i32
    return %c0_i32, %arg0 : i32, i32
  }
  func.func @transform_6(%arg0: i32, %arg1: i32, %arg2: i32) -> (i32, i32) {
    %c0_i32 = arith.constant 0 : i32
    return %arg1, %arg0 : i32, i32
  }
  func.func @transform_7(%arg0: i32, %arg1: i32, %arg2: i32) -> (i32, i32) {
    %c0_i32 = arith.constant 0 : i32
    return %arg1, %arg0 : i32, i32
  }
  func.func @transform_8(%arg0: i32, %arg1: i32, %arg2: i32) -> (i32, i32) {
    %c0_i32 = arith.constant 0 : i32
    return %arg1, %arg0 : i32, i32
  }
  func.func @transform_9(%arg0: i32, %arg1: i32, %arg2: i32) -> (i32, i32) {
    %c0_i32 = arith.constant 0 : i32
    return %arg1, %arg0 : i32, i32
  }
}

</mosaic_0001>

<llo_original>
// kernel: bert_polar_forward.10
$region0: #{bert_polar_forward.10}
  #allocation0 [shape = 'u32[]', space=smem, size = 0x4, offset = 0x4, fixed_abs, tag = 'smem constant byte address 0x4 - core index']
  #allocation1 [shape = 'u32[144,128]{1,0:T(1,128)}', space=vmem, size = 0x12000, scoped, tag = 'internal scratch']
  %s0 = inlined_call_operand.vmem [shape: f32[16,32], index: 0, kind: input, shape index: {}]
  %s1 = inlined_call_operand.vmem [shape: f32[16,32], index: 1, kind: input, shape index: {}]
  %s2 = inlined_call_operand.vmem [shape: f32[1,32], index: 2, kind: input, shape index: {}]
  %s3 = inlined_call_operand.vmem [shape: f32[1,32], index: 3, kind: input, shape index: {}]
  %s4 = inlined_call_operand.vmem [shape: f32[1,32], index: 4, kind: input, shape index: {}]
  %s5 = inlined_call_operand.vmem [shape: f32[1,32], index: 5, kind: input, shape index: {}]
  %s6 = inlined_call_operand.vmem [shape: bf16[32,96], index: 6, kind: input, shape index: {}]
  %s7 = inlined_call_operand.vmem [shape: bf16[32,96], index: 7, kind: input, shape index: {}]
  %s8 = inlined_call_operand.vmem [shape: f32[1,96], index: 8, kind: input, shape index: {}]
  %s9 = inlined_call_operand.vmem [shape: f32[1,96], index: 9, kind: input, shape index: {}]
  %s10 = inlined_call_operand.vmem [shape: bf16[16,96], index: 10, kind: output, shape index: {0}]
  %s11 = inlined_call_operand.vmem [shape: bf16[16,96], index: 11, kind: output, shape index: {1}]
  %12 = xla_tuple %s10, %s11
  %s13 = sld [smem:[#allocation0]]
  $region58: #{bert_polar_forward.10} parent=0
    _
  %s15 = ssub.s32 1, %s13
  %s16 = scalar_select 0, %s15, %s13
  // Predicated region
  $region2: #{bert_polar_forward.10} parent=0 // pred_check
    _
  $region3: #{bert_polar_forward.10} parent=0 // pred_check_branch
    %18 = sbr.rel (0) target = $region5
  $region4: #{bert_polar_forward.10} parent=0 // pred_region
    _
  $region5: #{bert_polar_forward.10} parent=0 // pred_fallthru
    _
  // Predicated region
  $region6: #{bert_polar_forward.10} parent=0 // pred_check
    _
  $region7: #{bert_polar_forward.10} parent=0 // pred_check_branch
    %20 = sbr.rel (0) target = $region9
  $region8: #{bert_polar_forward.10} parent=0 // pred_region
    _
  $region9: #{bert_polar_forward.10} parent=0 // pred_fallthru
    _
  // Predicated region
  $region10: #{bert_polar_forward.10} parent=0 // pred_check
    _
  $region11: #{bert_polar_forward.10} parent=0 // pred_check_branch
    %22 = sbr.rel (0) target = $region13
  $region12: #{bert_polar_forward.10} parent=0 // pred_region
    _
  $region13: #{bert_polar_forward.10} parent=0 // pred_fallthru
    _
  // Predicated region
  $region14: #{bert_polar_forward.10} parent=0 // pred_check
    _
  $region15: #{bert_polar_forward.10} parent=0 // pred_check_branch
    %24 = sbr.rel (0) target = $region17
  $region16: #{bert_polar_forward.10} parent=0 // pred_region
    _
  $region17: #{bert_polar_forward.10} parent=0 // pred_fallthru
    _
  // Predicated region
  $region18: #{bert_polar_forward.10} parent=0 // pred_check
    _
  $region19: #{bert_polar_forward.10} parent=0 // pred_check_branch
    %26 = sbr.rel (0) target = $region21
  $region20: #{bert_polar_forward.10} parent=0 // pred_region
    _
  $region21: #{bert_polar_forward.10} parent=0 // pred_fallthru
    _
  // Predicated region
  $region22: #{bert_polar_forward.10} parent=0 // pred_check
    _
  $region23: #{bert_polar_forward.10} parent=0 // pred_check_branch
    %28 = sbr.rel (0) target = $region25
  $region24: #{bert_polar_forward.10} parent=0 // pred_region
    _
  $region25: #{bert_polar_forward.10} parent=0 // pred_fallthru
    _
  // Predicated region
  $region26: #{bert_polar_forward.10} parent=0 // pred_check
    _
  $region27: #{bert_polar_forward.10} parent=0 // pred_check_branch
    %30 = sbr.rel (0) target = $region29
  $region28: #{bert_polar_forward.10} parent=0 // pred_region
    _
  $region29: #{bert_polar_forward.10} parent=0 // pred_fallthru
    _
  // Predicated region
  $region30: #{bert_polar_forward.10} parent=0 // pred_check
    _
  $region31: #{bert_polar_forward.10} parent=0 // pred_check_branch
    %32 = sbr.rel (0) target = $region33
  $region32: #{bert_polar_forward.10} parent=0 // pred_region
    _
  $region33: #{bert_polar_forward.10} parent=0 // pred_fallthru
    _
  // Predicated region
  $region34: #{bert_polar_forward.10} parent=0 // pred_check
    _
  $region35: #{bert_polar_forward.10} parent=0 // pred_check_branch
    %34 = sbr.rel (0) target = $region37
  $region36: #{bert_polar_forward.10} parent=0 // pred_region
    _
  $region37: #{bert_polar_forward.10} parent=0 // pred_fallthru
    _
  // Predicated region
  $region38: #{bert_polar_forward.10} parent=0 // pred_check
    _
  $region39: #{bert_polar_forward.10} parent=0 // pred_check_branch
    %36 = sbr.rel (0) target = $region41
  $region40: #{bert_polar_forward.10} parent=0 // pred_region
    _
  $region41: #{bert_polar_forward.10} parent=0 // pred_fallthru
    _
  %v38 = vld [vmem:[%s0] sm:$0xff]
  %v39 = vld [vmem:[%s0 + $0x8] sm:$0xff]
  %v40 = vld [vmem:[%s1] sm:$0xff]
  %v41 = vld [vmem:[%s1 + $0x8] sm:$0xff]
  %v42 = vld [vmem:[%s2] sm:$0x1]
  %v43 = vld [vmem:[%s3] sm:$0x1]
  %vm44 = vcmask 261120
  %v45 = vsel %vm44, %v38, 0.0
  %46 = vadd.xlane.f32.xlu0 %v45
  %v47 = vpop.xlane.xlu0 %46
  %v48 = vsel %vm44, %v39, 0.0
  %49 = vadd.xlane.f32.xlu0 %v48
  %v50 = vpop.xlane.xlu0 %49
  %v51 = vrcp.pop 32.0
  %v52 = vmul.f32 %v47, %v51
  %v53 = vmul.f32 %v50, %v51
  %v54 = vsub.f32 %v38, %v52
  %v55 = vsub.f32 %v39, %v53
  %v56 = vmul.f32 %v54, %v54
  %v57 = vmul.f32 %v55, %v55
  %v58 = vsel %vm44, %v56, 0.0
  %59 = vadd.xlane.f32.xlu0 %v58
  %v60 = vpop.xlane.xlu0 %59
  %v61 = vsel %vm44, %v57, 0.0
  %62 = vadd.xlane.f32.xlu0 %v61
  %v63 = vpop.xlane.xlu0 %62
  %v64 = vmul.f32 %v60, %v51
  %v65 = vmul.f32 %v63, %v51
  %v66 = vadd.f32 %v64, 1e-05
  %v67 = vadd.f32 %v65, 1e-05
  %v68 = vrsqrt.pop %v66
  %v69 = vrsqrt.pop %v67
  %v70 = vmul.f32 %v54, %v68
  %v71 = vmul.f32 %v55, %v69
  %v73 = vlaneseq
  %v74 = vshrl.u32 %v73, 7
  %v75 = vsub.s32 0, %v74
  %v76 = vrot.slane %v42, %v75
  %v78 = vmul.f32 %v70, %v76
  %v79 = vmul.f32 %v71, %v76
  %v81 = vlaneseq
  %v82 = vshrl.u32 %v81, 7
  %v83 = vsub.s32 0, %v82
  %v84 = vrot.slane %v43, %v83
  %v86 = vadd.f32 %v78, %v84
  %v87 = vadd.f32 %v79, %v84
  %v88 = vld [vmem:[%s4] sm:$0x1]
  %v89 = vld [vmem:[%s5] sm:$0x1]
  %v90 = vsel %vm44, %v40, 0.0
  %91 = vadd.xlane.f32.xlu0 %v90
  %v92 = vpop.xlane.xlu0 %91
  %v93 = vsel %vm44, %v41, 0.0
  %94 = vadd.xlane.f32.xlu0 %v93
  %v95 = vpop.xlane.xlu0 %94
  %v96 = vmul.f32 %v92, %v51
  %v97 = vmul.f32 %v95, %v51
  %v98 = vsub.f32 %v40, %v96
  %v99 = vsub.f32 %v41, %v97
  %v100 = vmul.f32 %v98, %v98
  %v101 = vmul.f32 %v99, %v99
  %v102 = vsel %vm44, %v100, 0.0
  %103 = vadd.xlane.f32.xlu0 %v102
  %v104 = vpop.xlane.xlu0 %103
  %v105 = vsel %vm44, %v101, 0.0
  %106 = vadd.xlane.f32.xlu0 %v105
  %v107 = vpop.xlane.xlu0 %106
  %v108 = vmul.f32 %v104, %v51
  %v109 = vmul.f32 %v107, %v51
  %v110 = vadd.f32 %v108, 1e-05
  %v111 = vadd.f32 %v109, 1e-05
  %v112 = vrsqrt.pop %v110
  %v113 = vrsqrt.pop %v111
  %v114 = vmul.f32 %v98, %v112
  %v115 = vmul.f32 %v99, %v113
  %v117 = vlaneseq
  %v118 = vshrl.u32 %v117, 7
  %v119 = vsub.s32 0, %v118
  %v120 = vrot.slane %v88, %v119
  %v122 = vmul.f32 %v114, %v120
  %v123 = vmul.f32 %v115, %v120
  %v125 = vlaneseq
  %v126 = vshrl.u32 %v125, 7
  %v127 = vsub.s32 0, %v126
  %v128 = vrot.slane %v89, %v127
  %v130 = vadd.f32 %v122, %v128
  %v131 = vadd.f32 %v123, %v128
  %v132 = vpack.c.bf16 %v87, %v86
  %v133 = vpack.c.bf16 %v131, %v130
  %v134 = vld [vmem:[%s6] sm:$0xf]
  %v135 = vld [vmem:[%s6 + $0x4] sm:$0xf]
  %v136 = vld [vmem:[%s6 + $0x8] sm:$0xf]
  %v137 = vld [vmem:[%s6 + $0xc] sm:$0xf]
  %v138 = vld [vmem:[%s7] sm:$0xf]
  %v139 = vld [vmem:[%s7 + $0x4] sm:$0xf]
  %v140 = vld [vmem:[%s7 + $0x8] sm:$0xf]
  %v141 = vld [vmem:[%s7 + $0xc] sm:$0xf]
  %v146 = vunpack.c.l.b16 %v134
  %v147 = vunpack.c.l.b16 %v135
  %v148 = vunpack.c.l.b16 %v136
  %v149 = vunpack.c.l.b16 %v137
  %v150 = vpack.c.b16 %v147, %v146
  %v151 = vpack.c.b16 %v149, %v148
  %v155 = vsel %vm44, %v132, 0
  %157 = vmatprep.subr.bf16.mxu0 0
  %158 = vmatpush1.bf16.msra.mxu0 %v150
  %159 = vmatprep.subr.bf16.mxu0 0
  %160 = vmatpush1.bf16.msra.mxu0 %v151
  %161 = vmatprep.subr.bf16.mxu0 0
  %162 = vmatpush1.bf16.msra.mxu0 0
  %163 = vmatprep.subr.bf16.mxu0 0
  %164 = vmatpush1.bf16.msra.mxu0 0
  %165 = vmatprep.subr.bf16.mxu0 0
  %166 = vmatpush1.bf16.msra.mxu0 0
  %167 = vmatprep.subr.bf16.mxu0 0
  %168 = vmatpush1.bf16.msra.mxu0 0
  %169 = vmatprep.subr.bf16.mxu0 0
  %170 = vmatpush1.bf16.msra.mxu0 0
  %171 = vmatprep.subr.bf16.mxu0 0
  %172 = vmatpush1.bf16.msra.mxu0 0
  %173 = vmatprep.subr.bf16.mxu0 0
  %174 = vmatpush1.bf16.msra.mxu0 0
  %175 = vmatprep.subr.bf16.mxu0 0
  %176 = vmatpush1.bf16.msra.mxu0 0
  %177 = vmatprep.subr.bf16.mxu0 0
  %178 = vmatpush1.bf16.msra.mxu0 0
  %179 = vmatprep.subr.bf16.mxu0 0
  %180 = vmatpush1.bf16.msra.mxu0 0
  %181 = vmatprep.subr.bf16.mxu0 0
  %182 = vmatpush1.bf16.msra.mxu0 0
  %183 = vmatprep.subr.bf16.mxu0 0
  %184 = vmatpush1.bf16.msra.mxu0 0
  %185 = vmatprep.subr.bf16.mxu0 0
  %186 = vmatpush1.bf16.msra.mxu0 0
  %187 = vmatprep.subr.bf16.mxu0 0
  %188 = vmatpush1.bf16.msra.mxu0 0
  %189 = vmatprep.mubr.bf16.mxu0 0
  %190 = vmatmul.mubr.bf16.gmra.mrb[0].mxu0 %v155
  %v191 = vpop.f32.mrb[0].mxu0
  %v192 = vadd.f32 0.0, %v191
  %v193 = vpop.f32.mrb[0].mxu0
  %v194 = vpop.f32.mrb[0].mxu0
  %v195 = vadd.f32 0.0, %v194
  %v196 = vpop.f32.mrb[0].mxu0
  %197 = vdwg.mxu0
  %v202 = vunpack.c.l.b16 %v138
  %v203 = vunpack.c.l.b16 %v139
  %v204 = vunpack.c.l.b16 %v140
  %v205 = vunpack.c.l.b16 %v141
  %v206 = vpack.c.b16 %v203, %v202
  %v207 = vpack.c.b16 %v205, %v204
  %v211 = vsel %vm44, %v133, 0
  %213 = vmatprep.subr.bf16.mxu0 0
  %214 = vmatpush1.bf16.msra.mxu0 %v206
  %215 = vmatprep.subr.bf16.mxu0 0
  %216 = vmatpush1.bf16.msra.mxu0 %v207
  %217 = vmatprep.subr.bf16.mxu0 0
  %218 = vmatpush1.bf16.msra.mxu0 0
  %219 = vmatprep.subr.bf16.mxu0 0
  %220 = vmatpush1.bf16.msra.mxu0 0
  %221 = vmatprep.subr.bf16.mxu0 0
  %222 = vmatpush1.bf16.msra.mxu0 0
  %223 = vmatprep.subr.bf16.mxu0 0
  %224 = vmatpush1.bf16.msra.mxu0 0
  %225 = vmatprep.subr.bf16.mxu0 0
  %226 = vmatpush1.bf16.msra.mxu0 0
  %227 = vmatprep.subr.bf16.mxu0 0
  %228 = vmatpush1.bf16.msra.mxu0 0
  %229 = vmatprep.subr.bf16.mxu0 0
  %230 = vmatpush1.bf16.msra.mxu0 0
  %231 = vmatprep.subr.bf16.mxu0 0
  %232 = vmatpush1.bf16.msra.mxu0 0
  %233 = vmatprep.subr.bf16.mxu0 0
  %234 = vmatpush1.bf16.msra.mxu0 0
  %235 = vmatprep.subr.bf16.mxu0 0
  %236 = vmatpush1.bf16.msra.mxu0 0
  %237 = vmatprep.subr.bf16.mxu0 0
  %238 = vmatpush1.bf16.msra.mxu0 0
  %239 = vmatprep.subr.bf16.mxu0 0
  %240 = vmatpush1.bf16.msra.mxu0 0
  %241 = vmatprep.subr.bf16.mxu0 0
  %242 = vmatpush1.bf16.msra.mxu0 0
  %243 = vmatprep.subr.bf16.mxu0 0
  %244 = vmatpush1.bf16.msra.mxu0 0
  %245 = vmatprep.mubr.bf16.mxu0 0
  %246 = vmatmul.mubr.bf16.gmra.mrb[0].mxu0 %v211
  %v247 = vpop.f32.mrb[0].mxu0
  %v248 = vadd.f32 0.0, %v247
  %v249 = vpop.f32.mrb[0].mxu0
  %v250 = vpop.f32.mrb[0].mxu0
  %v251 = vadd.f32 0.0, %v250
  %v252 = vpop.f32.mrb[0].mxu0
  %253 = vdwg.mxu0
  %254 = vmatprep.subr.bf16.mxu0 0
  %255 = vmatpush1.bf16.msra.mxu0 %v150
  %256 = vmatprep.subr.bf16.mxu0 0
  %257 = vmatpush1.bf16.msra.mxu0 %v151
  %258 = vmatprep.subr.bf16.mxu0 0
  %259 = vmatpush1.bf16.msra.mxu0 0
  %260 = vmatprep.subr.bf16.mxu0 0
  %261 = vmatpush1.bf16.msra.mxu0 0
  %262 = vmatprep.subr.bf16.mxu0 0
  %263 = vmatpush1.bf16.msra.mxu0 0
  %264 = vmatprep.subr.bf16.mxu0 0
  %265 = vmatpush1.bf16.msra.mxu0 0
  %266 = vmatprep.subr.bf16.mxu0 0
  %267 = vmatpush1.bf16.msra.mxu0 0
  %268 = vmatprep.subr.bf16.mxu0 0
  %269 = vmatpush1.bf16.msra.mxu0 0
  %270 = vmatprep.subr.bf16.mxu0 0
  %271 = vmatpush1.bf16.msra.mxu0 0
  %272 = vmatprep.subr.bf16.mxu0 0
  %273 = vmatpush1.bf16.msra.mxu0 0
  %274 = vmatprep.subr.bf16.mxu0 0
  %275 = vmatpush1.bf16.msra.mxu0 0
  %276 = vmatprep.subr.bf16.mxu0 0
  %277 = vmatpush1.bf16.msra.mxu0 0
  %278 = vmatprep.subr.bf16.mxu0 0
  %279 = vmatpush1.bf16.msra.mxu0 0
  %280 = vmatprep.subr.bf16.mxu0 0
  %281 = vmatpush1.bf16.msra.mxu0 0
  %282 = vmatprep.subr.bf16.mxu0 0
  %283 = vmatpush1.bf16.msra.mxu0 0
  %284 = vmatprep.subr.bf16.mxu0 0
  %285 = vmatpush1.bf16.msra.mxu0 0
  %286 = vmatprep.mubr.bf16.mxu0 0
  %287 = vmatmul.mubr.bf16.gmra.mrb[0].mxu0 %v211
  %v288 = vpop.f32.mrb[0].mxu0
  %v289 = vadd.f32 0.0, %v288
  %v290 = vpop.f32.mrb[0].mxu0
  %v291 = vpop.f32.mrb[0].mxu0
  %v292 = vadd.f32 0.0, %v291
  %v293 = vpop.f32.mrb[0].mxu0
  %294 = vdwg.mxu0
  %v295 = vsub.f32 %v192, %v248
  %v296 = vsub.f32 %v195, %v251
  %297 = vmatprep.subr.bf16.mxu0 0
  %298 = vmatpush1.bf16.msra.mxu0 %v206
  %299 = vmatprep.subr.bf16.mxu0 0
  %300 = vmatpush1.bf16.msra.mxu0 %v207
  %301 = vmatprep.subr.bf16.mxu0 0
  %302 = vmatpush1.bf16.msra.mxu0 0
  %303 = vmatprep.subr.bf16.mxu0 0
  %304 = vmatpush1.bf16.msra.mxu0 0
  %305 = vmatprep.subr.bf16.mxu0 0
  %306 = vmatpush1.bf16.msra.mxu0 0
  %307 = vmatprep.subr.bf16.mxu0 0
  %308 = vmatpush1.bf16.msra.mxu0 0
  %309 = vmatprep.subr.bf16.mxu0 0
  %310 = vmatpush1.bf16.msra.mxu0 0
  %311 = vmatprep.subr.bf16.mxu0 0
  %312 = vmatpush1.bf16.msra.mxu0 0
  %313 = vmatprep.subr.bf16.mxu0 0
  %314 = vmatpush1.bf16.msra.mxu0 0
  %315 = vmatprep.subr.bf16.mxu0 0
  %316 = vmatpush1.bf16.msra.mxu0 0
  %317 = vmatprep.subr.bf16.mxu0 0
  %318 = vmatpush1.bf16.msra.mxu0 0
  %319 = vmatprep.subr.bf16.mxu0 0
  %320 = vmatpush1.bf16.msra.mxu0 0
  %321 = vmatprep.subr.bf16.mxu0 0
  %322 = vmatpush1.bf16.msra.mxu0 0
  %323 = vmatprep.subr.bf16.mxu0 0
  %324 = vmatpush1.bf16.msra.mxu0 0
  %325 = vmatprep.subr.bf16.mxu0 0
  %326 = vmatpush1.bf16.msra.mxu0 0
  %327 = vmatprep.subr.bf16.mxu0 0
  %328 = vmatpush1.bf16.msra.mxu0 0
  %329 = vmatprep.mubr.bf16.mxu0 0
  %330 = vmatmul.mubr.bf16.gmra.mrb[0].mxu0 %v155
  %v331 = vpop.f32.mrb[0].mxu0
  %v332 = vadd.f32 %v289, %v331
  %v333 = vpop.f32.mrb[0].mxu0
  %v334 = vpop.f32.mrb[0].mxu0
  %v335 = vadd.f32 %v292, %v334
  %v336 = vpop.f32.mrb[0].mxu0
  %337 = vdwg.mxu0
  %v338 = vld [vmem:[%s8] sm:$0x1]
  %v340 = vlaneseq
  %v341 = vshrl.u32 %v340, 7
  %v342 = vsub.s32 0, %v341
  %v343 = vrot.slane %v338, %v342
  %v345 = vadd.f32 %v295, %v343
  %v346 = vadd.f32 %v296, %v343
  %v347 = vld [vmem:[%s9] sm:$0x1]
  %v349 = vlaneseq
  %v350 = vshrl.u32 %v349, 7
  %v351 = vsub.s32 0, %v350
  %v352 = vrot.slane %v347, %v351
  %v354 = vadd.f32 %v332, %v352
  %v355 = vadd.f32 %v335, %v352
  %v356 = vpack.c.bf16 %v346, %v345
  %v358 = vunpack.c.l.b16 %v356
  %v359 = vunpack.c.h.b16 %v356
  %v360 = vpack.c.b16 %v358, %v358
  %v361 = vpack.c.b16 %v359, %v359
  %vm364 = vcmask 781312
  %365 = vst.msk [vmem:[%s10] sm:$0xf] %vm364, %v360
  %366 = vst.msk [vmem:[%s10 + $0x4] sm:$0xf] %vm364, %v361
  %v367 = vpack.c.bf16 %v355, %v354
  %v369 = vunpack.c.l.b16 %v367
  %v370 = vunpack.c.h.b16 %v367
  %v371 = vpack.c.b16 %v369, %v369
  %v372 = vpack.c.b16 %v370, %v370
  %375 = vst.msk [vmem:[%s11] sm:$0xf] %vm364, %v371
  %376 = vst.msk [vmem:[%s11 + $0x4] sm:$0xf] %vm364, %v372
  // Predicated region
  $region42: #{bert_polar_forward.10} parent=0 // pred_check
    _
  $region43: #{bert_polar_forward.10} parent=0 // pred_check_branch
    %378 = sbr.rel (0) target = $region45
  $region44: #{bert_polar_forward.10} parent=0 // pred_region
    _
  $region45: #{bert_polar_forward.10} parent=0 // pred_fallthru
    _
  // Predicated region
  $region46: #{bert_polar_forward.10} parent=0 // pred_check
    _
  $region47: #{bert_polar_forward.10} parent=0 // pred_check_branch
    %380 = sbr.rel (0) target = $region49
  $region48: #{bert_polar_forward.10} parent=0 // pred_region
    _
  $region49: #{bert_polar_forward.10} parent=0 // pred_fallthru
    _
  // Predicated region
  $region50: #{bert_polar_forward.10} parent=0 // pred_check
    _
  $region51: #{bert_polar_forward.10} parent=0 // pred_check_branch
    %382 = sbr.rel (0) target = $region53
  $region52: #{bert_polar_forward.10} parent=0 // pred_region
    _
  $region53: #{bert_polar_forward.10} parent=0 // pred_fallthru
    _
  // Predicated region
  $region54: #{bert_polar_forward.10} parent=0 // pred_check
    _
  $region55: #{bert_polar_forward.10} parent=0 // pred_check_branch
    %384 = sbr.rel (0) target = $region57
  $region56: #{bert_polar_forward.10} parent=0 // pred_region
    _
  $region57: #{bert_polar_forward.10} parent=0 // pred_fallthru
    _

// kernel: bert_polar_forward.12
$region0: #{bert_polar_forward.12}
  #allocation0 [shape = 'u32[]', space=smem, size = 0x4, offset = 0x4, fixed_abs, tag = 'smem constant byte address 0x4 - core index']
  #allocation1 [shape = 'u32[144,128]{1,0:T(1,128)}', space=vmem, size = 0x12000, scoped, tag = 'internal scratch']
  %s0 = inlined_call_operand.vmem [shape: bf16[16,32], index: 0, kind: input, shape index: {}]
  %s1 = inlined_call_operand.vmem [shape: bf16[16,32], index: 1, kind: input, shape index: {}]
  %s2 = inlined_call_operand.vmem [shape: bf16[32,32], index: 2, kind: input, shape index: {}]
  %s3 = inlined_call_operand.vmem [shape: bf16[32,32], index: 3, kind: input, shape index: {}]
  %s4 = inlined_call_operand.vmem [shape: f32[1,32], index: 4, kind: input, shape index: {}]
  %s5 = inlined_call_operand.vmem [shape: f32[1,32], index: 5, kind: input, shape index: {}]
  %s6 = inlined_call_operand.vmem [shape: f32[16,32], index: 6, kind: input, shape index: {}]
  %s7 = inlined_call_operand.vmem [shape: f32[16,32], index: 7, kind: input, shape index: {}]
  %s8 = inlined_call_operand.vmem [shape: f32[16,32], index: 8, kind: output, shape index: {0}]
  %s9 = inlined_call_operand.vmem [shape: f32[16,32], index: 9, kind: output, shape index: {1}]
  %10 = xla_tuple %s8, %s9
  %s11 = sld [smem:[#allocation0]]
  $region50: #{bert_polar_forward.12} parent=0
    _
  %s13 = ssub.s32 1, %s11
  %s14 = scalar_select 0, %s13, %s11
  // Predicated region
  $region2: #{bert_polar_forward.12} parent=0 // pred_check
    _
  $region3: #{bert_polar_forward.12} parent=0 // pred_check_branch
    %16 = sbr.rel (0) target = $region5
  $region4: #{bert_polar_forward.12} parent=0 // pred_region
    _
  $region5: #{bert_polar_forward.12} parent=0 // pred_fallthru
    _
  // Predicated region
  $region6: #{bert_polar_forward.12} parent=0 // pred_check
    _
  $region7: #{bert_polar_forward.12} parent=0 // pred_check_branch
    %18 = sbr.rel (0) target = $region9
  $region8: #{bert_polar_forward.12} parent=0 // pred_region
    _
  $region9: #{bert_polar_forward.12} parent=0 // pred_fallthru
    _
  // Predicated region
  $region10: #{bert_polar_forward.12} parent=0 // pred_check
    _
  $region11: #{bert_polar_forward.12} parent=0 // pred_check_branch
    %20 = sbr.rel (0) target = $region13
  $region12: #{bert_polar_forward.12} parent=0 // pred_region
    _
  $region13: #{bert_polar_forward.12} parent=0 // pred_fallthru
    _
  // Predicated region
  $region14: #{bert_polar_forward.12} parent=0 // pred_check
    _
  $region15: #{bert_polar_forward.12} parent=0 // pred_check_branch
    %22 = sbr.rel (0) target = $region17
  $region16: #{bert_polar_forward.12} parent=0 // pred_region
    _
  $region17: #{bert_polar_forward.12} parent=0 // pred_fallthru
    _
  // Predicated region
  $region18: #{bert_polar_forward.12} parent=0 // pred_check
    _
  $region19: #{bert_polar_forward.12} parent=0 // pred_check_branch
    %24 = sbr.rel (0) target = $region21
  $region20: #{bert_polar_forward.12} parent=0 // pred_region
    _
  $region21: #{bert_polar_forward.12} parent=0 // pred_fallthru
    _
  // Predicated region
  $region22: #{bert_polar_forward.12} parent=0 // pred_check
    _
  $region23: #{bert_polar_forward.12} parent=0 // pred_check_branch
    %26 = sbr.rel (0) target = $region25
  $region24: #{bert_polar_forward.12} parent=0 // pred_region
    _
  $region25: #{bert_polar_forward.12} parent=0 // pred_fallthru
    _
  // Predicated region
  $region26: #{bert_polar_forward.12} parent=0 // pred_check
    _
  $region27: #{bert_polar_forward.12} parent=0 // pred_check_branch
    %28 = sbr.rel (0) target = $region29
  $region28: #{bert_polar_forward.12} parent=0 // pred_region
    _
  $region29: #{bert_polar_forward.12} parent=0 // pred_fallthru
    _
  // Predicated region
  $region30: #{bert_polar_forward.12} parent=0 // pred_check
    _
  $region31: #{bert_polar_forward.12} parent=0 // pred_check_branch
    %30 = sbr.rel (0) target = $region33
  $region32: #{bert_polar_forward.12} parent=0 // pred_region
    _
  $region33: #{bert_polar_forward.12} parent=0 // pred_fallthru
    _
  %v32 = vld [vmem:[%s0] sm:$0xf]
  %v33 = vld [vmem:[%s0 + $0x4] sm:$0xf]
  %v34 = vld [vmem:[%s1] sm:$0xf]
  %v35 = vld [vmem:[%s1 + $0x4] sm:$0xf]
  %v36 = vld [vmem:[%s2] sm:$0xf]
  %v37 = vld [vmem:[%s2 + $0x4] sm:$0xf]
  %v38 = vld [vmem:[%s2 + $0x8] sm:$0xf]
  %v39 = vld [vmem:[%s2 + $0xc] sm:$0xf]
  %v40 = vld [vmem:[%s3] sm:$0xf]
  %v41 = vld [vmem:[%s3 + $0x4] sm:$0xf]
  %v42 = vld [vmem:[%s3 + $0x8] sm:$0xf]
  %v43 = vld [vmem:[%s3 + $0xc] sm:$0xf]
  %v46 = vunpack.c.l.b16 %v32
  %v47 = vunpack.c.l.b16 %v33
  %v48 = vpack.c.b16 %v47, %v46
  %v53 = vunpack.c.l.b16 %v36
  %v54 = vunpack.c.l.b16 %v37
  %v55 = vunpack.c.l.b16 %v38
  %v56 = vunpack.c.l.b16 %v39
  %v57 = vpack.c.b16 %v54, %v53
  %v58 = vpack.c.b16 %v56, %v55
  %vm61 = vcmask 261120
  %v63 = vsel %vm61, %v48, 0
  %65 = vmatprep.subr.bf16.mxu0 0
  %66 = vmatpush1.bf16.msra.mxu0 %v57
  %67 = vmatprep.subr.bf16.mxu0 0
  %68 = vmatpush1.bf16.msra.mxu0 %v58
  %69 = vmatprep.subr.bf16.mxu0 0
  %70 = vmatpush1.bf16.msra.mxu0 0
  %71 = vmatprep.subr.bf16.mxu0 0
  %72 = vmatpush1.bf16.msra.mxu0 0
  %73 = vmatprep.subr.bf16.mxu0 0
  %74 = vmatpush1.bf16.msra.mxu0 0
  %75 = vmatprep.subr.bf16.mxu0 0
  %76 = vmatpush1.bf16.msra.mxu0 0
  %77 = vmatprep.subr.bf16.mxu0 0
  %78 = vmatpush1.bf16.msra.mxu0 0
  %79 = vmatprep.subr.bf16.mxu0 0
  %80 = vmatpush1.bf16.msra.mxu0 0
  %81 = vmatprep.subr.bf16.mxu0 0
  %82 = vmatpush1.bf16.msra.mxu0 0
  %83 = vmatprep.subr.bf16.mxu0 0
  %84 = vmatpush1.bf16.msra.mxu0 0
  %85 = vmatprep.subr.bf16.mxu0 0
  %86 = vmatpush1.bf16.msra.mxu0 0
  %87 = vmatprep.subr.bf16.mxu0 0
  %88 = vmatpush1.bf16.msra.mxu0 0
  %89 = vmatprep.subr.bf16.mxu0 0
  %90 = vmatpush1.bf16.msra.mxu0 0
  %91 = vmatprep.subr.bf16.mxu0 0
  %92 = vmatpush1.bf16.msra.mxu0 0
  %93 = vmatprep.subr.bf16.mxu0 0
  %94 = vmatpush1.bf16.msra.mxu0 0
  %95 = vmatprep.subr.bf16.mxu0 0
  %96 = vmatpush1.bf16.msra.mxu0 0
  %97 = vmatprep.mubr.bf16.mxu0 0
  %98 = vmatmul.mubr.bf16.gmra.mrb[0].mxu0 %v63
  %v99 = vpop.f32.mrb[0].mxu0
  %v100 = vadd.f32 0.0, %v99
  %v101 = vpop.f32.mrb[0].mxu0
  %v102 = vpop.f32.mrb[0].mxu0
  %v103 = vadd.f32 0.0, %v102
  %v104 = vpop.f32.mrb[0].mxu0
  %105 = vdwg.mxu0
  %v108 = vunpack.c.l.b16 %v34
  %v109 = vunpack.c.l.b16 %v35
  %v110 = vpack.c.b16 %v109, %v108
  %v115 = vunpack.c.l.b16 %v40
  %v116 = vunpack.c.l.b16 %v41
  %v117 = vunpack.c.l.b16 %v42
  %v118 = vunpack.c.l.b16 %v43
  %v119 = vpack.c.b16 %v116, %v115
  %v120 = vpack.c.b16 %v118, %v117
  %v124 = vsel %vm61, %v110, 0
  %126 = vmatprep.subr.bf16.mxu0 0
  %127 = vmatpush1.bf16.msra.mxu0 %v119
  %128 = vmatprep.subr.bf16.mxu0 0
  %129 = vmatpush1.bf16.msra.mxu0 %v120
  %130 = vmatprep.subr.bf16.mxu0 0
  %131 = vmatpush1.bf16.msra.mxu0 0
  %132 = vmatprep.subr.bf16.mxu0 0
  %133 = vmatpush1.bf16.msra.mxu0 0
  %134 = vmatprep.subr.bf16.mxu0 0
  %135 = vmatpush1.bf16.msra.mxu0 0
  %136 = vmatprep.subr.bf16.mxu0 0
  %137 = vmatpush1.bf16.msra.mxu0 0
  %138 = vmatprep.subr.bf16.mxu0 0
  %139 = vmatpush1.bf16.msra.mxu0 0
  %140 = vmatprep.subr.bf16.mxu0 0
  %141 = vmatpush1.bf16.msra.mxu0 0
  %142 = vmatprep.subr.bf16.mxu0 0
  %143 = vmatpush1.bf16.msra.mxu0 0
  %144 = vmatprep.subr.bf16.mxu0 0
  %145 = vmatpush1.bf16.msra.mxu0 0
  %146 = vmatprep.subr.bf16.mxu0 0
  %147 = vmatpush1.bf16.msra.mxu0 0
  %148 = vmatprep.subr.bf16.mxu0 0
  %149 = vmatpush1.bf16.msra.mxu0 0
  %150 = vmatprep.subr.bf16.mxu0 0
  %151 = vmatpush1.bf16.msra.mxu0 0
  %152 = vmatprep.subr.bf16.mxu0 0
  %153 = vmatpush1.bf16.msra.mxu0 0
  %154 = vmatprep.subr.bf16.mxu0 0
  %155 = vmatpush1.bf16.msra.mxu0 0
  %156 = vmatprep.subr.bf16.mxu0 0
  %157 = vmatpush1.bf16.msra.mxu0 0
  %158 = vmatprep.mubr.bf16.mxu0 0
  %159 = vmatmul.mubr.bf16.gmra.mrb[0].mxu0 %v124
  %v160 = vpop.f32.mrb[0].mxu0
  %v161 = vadd.f32 0.0, %v160
  %v162 = vpop.f32.mrb[0].mxu0
  %v163 = vpop.f32.mrb[0].mxu0
  %v164 = vadd.f32 0.0, %v163
  %v165 = vpop.f32.mrb[0].mxu0
  %166 = vdwg.mxu0
  %167 = vmatprep.subr.bf16.mxu0 0
  %168 = vmatpush1.bf16.msra.mxu0 %v57
  %169 = vmatprep.subr.bf16.mxu0 0
  %170 = vmatpush1.bf16.msra.mxu0 %v58
  %171 = vmatprep.subr.bf16.mxu0 0
  %172 = vmatpush1.bf16.msra.mxu0 0
  %173 = vmatprep.subr.bf16.mxu0 0
  %174 = vmatpush1.bf16.msra.mxu0 0
  %175 = vmatprep.subr.bf16.mxu0 0
  %176 = vmatpush1.bf16.msra.mxu0 0
  %177 = vmatprep.subr.bf16.mxu0 0
  %178 = vmatpush1.bf16.msra.mxu0 0
  %179 = vmatprep.subr.bf16.mxu0 0
  %180 = vmatpush1.bf16.msra.mxu0 0
  %181 = vmatprep.subr.bf16.mxu0 0
  %182 = vmatpush1.bf16.msra.mxu0 0
  %183 = vmatprep.subr.bf16.mxu0 0
  %184 = vmatpush1.bf16.msra.mxu0 0
  %185 = vmatprep.subr.bf16.mxu0 0
  %186 = vmatpush1.bf16.msra.mxu0 0
  %187 = vmatprep.subr.bf16.mxu0 0
  %188 = vmatpush1.bf16.msra.mxu0 0
  %189 = vmatprep.subr.bf16.mxu0 0
  %190 = vmatpush1.bf16.msra.mxu0 0
  %191 = vmatprep.subr.bf16.mxu0 0
  %192 = vmatpush1.bf16.msra.mxu0 0
  %193 = vmatprep.subr.bf16.mxu0 0
  %194 = vmatpush1.bf16.msra.mxu0 0
  %195 = vmatprep.subr.bf16.mxu0 0
  %196 = vmatpush1.bf16.msra.mxu0 0
  %197 = vmatprep.subr.bf16.mxu0 0
  %198 = vmatpush1.bf16.msra.mxu0 0
  %199 = vmatprep.mubr.bf16.mxu0 0
  %200 = vmatmul.mubr.bf16.gmra.mrb[0].mxu0 %v124
  %v201 = vpop.f32.mrb[0].mxu0
  %v202 = vadd.f32 0.0, %v201
  %v203 = vpop.f32.mrb[0].mxu0
  %v204 = vpop.f32.mrb[0].mxu0
  %v205 = vadd.f32 0.0, %v204
  %v206 = vpop.f32.mrb[0].mxu0
  %207 = vdwg.mxu0
  %v208 = vsub.f32 %v100, %v161
  %v209 = vsub.f32 %v103, %v164
  %210 = vmatprep.subr.bf16.mxu0 0
  %211 = vmatpush1.bf16.msra.mxu0 %v119
  %212 = vmatprep.subr.bf16.mxu0 0
  %213 = vmatpush1.bf16.msra.mxu0 %v120
  %214 = vmatprep.subr.bf16.mxu0 0
  %215 = vmatpush1.bf16.msra.mxu0 0
  %216 = vmatprep.subr.bf16.mxu0 0
  %217 = vmatpush1.bf16.msra.mxu0 0
  %218 = vmatprep.subr.bf16.mxu0 0
  %219 = vmatpush1.bf16.msra.mxu0 0
  %220 = vmatprep.subr.bf16.mxu0 0
  %221 = vmatpush1.bf16.msra.mxu0 0
  %222 = vmatprep.subr.bf16.mxu0 0
  %223 = vmatpush1.bf16.msra.mxu0 0
  %224 = vmatprep.subr.bf16.mxu0 0
  %225 = vmatpush1.bf16.msra.mxu0 0
  %226 = vmatprep.subr.bf16.mxu0 0
  %227 = vmatpush1.bf16.msra.mxu0 0
  %228 = vmatprep.subr.bf16.mxu0 0
  %229 = vmatpush1.bf16.msra.mxu0 0
  %230 = vmatprep.subr.bf16.mxu0 0
  %231 = vmatpush1.bf16.msra.mxu0 0
  %232 = vmatprep.subr.bf16.mxu0 0
  %233 = vmatpush1.bf16.msra.mxu0 0
  %234 = vmatprep.subr.bf16.mxu0 0
  %235 = vmatpush1.bf16.msra.mxu0 0
  %236 = vmatprep.subr.bf16.mxu0 0
  %237 = vmatpush1.bf16.msra.mxu0 0
  %238 = vmatprep.subr.bf16.mxu0 0
  %239 = vmatpush1.bf16.msra.mxu0 0
  %240 = vmatprep.subr.bf16.mxu0 0
  %241 = vmatpush1.bf16.msra.mxu0 0
  %242 = vmatprep.mubr.bf16.mxu0 0
  %243 = vmatmul.mubr.bf16.gmra.mrb[0].mxu0 %v63
  %v244 = vpop.f32.mrb[0].mxu0
  %v245 = vadd.f32 %v202, %v244
  %v246 = vpop.f32.mrb[0].mxu0
  %v247 = vpop.f32.mrb[0].mxu0
  %v248 = vadd.f32 %v205, %v247
  %v249 = vpop.f32.mrb[0].mxu0
  %250 = vdwg.mxu0
  %v251 = vld [vmem:[%s4] sm:$0x1]
  %v253 = vlaneseq
  %v254 = vshrl.u32 %v253, 7
  %v255 = vsub.s32 0, %v254
  %v256 = vrot.slane %v251, %v255
  %v258 = vadd.f32 %v208, %v256
  %v259 = vadd.f32 %v209, %v256
  %v260 = vld [vmem:[%s5] sm:$0x1]
  %v262 = vlaneseq
  %v263 = vshrl.u32 %v262, 7
  %v264 = vsub.s32 0, %v263
  %v265 = vrot.slane %v260, %v264
  %v267 = vadd.f32 %v245, %v265
  %v268 = vadd.f32 %v248, %v265
  %v269 = vld [vmem:[%s6] sm:$0xff]
  %v270 = vld [vmem:[%s6 + $0x8] sm:$0xff]
  %v271 = vadd.f32 %v258, %v269
  %v272 = vadd.f32 %v259, %v270
  %v273 = vld [vmem:[%s7] sm:$0xff]
  %v274 = vld [vmem:[%s7 + $0x8] sm:$0xff]
  %v275 = vadd.f32 %v267, %v273
  %v276 = vadd.f32 %v268, %v274
  %277 = vst.msk [vmem:[%s8] sm:$0xff] %vm61, %v271
  %278 = vst.msk [vmem:[%s8 + $0x8] sm:$0xff] %vm61, %v272
  %279 = vst.msk [vmem:[%s9] sm:$0xff] %vm61, %v275
  %280 = vst.msk [vmem:[%s9 + $0x8] sm:$0xff] %vm61, %v276
  // Predicated region
  $region34: #{bert_polar_forward.12} parent=0 // pred_check
    _
  $region35: #{bert_polar_forward.12} parent=0 // pred_check_branch
    %282 = sbr.rel (0) target = $region37
  $region36: #{bert_polar_forward.12} parent=0 // pred_region
    _
  $region37: #{bert_polar_forward.12} parent=0 // pred_fallthru
    _
  // Predicated region
  $region38: #{bert_polar_forward.12} parent=0 // pred_check
    _
  $region39: #{bert_polar_forward.12} parent=0 // pred_check_branch
    %284 = sbr.rel (0) target = $region41
  $region40: #{bert_polar_forward.12} parent=0 // pred_region
    _
  $region41: #{bert_polar_forward.12} parent=0 // pred_fallthru
    _
  // Predicated region
  $region42: #{bert_polar_forward.12} parent=0 // pred_check
    _
  $region43: #{bert_polar_forward.12} parent=0 // pred_check_branch
    %286 = sbr.rel (0) target = $region45
  $region44: #{bert_polar_forward.12} parent=0 // pred_region
    _
  $region45: #{bert_polar_forward.12} parent=0 // pred_fallthru
    _
  // Predicated region
  $region46: #{bert_polar_forward.12} parent=0 // pred_check
    _
  $region47: #{bert_polar_forward.12} parent=0 // pred_check_branch
    %288 = sbr.rel (0) target = $region49
  $region48: #{bert_polar_forward.12} parent=0 // pred_region
    _
  $region49: #{bert_polar_forward.12} parent=0 // pred_fallthru
    _

// kernel: bert_polar_forward.13
$region0: #{bert_polar_forward.13}
  #allocation0 [shape = 'u32[]', space=smem, size = 0x4, offset = 0x4, fixed_abs, tag = 'smem constant byte address 0x4 - core index']
  #allocation1 [shape = 'u32[144,128]{1,0:T(1,128)}', space=vmem, size = 0x12000, scoped, tag = 'internal scratch']
  %s0 = inlined_call_operand.vmem [shape: f32[16,32], index: 0, kind: input, shape index: {}]
  %s1 = inlined_call_operand.vmem [shape: f32[16,32], index: 1, kind: input, shape index: {}]
  %s2 = inlined_call_operand.vmem [shape: f32[1,32], index: 2, kind: input, shape index: {}]
  %s3 = inlined_call_operand.vmem [shape: f32[1,32], index: 3, kind: input, shape index: {}]
  %s4 = inlined_call_operand.vmem [shape: f32[1,32], index: 4, kind: input, shape index: {}]
  %s5 = inlined_call_operand.vmem [shape: f32[1,32], index: 5, kind: input, shape index: {}]
  %s6 = inlined_call_operand.vmem [shape: bf16[32,128], index: 6, kind: input, shape index: {}]
  %s7 = inlined_call_operand.vmem [shape: bf16[32,128], index: 7, kind: input, shape index: {}]
  %s8 = inlined_call_operand.vmem [shape: f32[1,128], index: 8, kind: input, shape index: {}]
  %s9 = inlined_call_operand.vmem [shape: f32[1,128], index: 9, kind: input, shape index: {}]
  %s10 = inlined_call_operand.vmem [shape: bf16[16,128], index: 10, kind: output, shape index: {0}]
  %s11 = inlined_call_operand.vmem [shape: bf16[16,128], index: 11, kind: output, shape index: {1}]
  %12 = xla_tuple %s10, %s11
  %s13 = sld [smem:[#allocation0]]
  $region58: #{bert_polar_forward.13} parent=0
    _
  %s15 = ssub.s32 1, %s13
  %s16 = scalar_select 0, %s15, %s13
  // Predicated region
  $region2: #{bert_polar_forward.13} parent=0 // pred_check
    _
  $region3: #{bert_polar_forward.13} parent=0 // pred_check_branch
    %18 = sbr.rel (0) target = $region5
  $region4: #{bert_polar_forward.13} parent=0 // pred_region
    _
  $region5: #{bert_polar_forward.13} parent=0 // pred_fallthru
    _
  // Predicated region
  $region6: #{bert_polar_forward.13} parent=0 // pred_check
    _
  $region7: #{bert_polar_forward.13} parent=0 // pred_check_branch
    %20 = sbr.rel (0) target = $region9
  $region8: #{bert_polar_forward.13} parent=0 // pred_region
    _
  $region9: #{bert_polar_forward.13} parent=0 // pred_fallthru
    _
  // Predicated region
  $region10: #{bert_polar_forward.13} parent=0 // pred_check
    _
  $region11: #{bert_polar_forward.13} parent=0 // pred_check_branch
    %22 = sbr.rel (0) target = $region13
  $region12: #{bert_polar_forward.13} parent=0 // pred_region
    _
  $region13: #{bert_polar_forward.13} parent=0 // pred_fallthru
    _
  // Predicated region
  $region14: #{bert_polar_forward.13} parent=0 // pred_check
    _
  $region15: #{bert_polar_forward.13} parent=0 // pred_check_branch
    %24 = sbr.rel (0) target = $region17
  $region16: #{bert_polar_forward.13} parent=0 // pred_region
    _
  $region17: #{bert_polar_forward.13} parent=0 // pred_fallthru
    _
  // Predicated region
  $region18: #{bert_polar_forward.13} parent=0 // pred_check
    _
  $region19: #{bert_polar_forward.13} parent=0 // pred_check_branch
    %26 = sbr.rel (0) target = $region21
  $region20: #{bert_polar_forward.13} parent=0 // pred_region
    _
  $region21: #{bert_polar_forward.13} parent=0 // pred_fallthru
    _
  // Predicated region
  $region22: #{bert_polar_forward.13} parent=0 // pred_check
    _
  $region23: #{bert_polar_forward.13} parent=0 // pred_check_branch
    %28 = sbr.rel (0) target = $region25
  $region24: #{bert_polar_forward.13} parent=0 // pred_region
    _
  $region25: #{bert_polar_forward.13} parent=0 // pred_fallthru
    _
  // Predicated region
  $region26: #{bert_polar_forward.13} parent=0 // pred_check
    _
  $region27: #{bert_polar_forward.13} parent=0 // pred_check_branch
    %30 = sbr.rel (0) target = $region29
  $region28: #{bert_polar_forward.13} parent=0 // pred_region
    _
  $region29: #{bert_polar_forward.13} parent=0 // pred_fallthru
    _
  // Predicated region
  $region30: #{bert_polar_forward.13} parent=0 // pred_check
    _
  $region31: #{bert_polar_forward.13} parent=0 // pred_check_branch
    %32 = sbr.rel (0) target = $region33
  $region32: #{bert_polar_forward.13} parent=0 // pred_region
    _
  $region33: #{bert_polar_forward.13} parent=0 // pred_fallthru
    _
  // Predicated region
  $region34: #{bert_polar_forward.13} parent=0 // pred_check
    _
  $region35: #{bert_polar_forward.13} parent=0 // pred_check_branch
    %34 = sbr.rel (0) target = $region37
  $region36: #{bert_polar_forward.13} parent=0 // pred_region
    _
  $region37: #{bert_polar_forward.13} parent=0 // pred_fallthru
    _
  // Predicated region
  $region38: #{bert_polar_forward.13} parent=0 // pred_check
    _
  $region39: #{bert_polar_forward.13} parent=0 // pred_check_branch
    %36 = sbr.rel (0) target = $region41
  $region40: #{bert_polar_forward.13} parent=0 // pred_region
    _
  $region41: #{bert_polar_forward.13} parent=0 // pred_fallthru
    _
  %v38 = vld [vmem:[%s0] sm:$0xff]
  %v39 = vld [vmem:[%s0 + $0x8] sm:$0xff]
  %v40 = vld [vmem:[%s1] sm:$0xff]
  %v41 = vld [vmem:[%s1 + $0x8] sm:$0xff]
  %v42 = vld [vmem:[%s2] sm:$0x1]
  %v43 = vld [vmem:[%s3] sm:$0x1]
  %vm44 = vcmask 261120
  %v45 = vsel %vm44, %v38, 0.0
  %46 = vadd.xlane.f32.xlu0 %v45
  %v47 = vpop.xlane.xlu0 %46
  %v48 = vsel %vm44, %v39, 0.0
  %49 = vadd.xlane.f32.xlu0 %v48
  %v50 = vpop.xlane.xlu0 %49
  %v51 = vrcp.pop 32.0
  %v52 = vmul.f32 %v47, %v51
  %v53 = vmul.f32 %v50, %v51
  %v54 = vsub.f32 %v38, %v52
  %v55 = vsub.f32 %v39, %v53
  %v56 = vmul.f32 %v54, %v54
  %v57 = vmul.f32 %v55, %v55
  %v58 = vsel %vm44, %v56, 0.0
  %59 = vadd.xlane.f32.xlu0 %v58
  %v60 = vpop.xlane.xlu0 %59
  %v61 = vsel %vm44, %v57, 0.0
  %62 = vadd.xlane.f32.xlu0 %v61
  %v63 = vpop.xlane.xlu0 %62
  %v64 = vmul.f32 %v60, %v51
  %v65 = vmul.f32 %v63, %v51
  %v66 = vadd.f32 %v64, 1e-05
  %v67 = vadd.f32 %v65, 1e-05
  %v68 = vrsqrt.pop %v66
  %v69 = vrsqrt.pop %v67
  %v70 = vmul.f32 %v54, %v68
  %v71 = vmul.f32 %v55, %v69
  %v73 = vlaneseq
  %v74 = vshrl.u32 %v73, 7
  %v75 = vsub.s32 0, %v74
  %v76 = vrot.slane %v42, %v75
  %v78 = vmul.f32 %v70, %v76
  %v79 = vmul.f32 %v71, %v76
  %v81 = vlaneseq
  %v82 = vshrl.u32 %v81, 7
  %v83 = vsub.s32 0, %v82
  %v84 = vrot.slane %v43, %v83
  %v86 = vadd.f32 %v78, %v84
  %v87 = vadd.f32 %v79, %v84
  %v88 = vld [vmem:[%s4] sm:$0x1]
  %v89 = vld [vmem:[%s5] sm:$0x1]
  %v90 = vsel %vm44, %v40, 0.0
  %91 = vadd.xlane.f32.xlu0 %v90
  %v92 = vpop.xlane.xlu0 %91
  %v93 = vsel %vm44, %v41, 0.0
  %94 = vadd.xlane.f32.xlu0 %v93
  %v95 = vpop.xlane.xlu0 %94
  %v96 = vmul.f32 %v92, %v51
  %v97 = vmul.f32 %v95, %v51
  %v98 = vsub.f32 %v40, %v96
  %v99 = vsub.f32 %v41, %v97
  %v100 = vmul.f32 %v98, %v98
  %v101 = vmul.f32 %v99, %v99
  %v102 = vsel %vm44, %v100, 0.0
  %103 = vadd.xlane.f32.xlu0 %v102
  %v104 = vpop.xlane.xlu0 %103
  %v105 = vsel %vm44, %v101, 0.0
  %106 = vadd.xlane.f32.xlu0 %v105
  %v107 = vpop.xlane.xlu0 %106
  %v108 = vmul.f32 %v104, %v51
  %v109 = vmul.f32 %v107, %v51
  %v110 = vadd.f32 %v108, 1e-05
  %v111 = vadd.f32 %v109, 1e-05
  %v112 = vrsqrt.pop %v110
  %v113 = vrsqrt.pop %v111
  %v114 = vmul.f32 %v98, %v112
  %v115 = vmul.f32 %v99, %v113
  %v117 = vlaneseq
  %v118 = vshrl.u32 %v117, 7
  %v119 = vsub.s32 0, %v118
  %v120 = vrot.slane %v88, %v119
  %v122 = vmul.f32 %v114, %v120
  %v123 = vmul.f32 %v115, %v120
  %v125 = vlaneseq
  %v126 = vshrl.u32 %v125, 7
  %v127 = vsub.s32 0, %v126
  %v128 = vrot.slane %v89, %v127
  %v130 = vadd.f32 %v122, %v128
  %v131 = vadd.f32 %v123, %v128
  %v132 = vpack.c.bf16 %v87, %v86
  %v133 = vpack.c.bf16 %v131, %v130
  %v134 = vld [vmem:[%s6] sm:$0xf]
  %v135 = vld [vmem:[%s6 + $0x4] sm:$0xf]
  %v136 = vld [vmem:[%s6 + $0x8] sm:$0xf]
  %v137 = vld [vmem:[%s6 + $0xc] sm:$0xf]
  %v138 = vld [vmem:[%s7] sm:$0xf]
  %v139 = vld [vmem:[%s7 + $0x4] sm:$0xf]
  %v140 = vld [vmem:[%s7 + $0x8] sm:$0xf]
  %v141 = vld [vmem:[%s7 + $0xc] sm:$0xf]
  %v146 = vunpack.c.l.b16 %v134
  %v147 = vunpack.c.l.b16 %v135
  %v148 = vunpack.c.l.b16 %v136
  %v149 = vunpack.c.l.b16 %v137
  %v150 = vpack.c.b16 %v147, %v146
  %v151 = vpack.c.b16 %v149, %v148
  %v155 = vsel %vm44, %v132, 0
  %157 = vmatprep.subr.bf16.mxu0 0
  %158 = vmatpush1.bf16.msra.mxu0 %v150
  %159 = vmatprep.subr.bf16.mxu0 0
  %160 = vmatpush1.bf16.msra.mxu0 %v151
  %161 = vmatprep.subr.bf16.mxu0 0
  %162 = vmatpush1.bf16.msra.mxu0 0
  %163 = vmatprep.subr.bf16.mxu0 0
  %164 = vmatpush1.bf16.msra.mxu0 0
  %165 = vmatprep.subr.bf16.mxu0 0
  %166 = vmatpush1.bf16.msra.mxu0 0
  %167 = vmatprep.subr.bf16.mxu0 0
  %168 = vmatpush1.bf16.msra.mxu0 0
  %169 = vmatprep.subr.bf16.mxu0 0
  %170 = vmatpush1.bf16.msra.mxu0 0
  %171 = vmatprep.subr.bf16.mxu0 0
  %172 = vmatpush1.bf16.msra.mxu0 0
  %173 = vmatprep.subr.bf16.mxu0 0
  %174 = vmatpush1.bf16.msra.mxu0 0
  %175 = vmatprep.subr.bf16.mxu0 0
  %176 = vmatpush1.bf16.msra.mxu0 0
  %177 = vmatprep.subr.bf16.mxu0 0
  %178 = vmatpush1.bf16.msra.mxu0 0
  %179 = vmatprep.subr.bf16.mxu0 0
  %180 = vmatpush1.bf16.msra.mxu0 0
  %181 = vmatprep.subr.bf16.mxu0 0
  %182 = vmatpush1.bf16.msra.mxu0 0
  %183 = vmatprep.subr.bf16.mxu0 0
  %184 = vmatpush1.bf16.msra.mxu0 0
  %185 = vmatprep.subr.bf16.mxu0 0
  %186 = vmatpush1.bf16.msra.mxu0 0
  %187 = vmatprep.subr.bf16.mxu0 0
  %188 = vmatpush1.bf16.msra.mxu0 0
  %189 = vmatprep.mubr.bf16.mxu0 0
  %190 = vmatmul.mubr.bf16.gmra.mrb[0].mxu0 %v155
  %v191 = vpop.f32.mrb[0].mxu0
  %v192 = vadd.f32 0.0, %v191
  %v193 = vpop.f32.mrb[0].mxu0
  %v194 = vpop.f32.mrb[0].mxu0
  %v195 = vadd.f32 0.0, %v194
  %v196 = vpop.f32.mrb[0].mxu0
  %197 = vdwg.mxu0
  %v202 = vunpack.c.l.b16 %v138
  %v203 = vunpack.c.l.b16 %v139
  %v204 = vunpack.c.l.b16 %v140
  %v205 = vunpack.c.l.b16 %v141
  %v206 = vpack.c.b16 %v203, %v202
  %v207 = vpack.c.b16 %v205, %v204
  %v211 = vsel %vm44, %v133, 0
  %213 = vmatprep.subr.bf16.mxu0 0
  %214 = vmatpush1.bf16.msra.mxu0 %v206
  %215 = vmatprep.subr.bf16.mxu0 0
  %216 = vmatpush1.bf16.msra.mxu0 %v207
  %217 = vmatprep.subr.bf16.mxu0 0
  %218 = vmatpush1.bf16.msra.mxu0 0
  %219 = vmatprep.subr.bf16.mxu0 0
  %220 = vmatpush1.bf16.msra.mxu0 0
  %221 = vmatprep.subr.bf16.mxu0 0
  %222 = vmatpush1.bf16.msra.mxu0 0
  %223 = vmatprep.subr.bf16.mxu0 0
  %224 = vmatpush1.bf16.msra.mxu0 0
  %225 = vmatprep.subr.bf16.mxu0 0
  %226 = vmatpush1.bf16.msra.mxu0 0
  %227 = vmatprep.subr.bf16.mxu0 0
  %228 = vmatpush1.bf16.msra.mxu0 0
  %229 = vmatprep.subr.bf16.mxu0 0
  %230 = vmatpush1.bf16.msra.mxu0 0
  %231 = vmatprep.subr.bf16.mxu0 0
  %232 = vmatpush1.bf16.msra.mxu0 0
  %233 = vmatprep.subr.bf16.mxu0 0
  %234 = vmatpush1.bf16.msra.mxu0 0
  %235 = vmatprep.subr.bf16.mxu0 0
  %236 = vmatpush1.bf16.msra.mxu0 0
  %237 = vmatprep.subr.bf16.mxu0 0
  %238 = vmatpush1.bf16.msra.mxu0 0
  %239 = vmatprep.subr.bf16.mxu0 0
  %240 = vmatpush1.bf16.msra.mxu0 0
  %241 = vmatprep.subr.bf16.mxu0 0
  %242 = vmatpush1.bf16.msra.mxu0 0
  %243 = vmatprep.subr.bf16.mxu0 0
  %244 = vmatpush1.bf16.msra.mxu0 0
  %245 = vmatprep.mubr.bf16.mxu0 0
  %246 = vmatmul.mubr.bf16.gmra.mrb[0].mxu0 %v211
  %v247 = vpop.f32.mrb[0].mxu0
  %v248 = vadd.f32 0.0, %v247
  %v249 = vpop.f32.mrb[0].mxu0
  %v250 = vpop.f32.mrb[0].mxu0
  %v251 = vadd.f32 0.0, %v250
  %v252 = vpop.f32.mrb[0].mxu0
  %253 = vdwg.mxu0
  %254 = vmatprep.subr.bf16.mxu0 0
  %255 = vmatpush1.bf16.msra.mxu0 %v150
  %256 = vmatprep.subr.bf16.mxu0 0
  %257 = vmatpush1.bf16.msra.mxu0 %v151
  %258 = vmatprep.subr.bf16.mxu0 0
  %259 = vmatpush1.bf16.msra.mxu0 0
  %260 = vmatprep.subr.bf16.mxu0 0
  %261 = vmatpush1.bf16.msra.mxu0 0
  %262 = vmatprep.subr.bf16.mxu0 0
  %263 = vmatpush1.bf16.msra.mxu0 0
  %264 = vmatprep.subr.bf16.mxu0 0
  %265 = vmatpush1.bf16.msra.mxu0 0
  %266 = vmatprep.subr.bf16.mxu0 0
  %267 = vmatpush1.bf16.msra.mxu0 0
  %268 = vmatprep.subr.bf16.mxu0 0
  %269 = vmatpush1.bf16.msra.mxu0 0
  %270 = vmatprep.subr.bf16.mxu0 0
  %271 = vmatpush1.bf16.msra.mxu0 0
  %272 = vmatprep.subr.bf16.mxu0 0
  %273 = vmatpush1.bf16.msra.mxu0 0
  %274 = vmatprep.subr.bf16.mxu0 0
  %275 = vmatpush1.bf16.msra.mxu0 0
  %276 = vmatprep.subr.bf16.mxu0 0
  %277 = vmatpush1.bf16.msra.mxu0 0
  %278 = vmatprep.subr.bf16.mxu0 0
  %279 = vmatpush1.bf16.msra.mxu0 0
  %280 = vmatprep.subr.bf16.mxu0 0
  %281 = vmatpush1.bf16.msra.mxu0 0
  %282 = vmatprep.subr.bf16.mxu0 0
  %283 = vmatpush1.bf16.msra.mxu0 0
  %284 = vmatprep.subr.bf16.mxu0 0
  %285 = vmatpush1.bf16.msra.mxu0 0
  %286 = vmatprep.mubr.bf16.mxu0 0
  %287 = vmatmul.mubr.bf16.gmra.mrb[0].mxu0 %v211
  %v288 = vpop.f32.mrb[0].mxu0
  %v289 = vadd.f32 0.0, %v288
  %v290 = vpop.f32.mrb[0].mxu0
  %v291 = vpop.f32.mrb[0].mxu0
  %v292 = vadd.f32 0.0, %v291
  %v293 = vpop.f32.mrb[0].mxu0
  %294 = vdwg.mxu0
  %v295 = vsub.f32 %v192, %v248
  %v296 = vsub.f32 %v195, %v251
  %297 = vmatprep.subr.bf16.mxu0 0
  %298 = vmatpush1.bf16.msra.mxu0 %v206
  %299 = vmatprep.subr.bf16.mxu0 0
  %300 = vmatpush1.bf16.msra.mxu0 %v207
  %301 = vmatprep.subr.bf16.mxu0 0
  %302 = vmatpush1.bf16.msra.mxu0 0
  %303 = vmatprep.subr.bf16.mxu0 0
  %304 = vmatpush1.bf16.msra.mxu0 0
  %305 = vmatprep.subr.bf16.mxu0 0
  %306 = vmatpush1.bf16.msra.mxu0 0
  %307 = vmatprep.subr.bf16.mxu0 0
  %308 = vmatpush1.bf16.msra.mxu0 0
  %309 = vmatprep.subr.bf16.mxu0 0
  %310 = vmatpush1.bf16.msra.mxu0 0
  %311 = vmatprep.subr.bf16.mxu0 0
  %312 = vmatpush1.bf16.msra.mxu0 0
  %313 = vmatprep.subr.bf16.mxu0 0
  %314 = vmatpush1.bf16.msra.mxu0 0
  %315 = vmatprep.subr.bf16.mxu0 0
  %316 = vmatpush1.bf16.msra.mxu0 0
  %317 = vmatprep.subr.bf16.mxu0 0
  %318 = vmatpush1.bf16.msra.mxu0 0
  %319 = vmatprep.subr.bf16.mxu0 0
  %320 = vmatpush1.bf16.msra.mxu0 0
  %321 = vmatprep.subr.bf16.mxu0 0
  %322 = vmatpush1.bf16.msra.mxu0 0
  %323 = vmatprep.subr.bf16.mxu0 0
  %324 = vmatpush1.bf16.msra.mxu0 0
  %325 = vmatprep.subr.bf16.mxu0 0
  %326 = vmatpush1.bf16.msra.mxu0 0
  %327 = vmatprep.subr.bf16.mxu0 0
  %328 = vmatpush1.bf16.msra.mxu0 0
  %329 = vmatprep.mubr.bf16.mxu0 0
  %330 = vmatmul.mubr.bf16.gmra.mrb[0].mxu0 %v155
  %v331 = vpop.f32.mrb[0].mxu0
  %v332 = vadd.f32 %v289, %v331
  %v333 = vpop.f32.mrb[0].mxu0
  %v334 = vpop.f32.mrb[0].mxu0
  %v335 = vadd.f32 %v292, %v334
  %v336 = vpop.f32.mrb[0].mxu0
  %337 = vdwg.mxu0
  %v338 = vld [vmem:[%s8] sm:$0x1]
  %v340 = vlaneseq
  %v341 = vshrl.u32 %v340, 7
  %v342 = vsub.s32 0, %v341
  %v343 = vrot.slane %v338, %v342
  %v345 = vadd.f32 %v295, %v343
  %v346 = vadd.f32 %v296, %v343
  %v347 = vld [vmem:[%s9] sm:$0x1]
  %v349 = vlaneseq
  %v350 = vshrl.u32 %v349, 7
  %v351 = vsub.s32 0, %v350
  %v352 = vrot.slane %v347, %v351
  %v354 = vadd.f32 %v332, %v352
  %v355 = vadd.f32 %v335, %v352
  %v356 = vmul.f32 %v345, 0.5
  %v357 = vmul.f32 %v346, 0.5
  %v358 = vmul.f32 %v345, 0.044715
  %v359 = vmul.f32 %v346, 0.044715
  %v360 = vmul.f32 %v358, %v345
  %v361 = vmul.f32 %v359, %v346
  %v362 = vmul.f32 %v360, %v345
  %v363 = vmul.f32 %v361, %v346
  %v364 = vadd.f32 %v345, %v362
  %v365 = vadd.f32 %v346, %v363
  %v366 = vmul.f32 %v364, 0.7978846
  %v367 = vmul.f32 %v365, 0.7978846
  %v368 = vtanh.pop %v366
  %v369 = vtanh.pop %v367
  %v370 = vadd.f32 %v368, 1.0
  %v371 = vadd.f32 %v369, 1.0
  %v372 = vmul.f32 %v356, %v370
  %v373 = vmul.f32 %v357, %v371
  %v374 = vmul.f32 %v354, 0.5
  %v375 = vmul.f32 %v355, 0.5
  %v376 = vmul.f32 %v354, 0.044715
  %v377 = vmul.f32 %v355, 0.044715
  %v378 = vmul.f32 %v376, %v354
  %v379 = vmul.f32 %v377, %v355
  %v380 = vmul.f32 %v378, %v354
  %v381 = vmul.f32 %v379, %v355
  %v382 = vadd.f32 %v354, %v380
  %v383 = vadd.f32 %v355, %v381
  %v384 = vmul.f32 %v382, 0.7978846
  %v385 = vmul.f32 %v383, 0.7978846
  %v386 = vtanh.pop %v384
  %v387 = vtanh.pop %v385
  %v388 = vadd.f32 %v386, 1.0
  %v389 = vadd.f32 %v387, 1.0
  %v390 = vmul.f32 %v374, %v388
  %v391 = vmul.f32 %v375, %v389
  %v392 = vpack.c.bf16 %v373, %v372
  %v394 = vunpack.c.l.b16 %v392
  %v395 = vunpack.c.h.b16 %v392
  %v396 = vpack.c.b16 %v394, %v394
  %v397 = vpack.c.b16 %v395, %v395
  %400 = vst [vmem:[%s10] sm:$0xf] %v396
  %401 = vst [vmem:[%s10 + $0x4] sm:$0xf] %v397
  %v402 = vpack.c.bf16 %v391, %v390
  %v404 = vunpack.c.l.b16 %v402
  %v405 = vunpack.c.h.b16 %v402
  %v406 = vpack.c.b16 %v404, %v404
  %v407 = vpack.c.b16 %v405, %v405
  %410 = vst [vmem:[%s11] sm:$0xf] %v406
  %411 = vst [vmem:[%s11 + $0x4] sm:$0xf] %v407
  // Predicated region
  $region42: #{bert_polar_forward.13} parent=0 // pred_check
    _
  $region43: #{bert_polar_forward.13} parent=0 // pred_check_branch
    %413 = sbr.rel (0) target = $region45
  $region44: #{bert_polar_forward.13} parent=0 // pred_region
    _
  $region45: #{bert_polar_forward.13} parent=0 // pred_fallthru
    _
  // Predicated region
  $region46: #{bert_polar_forward.13} parent=0 // pred_check
    _
  $region47: #{bert_polar_forward.13} parent=0 // pred_check_branch
    %415 = sbr.rel (0) target = $region49
  $region48: #{bert_polar_forward.13} parent=0 // pred_region
    _
  $region49: #{bert_polar_forward.13} parent=0 // pred_fallthru
    _
  // Predicated region
  $region50: #{bert_polar_forward.13} parent=0 // pred_check
    _
  $region51: #{bert_polar_forward.13} parent=0 // pred_check_branch
    %417 = sbr.rel (0) target = $region53
  $region52: #{bert_polar_forward.13} parent=0 // pred_region
    _
  $region53: #{bert_polar_forward.13} parent=0 // pred_fallthru
    _
  // Predicated region
  $region54: #{bert_polar_forward.13} parent=0 // pred_check
    _
  $region55: #{bert_polar_forward.13} parent=0 // pred_check_branch
    %419 = sbr.rel (0) target = $region57
  $region56: #{bert_polar_forward.13} parent=0 // pred_region
    _
  $region57: #{bert_polar_forward.13} parent=0 // pred_fallthru
    _

// kernel: bert_polar_forward.11
$region0: #{bert_polar_forward.11}
  #allocation0 [shape = 'u32[]', space=smem, size = 0x4, offset = 0x4, fixed_abs, tag = 'smem constant byte address 0x4 - core index']
  #allocation1 [shape = 'u32[144,128]{1,0:T(1,128)}', space=vmem, size = 0x12000, scoped, tag = 'internal scratch']
  #allocation2 [shape = 'f32[4,8,1]{2,1,0:T(8,128)}', space=vmem, size = 0x4000, scoped, tag = 'scratch operand']
  #allocation3 [shape = 'f32[4,8,1]{2,1,0:T(8,128)}', space=vmem, size = 0x4000, scoped, tag = 'scratch operand']
  #allocation4 [shape = 'f32[4,8,16]{2,1,0:T(8,128)}', space=vmem, size = 0x4000, scoped, tag = 'scratch operand']
  %s0 = inlined_call_operand.vmem [shape: bf16[2,8,96], index: 0, kind: input, shape index: {}, may-alias: {0,2}]
  %s1 = inlined_call_operand.vmem [shape: bf16[2,8,96], index: 1, kind: input, shape index: {}, may-alias: {1,3}]
  %s2 = inlined_call_operand.vmem [shape: bf16[2,8,96], index: 2, kind: input, shape index: {}, may-alias: {0,2}]
  %s3 = inlined_call_operand.vmem [shape: bf16[2,8,96], index: 3, kind: input, shape index: {}, may-alias: {1,3}]
  %s4 = inlined_call_operand.vmem [shape: f32[2,1,8], index: 4, kind: input, shape index: {}]
  %s5 = inlined_call_operand.vmem [shape: bf16[2,8,32], index: 5, kind: output, shape index: {0}]
  %s6 = inlined_call_operand.vmem [shape: bf16[2,8,32], index: 6, kind: output, shape index: {1}]
  %7 = xla_tuple %s5, %s6
  %s8 = sld [smem:[#allocation0]]
  $region69: #{bert_polar_forward.11} parent=0
    _
  %s10 = ssub.s32 1, %s8
  %s11 = scalar_select 0, %s10, %s8
  loop: start=0, step=1, limit=4
  $region2: #{bert_polar_forward.11} parent=0 // loop_pre_header
    _
  $region3: #{bert_polar_forward.11} parent=0 // loop_header
    %s13 = sphi 0, %s17
    %p14 = scmp.ge.s32.totalorder %s13, 4
    %s20 = sphi 0, %s39
    %s21 = sphi 0, %s35
    %s22 = sphi 0, %s31
    %s23 = sphi 0, %s20
    %s24 = sphi 0, %s21
    %s25 = sphi 0, %s22
    %s26 = sphi 0, %s23
    %s27 = sphi 0, %s24
    %s28 = sphi 0, %s25
    %s44 = sphi 0, %s46
    %s47 = sphi 0, %s44
    %s48 = sphi 0, %s47
    %s64 = sphi 0, %s48
    %s72 = sphi 0, %s74
    %s75 = sphi 0, %s72
    %s76 = sphi 0, %s75
    %s92 = sphi 0, %s76
    %s100 = sphi 0, %s102
    %s103 = sphi 0, %s100
    %s104 = sphi 0, %s103
    %s120 = sphi 0, %s104
    %s128 = sphi 0, %s130
    %s131 = sphi 0, %s128
    %s132 = sphi 0, %s131
    %s148 = sphi 0, %s132
    %s156 = sphi 0, %s158
    %s159 = sphi 0, %s156
    %s160 = sphi 0, %s159
    %s176 = sphi 0, %s160
    %s184 = sphi 0, %s186
    %s187 = sphi 0, %s184
    %s188 = sphi 0, %s187
    %s204 = sphi 0, %s188
    %s212 = sphi 0, %s214
    %s215 = sphi 0, %s212
    %s216 = sphi 0, %s215
    %s232 = sphi 0, %s216
  $region4: #{bert_polar_forward.11} parent=0 // loop_header_branch
    %16 = sbr.rel (%p14) target = $region8
  $region5: #{bert_polar_forward.11} parent=0 // loop_body
    %s18 = ssub.s32 %s13, 1
    %s19 = ssub.s32 %s13, 2
    %s29 = sadd.s32 1, %s22
    %p30 = scmp.ge.s32.totalorder %s29, 1
    %s31 = scalar_select %p30, 0, %s29
    %s32 = sadd.s32 1, %s21
    %s33 = scalar_select %p30, %s32, %s21
    %p34 = scmp.ge.s32.totalorder %s33, 1
    %s35 = scalar_select %p34, 0, %s33
    %s36 = sadd.s32 1, %s20
    %s37 = scalar_select %p34, %s36, %s20
    %p38 = scmp.ge.s32.totalorder %s37, 2
    %s39 = scalar_select %p38, 0, %s37
    %s40 = ssub.s32 %s20, %s39
    %s41 = ssub.s32 %s21, %s35
    %s42 = sor.u32 %s40, %s41
    %p43 = scmp.eq.s32.totalorder %s42, 0
    %s45 = sadd.s32 %s44, 1
    %s46 = scalar_select %p43, %s44, %s45
    %p49 = pneg %p43
    %p50 = scmp.eq.s32.totalorder %s13, 1
    %p51 = por %p49, %p50
    %p52 = scmp.ne.s32.totalorder %s44, %s47
    %p53 = scmp.eq.s32.totalorder %s13, 0
    %p54 = por %p52, %p53
    %p55 = scmp.ne.s32.totalorder %s44, %s47
    %p56 = scmp.eq.s32.totalorder %s18, 1
    %p57 = por %p55, %p56
    %p58 = scmp.ne.s32.totalorder %s47, %s48
    %p59 = scmp.eq.s32.totalorder %s18, 0
    %p60 = por %p58, %p59
    %p61 = scmp.ne.s32.totalorder %s47, %s48
    %p62 = scmp.eq.s32.totalorder %s19, 1
    %p63 = por %p61, %p62
    %p65 = scmp.ne.s32.totalorder %s48, %s64
    %p66 = scmp.eq.s32.totalorder %s19, 0
    %p67 = por %p65, %p66
    %s68 = ssub.s32 %s20, %s39
    %s69 = ssub.s32 %s21, %s35
    %s70 = sor.u32 %s68, %s69
    %p71 = scmp.eq.s32.totalorder %s70, 0
    %s73 = sadd.s32 %s72, 1
    %s74 = scalar_select %p71, %s72, %s73
    %p77 = pneg %p71
    %p78 = scmp.eq.s32.totalorder %s13, 1
    %p79 = por %p77, %p78
    %p80 = scmp.ne.s32.totalorder %s72, %s75
    %p81 = scmp.eq.s32.totalorder %s13, 0
    %p82 = por %p80, %p81
    %p83 = scmp.ne.s32.totalorder %s72, %s75
    %p84 = scmp.eq.s32.totalorder %s18, 1
    %p85 = por %p83, %p84
    %p86 = scmp.ne.s32.totalorder %s75, %s76
    %p87 = scmp.eq.s32.totalorder %s18, 0
    %p88 = por %p86, %p87
    %p89 = scmp.ne.s32.totalorder %s75, %s76
    %p90 = scmp.eq.s32.totalorder %s19, 1
    %p91 = por %p89, %p90
    %p93 = scmp.ne.s32.totalorder %s76, %s92
    %p94 = scmp.eq.s32.totalorder %s19, 0
    %p95 = por %p93, %p94
    %s96 = ssub.s32 %s20, %s39
    %s97 = ssub.s32 %s22, %s31
    %s98 = sor.u32 %s96, %s97
    %p99 = scmp.eq.s32.totalorder %s98, 0
    %s101 = sadd.s32 %s100, 1
    %s102 = scalar_select %p99, %s100, %s101
    %p105 = pneg %p99
    %p106 = scmp.eq.s32.totalorder %s13, 1
    %p107 = por %p105, %p106
    %p108 = scmp.ne.s32.totalorder %s100, %s103
    %p109 = scmp.eq.s32.totalorder %s13, 0
    %p110 = por %p108, %p109
    %p111 = scmp.ne.s32.totalorder %s100, %s103
    %p112 = scmp.eq.s32.totalorder %s18, 1
    %p113 = por %p111, %p112
    %p114 = scmp.ne.s32.totalorder %s103, %s104
    %p115 = scmp.eq.s32.totalorder %s18, 0
    %p116 = por %p114, %p115
    %p117 = scmp.ne.s32.totalorder %s103, %s104
    %p118 = scmp.eq.s32.totalorder %s19, 1
    %p119 = por %p117, %p118
    %p121 = scmp.ne.s32.totalorder %s104, %s120
    %p122 = scmp.eq.s32.totalorder %s19, 0
    %p123 = por %p121, %p122
    %s124 = ssub.s32 %s20, %s39
    %s125 = ssub.s32 %s22, %s31
    %s126 = sor.u32 %s124, %s125
    %p127 = scmp.eq.s32.totalorder %s126, 0
    %s129 = sadd.s32 %s128, 1
    %s130 = scalar_select %p127, %s128, %s129
    %p133 = pneg %p127
    %p134 = scmp.eq.s32.totalorder %s13, 1
    %p135 = por %p133, %p134
    %p136 = scmp.ne.s32.totalorder %s128, %s131
    %p137 = scmp.eq.s32.totalorder %s13, 0
    %p138 = por %p136, %p137
    %p139 = scmp.ne.s32.totalorder %s128, %s131
    %p140 = scmp.eq.s32.totalorder %s18, 1
    %p141 = por %p139, %p140
    %p142 = scmp.ne.s32.totalorder %s131, %s132
    %p143 = scmp.eq.s32.totalorder %s18, 0
    %p144 = por %p142, %p143
    %p145 = scmp.ne.s32.totalorder %s131, %s132
    %p146 = scmp.eq.s32.totalorder %s19, 1
    %p147 = por %p145, %p146
    %p149 = scmp.ne.s32.totalorder %s132, %s148
    %p150 = scmp.eq.s32.totalorder %s19, 0
    %p151 = por %p149, %p150
    %s152 = ssub.s32 %s20, %s39
    %s153 = ssub.s32 %s22, %s31
    %s154 = sor.u32 %s152, %s153
    %p155 = scmp.eq.s32.totalorder %s154, 0
    %s157 = sadd.s32 %s156, 1
    %s158 = scalar_select %p155, %s156, %s157
    %p161 = pneg %p155
    %p162 = scmp.eq.s32.totalorder %s13, 1
    %p163 = por %p161, %p162
    %p164 = scmp.ne.s32.totalorder %s156, %s159
    %p165 = scmp.eq.s32.totalorder %s13, 0
    %p166 = por %p164, %p165
    %p167 = scmp.ne.s32.totalorder %s156, %s159
    %p168 = scmp.eq.s32.totalorder %s18, 1
    %p169 = por %p167, %p168
    %p170 = scmp.ne.s32.totalorder %s159, %s160
    %p171 = scmp.eq.s32.totalorder %s18, 0
    %p172 = por %p170, %p171
    %p173 = scmp.ne.s32.totalorder %s159, %s160
    %p174 = scmp.eq.s32.totalorder %s19, 1
    %p175 = por %p173, %p174
    %p177 = scmp.ne.s32.totalorder %s160, %s176
    %p178 = scmp.eq.s32.totalorder %s19, 0
    %p179 = por %p177, %p178
    %s180 = ssub.s32 %s20, %s39
    %s181 = ssub.s32 %s21, %s35
    %s182 = sor.u32 %s180, %s181
    %p183 = scmp.eq.s32.totalorder %s182, 0
    %s185 = sadd.s32 %s184, 1
    %s186 = scalar_select %p183, %s184, %s185
    %p189 = pneg %p183
    %p190 = scmp.eq.s32.totalorder %s13, 1
    %p191 = por %p189, %p190
    %p192 = scmp.ne.s32.totalorder %s184, %s187
    %p193 = scmp.eq.s32.totalorder %s13, 0
    %p194 = por %p192, %p193
    %p195 = scmp.ne.s32.totalorder %s184, %s187
    %p196 = scmp.eq.s32.totalorder %s18, 1
    %p197 = por %p195, %p196
    %p198 = scmp.ne.s32.totalorder %s187, %s188
    %p199 = scmp.eq.s32.totalorder %s18, 0
    %p200 = por %p198, %p199
    %p201 = scmp.ne.s32.totalorder %s187, %s188
    %p202 = scmp.eq.s32.totalorder %s19, 1
    %p203 = por %p201, %p202
    %p205 = scmp.ne.s32.totalorder %s188, %s204
    %p206 = scmp.eq.s32.totalorder %s19, 0
    %p207 = por %p205, %p206
    %s208 = ssub.s32 %s20, %s39
    %s209 = ssub.s32 %s21, %s35
    %s210 = sor.u32 %s208, %s209
    %p211 = scmp.eq.s32.totalorder %s210, 0
    %s213 = sadd.s32 %s212, 1
    %s214 = scalar_select %p211, %s212, %s213
    %p217 = pneg %p211
    %p218 = scmp.eq.s32.totalorder %s13, 1
    %p219 = por %p217, %p218
    %p220 = scmp.ne.s32.totalorder %s212, %s215
    %p221 = scmp.eq.s32.totalorder %s13, 0
    %p222 = por %p220, %p221
    %p223 = scmp.ne.s32.totalorder %s212, %s215
    %p224 = scmp.eq.s32.totalorder %s18, 1
    %p225 = por %p223, %p224
    %p226 = scmp.ne.s32.totalorder %s215, %s216
    %p227 = scmp.eq.s32.totalorder %s18, 0
    %p228 = por %p226, %p227
    %p229 = scmp.ne.s32.totalorder %s215, %s216
    %p230 = scmp.eq.s32.totalorder %s19, 1
    %p231 = por %p229, %p230
    %p233 = scmp.ne.s32.totalorder %s216, %s232
    %p234 = scmp.eq.s32.totalorder %s19, 0
    %p235 = por %p233, %p234
    %p236 = scmp.le.s32.totalorder 1, %s13
    %p237 = scmp.lt.s32.totalorder %s13, 3
    %p238 = pnand %p236, %p237
    %p239 = pneg %p238
    // Predicated region
    $region9: #{bert_polar_forward.11} parent=5 // pred_check
      _
    $region10: #{bert_polar_forward.11} parent=5 // pred_check_branch
      %241 = sbr.rel (%p238) target = $region12
    $region11: #{bert_polar_forward.11} parent=5 // pred_region
      %s242 = ssub.s32 %s13, 1
    $region12: #{bert_polar_forward.11} parent=5 // pred_fallthru
      _
    %p243 = scmp.lt.s32.totalorder %s13, 2
    // Predicated region
    $region13: #{bert_polar_forward.11} parent=5 // pred_check
      %p244 = pneg %p243
    $region14: #{bert_polar_forward.11} parent=5 // pred_check_branch
      %246 = sbr.rel (%p244) target = $region16
    $region15: #{bert_polar_forward.11} parent=5 // pred_region
      // Predicated region
      $region17: #{bert_polar_forward.11} parent=15 // pred_check
        %p247 = pneg %p54
      $region18: #{bert_polar_forward.11} parent=15 // pred_check_branch
        %249 = sbr.rel (%p247) target = $region20
      $region19: #{bert_polar_forward.11} parent=15 // pred_region
        %p250 = scmp.lt.s32.totalorder %s20, 1
        %s251 = scalar_select %p250, %s20, 1
        %p252 = scmp.lt.s32.totalorder %s21, 0
        %s253 = scalar_select %p252, %s21, 0
        %s254 = sadd.s32 %s253, %s251
        %s255 = smul.addr %s254, 4
        %s256 = scalar_lea.vmem %s0, %s255
      $region20: #{bert_polar_forward.11} parent=15 // pred_fallthru
        _
      // Predicated region
      $region21: #{bert_polar_forward.11} parent=15 // pred_check
        %p257 = pneg %p82
      $region22: #{bert_polar_forward.11} parent=15 // pred_check_branch
        %259 = sbr.rel (%p257) target = $region24
      $region23: #{bert_polar_forward.11} parent=15 // pred_region
        %p260 = scmp.lt.s32.totalorder %s20, 1
        %s261 = scalar_select %p260, %s20, 1
        %p262 = scmp.lt.s32.totalorder %s21, 0
        %s263 = scalar_select %p262, %s21, 0
        %s264 = sadd.s32 %s263, %s261
        %s265 = smul.addr %s264, 4
        %s266 = scalar_lea.vmem %s1, %s265
      $region24: #{bert_polar_forward.11} parent=15 // pred_fallthru
        _
      // Predicated region
      $region25: #{bert_polar_forward.11} parent=15 // pred_check
        %p267 = pneg %p110
      $region26: #{bert_polar_forward.11} parent=15 // pred_check_branch
        %269 = sbr.rel (%p267) target = $region28
      $region27: #{bert_polar_forward.11} parent=15 // pred_region
        %p270 = scmp.lt.s32.totalorder %s20, 1
        %s271 = scalar_select %p270, %s20, 1
        %p272 = scmp.lt.s32.totalorder %s22, 0
        %s273 = scalar_select %p272, %s22, 0
        %s274 = sadd.s32 %s273, %s271
        %s275 = smul.addr %s274, 4
        %s276 = scalar_lea.vmem %s2, %s275
      $region28: #{bert_polar_forward.11} parent=15 // pred_fallthru
        _
      // Predicated region
      $region29: #{bert_polar_forward.11} parent=15 // pred_check
        %p277 = pneg %p138
      $region30: #{bert_polar_forward.11} parent=15 // pred_check_branch
        %279 = sbr.rel (%p277) target = $region32
      $region31: #{bert_polar_forward.11} parent=15 // pred_region
        %p280 = scmp.lt.s32.totalorder %s20, 1
        %s281 = scalar_select %p280, %s20, 1
        %p282 = scmp.lt.s32.totalorder %s22, 0
        %s283 = scalar_select %p282, %s22, 0
        %s284 = sadd.s32 %s283, %s281
        %s285 = smul.addr %s284, 4
        %s286 = scalar_lea.vmem %s3, %s285
      $region32: #{bert_polar_forward.11} parent=15 // pred_fallthru
        _
      // Predicated region
      $region33: #{bert_polar_forward.11} parent=15 // pred_check
        %p287 = pneg %p166
      $region34: #{bert_polar_forward.11} parent=15 // pred_check_branch
        %289 = sbr.rel (%p287) target = $region36
      $region35: #{bert_polar_forward.11} parent=15 // pred_region
        %p290 = scmp.lt.s32.totalorder %s20, 1
        %s291 = scalar_select %p290, %s20, 1
        %p292 = scmp.lt.s32.totalorder %s22, 0
        %s293 = scalar_select %p292, %s22, 0
        %s294 = sadd.s32 %s293, %s291
        %s295 = scalar_lea.vmem %s4, %s294
      $region36: #{bert_polar_forward.11} parent=15 // pred_fallthru
        _
    $region16: #{bert_polar_forward.11} parent=5 // pred_fallthru
      _
    %p296 = scmp.le.s32.totalorder 1, %s13
    %p297 = scmp.lt.s32.totalorder %s13, 3
    %p298 = pnand %p296, %p297
    %p299 = pneg %p298
    // Predicated region
    $region37: #{bert_polar_forward.11} parent=5 // pred_check
      _
    $region38: #{bert_polar_forward.11} parent=5 // pred_check_branch
      %301 = sbr.rel (%p298) target = $region40
    $region39: #{bert_polar_forward.11} parent=5 // pred_region
      %s302 = ssub.s32 %s13, 1
      %p303 = scmp.lt.s32.totalorder %s23, 1
      %s304 = scalar_select %p303, %s23, 1
      %p305 = scmp.lt.s32.totalorder %s24, 0
      %s306 = scalar_select %p305, %s24, 0
      %s307 = sadd.s32 %s306, %s304
      %s308 = smul.addr %s307, 4
      %s309 = scalar_lea.vmem %s0, %s308
      %p310 = pneg %p60
      %p311 = pneg %p57
      %p312 = scmp.lt.s32.totalorder %s23, 1
      %s313 = scalar_select %p312, %s23, 1
      %p314 = scmp.lt.s32.totalorder %s24, 0
      %s315 = scalar_select %p314, %s24, 0
      %s316 = sadd.s32 %s315, %s313
      %s317 = smul.addr %s316, 4
      %s318 = scalar_lea.vmem %s1, %s317
      %p319 = pneg %p88
      %p320 = pneg %p85
      %p321 = scmp.lt.s32.totalorder %s23, 1
      %s322 = scalar_select %p321, %s23, 1
      %p323 = scmp.lt.s32.totalorder %s25, 0
      %s324 = scalar_select %p323, %s25, 0
      %s325 = sadd.s32 %s324, %s322
      %s326 = smul.addr %s325, 4
      %s327 = scalar_lea.vmem %s2, %s326
      %p328 = pneg %p116
      %p329 = pneg %p113
      %p330 = scmp.lt.s32.totalorder %s23, 1
      %s331 = scalar_select %p330, %s23, 1
      %p332 = scmp.lt.s32.totalorder %s25, 0
      %s333 = scalar_select %p332, %s25, 0
      %s334 = sadd.s32 %s333, %s331
      %s335 = smul.addr %s334, 4
      %s336 = scalar_lea.vmem %s3, %s335
      %p337 = pneg %p144
      %p338 = pneg %p141
      %p339 = scmp.lt.s32.totalorder %s23, 1
      %s340 = scalar_select %p339, %s23, 1
      %p341 = scmp.lt.s32.totalorder %s25, 0
      %s342 = scalar_select %p341, %s25, 0
      %s343 = sadd.s32 %s342, %s340
      %s344 = scalar_lea.vmem %s4, %s343
      %p345 = pneg %p172
      %p346 = pneg %p169
      %p347 = pneg %p200
      %p348 = pneg %p197
      %p349 = scmp.lt.s32.totalorder %s23, 1
      %s350 = scalar_select %p349, %s23, 1
      %p351 = scmp.lt.s32.totalorder %s24, 0
      %s352 = scalar_select %p351, %s24, 0
      %s353 = sadd.s32 %s352, %s350
      %s354 = smul.addr %s353, 4
      %s355 = scalar_lea.vmem %s5, %s354
      %p356 = pneg %p228
      %p357 = pneg %p225
      %p358 = scmp.lt.s32.totalorder %s23, 1
      %s359 = scalar_select %p358, %s23, 1
      %p360 = scmp.lt.s32.totalorder %s24, 0
      %s361 = scalar_select %p360, %s24, 0
      %s362 = sadd.s32 %s361, %s359
      %s363 = smul.addr %s362, 4
      %s364 = scalar_lea.vmem %s6, %s363
      %p365 = scmp.lt.s32.totalorder %s23, 1
      %s366 = scalar_select %p365, %s23, 1
      %p367 = scmp.lt.s32.totalorder %s24, 0
      %s368 = scalar_select %p367, %s24, 0
      %s369 = sadd.s32 %s368, %s366
      %s370 = smul.addr %s369, 4
      %s371 = scalar_lea.vmem %s0, %s370
      %p372 = scmp.lt.s32.totalorder %s23, 1
      %s373 = scalar_select %p372, %s23, 1
      %p374 = scmp.lt.s32.totalorder %s24, 0
      %s375 = scalar_select %p374, %s24, 0
      %s376 = sadd.s32 %s375, %s373
      %s377 = smul.addr %s376, 4
      %s378 = scalar_lea.vmem %s1, %s377
      %p379 = scmp.lt.s32.totalorder %s23, 1
      %s380 = scalar_select %p379, %s23, 1
      %p381 = scmp.lt.s32.totalorder %s25, 0
      %s382 = scalar_select %p381, %s25, 0
      %s383 = sadd.s32 %s382, %s380
      %s384 = smul.addr %s383, 4
      %s385 = scalar_lea.vmem %s2, %s384
      %p386 = scmp.lt.s32.totalorder %s23, 1
      %s387 = scalar_select %p386, %s23, 1
      %p388 = scmp.lt.s32.totalorder %s25, 0
      %s389 = scalar_select %p388, %s25, 0
      %s390 = sadd.s32 %s389, %s387
      %s391 = smul.addr %s390, 4
      %s392 = scalar_lea.vmem %s3, %s391
      %p393 = scmp.lt.s32.totalorder %s23, 1
      %s394 = scalar_select %p393, %s23, 1
      %p395 = scmp.lt.s32.totalorder %s25, 0
      %s396 = scalar_select %p395, %s25, 0
      %s397 = sadd.s32 %s396, %s394
      %s398 = scalar_lea.vmem %s4, %s397
      %p399 = scmp.lt.s32.totalorder %s23, 1
      %s400 = scalar_select %p399, %s23, 1
      %p401 = scmp.lt.s32.totalorder %s24, 0
      %s402 = scalar_select %p401, %s24, 0
      %s403 = sadd.s32 %s402, %s400
      %s404 = smul.addr %s403, 4
      %s405 = scalar_lea.vmem %s5, %s404
      %p406 = scmp.lt.s32.totalorder %s23, 1
      %s407 = scalar_select %p406, %s23, 1
      %p408 = scmp.lt.s32.totalorder %s24, 0
      %s409 = scalar_select %p408, %s24, 0
      %s410 = sadd.s32 %s409, %s407
      %s411 = smul.addr %s410, 4
      %s412 = scalar_lea.vmem %s6, %s411
      %p414 = scmp.eq.s32.totalorder %s25, 0
      // Predicated region
      $region41: #{bert_polar_forward.11} parent=39 // pred_check
        %p415 = pneg %p414
      $region42: #{bert_polar_forward.11} parent=39 // pred_check_branch
        %417 = sbr.rel (%p415) target = $region44
      $region43: #{bert_polar_forward.11} parent=39 // pred_region
        %vm418 = vcmask 7168
        %419 = vst.msk [vmem:[#allocation2] sm:$0xff] %vm418, -inf
        %420 = vst.msk [vmem:[#allocation2 + $0x8] sm:$0xff] %vm418, -inf
        %421 = vst.msk [vmem:[#allocation2 + $0x10] sm:$0xff] %vm418, -inf
        %422 = vst.msk [vmem:[#allocation2 + $0x18] sm:$0xff] %vm418, -inf
        %423 = vst.msk [vmem:[#allocation3] sm:$0xff] %vm418, 0.0
        %424 = vst.msk [vmem:[#allocation3 + $0x8] sm:$0xff] %vm418, 0.0
        %425 = vst.msk [vmem:[#allocation3 + $0x10] sm:$0xff] %vm418, 0.0
        %426 = vst.msk [vmem:[#allocation3 + $0x18] sm:$0xff] %vm418, 0.0
        %vm427 = vcmask 130048
        %428 = vst.msk [vmem:[#allocation4] sm:$0xff] %vm427, 0.0
        %429 = vst.msk [vmem:[#allocation4 + $0x8] sm:$0xff] %vm427, 0.0
        %430 = vst.msk [vmem:[#allocation4 + $0x10] sm:$0xff] %vm427, 0.0
        %431 = vst.msk [vmem:[#allocation4 + $0x18] sm:$0xff] %vm427, 0.0
      $region44: #{bert_polar_forward.11} parent=39 // pred_fallthru
        _
      %v432 = vld [vmem:[%s398] sm:$0x1]
      %v433 = vld [vmem:[%s371] sm:$0xf]
      %v434 = vld [vmem:[%s378] sm:$0xf]
      %v436 = vunpack.c.l.b16 %v434
      %v437 = vpack.c.b16 %v436, %v436
      %438 = vrot.lane.b32.xlu0 %v437, 8
      %v439 = vpop.permute.xlu0 %438
      %vm440 = vcmask 64512
      %v443 = vsel %vm440, %v433, %v439
      %v444 = vld [vmem:[%s385] sm:$0xf]
      %v445 = vld [vmem:[%s392] sm:$0xf]
      %v447 = vunpack.c.l.b16 %v444
      %v448 = vpack.c.b16 %v447, %v447
      %449 = vrot.lane.b32.xlu0 %v448, 96
      %v450 = vpop.permute.xlu0 %449
      %v452 = vunpack.c.l.b16 %v445
      %v453 = vpack.c.b16 %v452, %v452
      %454 = vrot.lane.b32.xlu0 %v453, 104
      %v455 = vpop.permute.xlu0 %454
      %v458 = vsel %vm440, %v450, %v455
      %459 = vrot.lane.b32.xlu0 %v448, 64
      %v460 = vpop.permute.xlu0 %459
      %461 = vrot.lane.b32.xlu0 %v453, 72
      %v462 = vpop.permute.xlu0 %461
      %v465 = vsel %vm440, %v460, %v462
      %vm466 = vcmask 130048
      %v467 = vsel %vm466, %v443, 0
      %v469 = vsel %vm466, %v458, 0
      %471 = vmatprep.subr.bf16.mxu0 0
      %472 = vmatpush1.bf16.xpose.msra.mxu0 %v469
      %473 = vmatprep.subr.bf16.mxu0 0
      %474 = vmatpush1.bf16.xpose.msra.mxu0 0
      %475 = vmatprep.subr.bf16.mxu0 0
      %476 = vmatpush1.bf16.xpose.msra.mxu0 0
      %477 = vmatprep.subr.bf16.mxu0 0
      %478 = vmatpush1.bf16.xpose.msra.mxu0 0
      %479 = vmatprep.subr.bf16.mxu0 0
      %480 = vmatpush1.bf16.xpose.msra.mxu0 0
      %481 = vmatprep.subr.bf16.mxu0 0
      %482 = vmatpush1.bf16.xpose.msra.mxu0 0
      %483 = vmatprep.subr.bf16.mxu0 0
      %484 = vmatpush1.bf16.xpose.msra.mxu0 0
      %485 = vmatprep.subr.bf16.mxu0 0
      %486 = vmatpush1.bf16.xpose.msra.mxu0 0
      %487 = vmatprep.subr.bf16.mxu0 0
      %488 = vmatpush1.bf16.xpose.msra.mxu0 0
      %489 = vmatprep.subr.bf16.mxu0 0
      %490 = vmatpush1.bf16.xpose.msra.mxu0 0
      %491 = vmatprep.subr.bf16.mxu0 0
      %492 = vmatpush1.bf16.xpose.msra.mxu0 0
      %493 = vmatprep.subr.bf16.mxu0 0
      %494 = vmatpush1.bf16.xpose.msra.mxu0 0
      %495 = vmatprep.subr.bf16.mxu0 0
      %496 = vmatpush1.bf16.xpose.msra.mxu0 0
      %497 = vmatprep.subr.bf16.mxu0 0
      %498 = vmatpush1.bf16.xpose.msra.mxu0 0
      %499 = vmatprep.subr.bf16.mxu0 0
      %500 = vmatpush1.bf16.xpose.msra.mxu0 0
      %501 = vmatprep.subr.bf16.mxu0 0
      %502 = vmatpush1.bf16.xpose.msra.mxu0 0
      %503 = vmatprep.mubr.bf16.mxu0 0
      %504 = vmatmul.mubr.bf16.gmra.mrb[0].mxu0 %v467
      %v505 = vpop.f32.mrb[0].mxu0
      %v506 = vadd.f32 0.0, %v505
      %v507 = vpop.f32.mrb[0].mxu0
      %v508 = vpop.f32.mrb[0].mxu0
      %v509 = vpop.f32.mrb[0].mxu0
      %510 = vdwg.mxu0
      %v511 = vmul.f32 %v506, 0.35355338
      %v513 = vlaneseq
      %v514 = vshrl.u32 %v513, 7
      %v515 = vsub.s32 0, %v514
      %v516 = vrot.slane %v432, %v515
      %v518 = vadd.f32 %v511, %v516
      %v519 = vld [vmem:[#allocation2] sm:$0xff]
      %v520 = vsel %vm440, %v518, -inf
      %521 = vmax.xlane.f32.xlu0 %v520
      %v522 = vpop.xlane.xlu0 %521
      %v523 = vmax.f32 %v519, %v522
      %v524 = vsub.f32 %v519, %v523
      %v525 = vmul.f32 %v524, 1.442695
      %v526 = vpow.pop %v525
      %528 = vset.pattern.permute.xlu0 0
      %529 = vperm.xlu0 %528, %v523
      %v530 = vpop.permute.xlu0 %529
      %v532 = vsub.f32 %v518, %v530
      %v533 = vmul.f32 %v532, 1.442695
      %v534 = vpow.pop %v533
      %v535 = vld [vmem:[#allocation3] sm:$0xff]
      %v536 = vmul.f32 %v526, %v535
      %v537 = vsel %vm440, %v534, 0.0
      %538 = vadd.xlane.f32.xlu0 %v537
      %v539 = vpop.xlane.xlu0 %538
      %v540 = vadd.f32 %v536, %v539
      %vm541 = vcmask 7168
      %542 = vst.msk [vmem:[#allocation3] sm:$0xff] %vm541, %v540
      %v543 = vld [vmem:[#allocation4] sm:$0xff]
      %545 = vset.pattern.permute.xlu0 0
      %546 = vperm.xlu0 %545, %v526
      %v547 = vpop.permute.xlu0 %546
      %v549 = vmul.f32 %v547, %v543
      %v550 = vpack.c.bf16 %v534, %v534
      %v552 = vsel %vm440, %v550, 0
      %vm554 = vcmask 1043456
      %v555 = vsel %vm554, %v465, 0
      %557 = vmatprep.subr.bf16.mxu0 0
      %558 = vmatpush1.bf16.msra.mxu0 %v555
      %559 = vmatprep.subr.bf16.mxu0 0
      %560 = vmatpush1.bf16.msra.mxu0 0
      %561 = vmatprep.subr.bf16.mxu0 0
      %562 = vmatpush1.bf16.msra.mxu0 0
      %563 = vmatprep.subr.bf16.mxu0 0
      %564 = vmatpush1.bf16.msra.mxu0 0
      %565 = vmatprep.subr.bf16.mxu0 0
      %566 = vmatpush1.bf16.msra.mxu0 0
      %567 = vmatprep.subr.bf16.mxu0 0
      %568 = vmatpush1.bf16.msra.mxu0 0
      %569 = vmatprep.subr.bf16.mxu0 0
      %570 = vmatpush1.bf16.msra.mxu0 0
      %571 = vmatprep.subr.bf16.mxu0 0
      %572 = vmatpush1.bf16.msra.mxu0 0
      %573 = vmatprep.subr.bf16.mxu0 0
      %574 = vmatpush1.bf16.msra.mxu0 0
      %575 = vmatprep.subr.bf16.mxu0 0
      %576 = vmatpush1.bf16.msra.mxu0 0
      %577 = vmatprep.subr.bf16.mxu0 0
      %578 = vmatpush1.bf16.msra.mxu0 0
      %579 = vmatprep.subr.bf16.mxu0 0
      %580 = vmatpush1.bf16.msra.mxu0 0
      %581 = vmatprep.subr.bf16.mxu0 0
      %582 = vmatpush1.bf16.msra.mxu0 0
      %583 = vmatprep.subr.bf16.mxu0 0
      %584 = vmatpush1.bf16.msra.mxu0 0
      %585 = vmatprep.subr.bf16.mxu0 0
      %586 = vmatpush1.bf16.msra.mxu0 0
      %587 = vmatprep.subr.bf16.mxu0 0
      %588 = vmatpush1.bf16.msra.mxu0 0
      %589 = vmatprep.mubr.bf16.mxu0 0
      %590 = vmatmul.mubr.bf16.gmra.mrb[0].mxu0 %v552
      %v591 = vpop.f32.mrb[0].mxu0
      %v592 = vadd.f32 0.0, %v591
      %v593 = vpop.f32.mrb[0].mxu0
      %v594 = vpop.f32.mrb[0].mxu0
      %v595 = vpop.f32.mrb[0].mxu0
      %596 = vdwg.mxu0
      %v597 = vadd.f32 %v549, %v592
      %598 = vst.msk [vmem:[#allocation4] sm:$0xff] %vm466, %v597
      %599 = vst.msk [vmem:[#allocation2] sm:$0xff] %vm541, %v523
      %v600 = vld [vmem:[%s371] sm:$0xf]
      %v601 = vld [vmem:[%s378] sm:$0xf]
      %v603 = vunpack.c.l.b16 %v600
      %v604 = vpack.c.b16 %v603, %v603
      %605 = vrot.lane.b32.xlu0 %v604, 120
      %v606 = vpop.permute.xlu0 %605
      %v609 = vsel %vm440, %v606, %v601
      %v610 = vld [vmem:[%s385] sm:$0xf]
      %v611 = vld [vmem:[%s392] sm:$0xf]
      %v613 = vunpack.c.l.b16 %v610
      %v614 = vpack.c.b16 %v613, %v613
      %615 = vrot.lane.b32.xlu0 %v614, 88
      %v616 = vpop.permute.xlu0 %615
      %v618 = vunpack.c.l.b16 %v611
      %v619 = vpack.c.b16 %v618, %v618
      %620 = vrot.lane.b32.xlu0 %v619, 96
      %v621 = vpop.permute.xlu0 %620
      %v624 = vsel %vm440, %v616, %v621
      %625 = vrot.lane.b32.xlu0 %v614, 56
      %v626 = vpop.permute.xlu0 %625
      %627 = vrot.lane.b32.xlu0 %v619, 64
      %v628 = vpop.permute.xlu0 %627
      %v631 = vsel %vm440, %v626, %v628
      %v632 = vsel %vm466, %v609, 0
      %v634 = vsel %vm466, %v624, 0
      %636 = vmatprep.subr.bf16.mxu0 0
      %637 = vmatpush1.bf16.xpose.msra.mxu0 %v634
      %638 = vmatprep.subr.bf16.mxu0 0
      %639 = vmatpush1.bf16.xpose.msra.mxu0 0
      %640 = vmatprep.subr.bf16.mxu0 0
      %641 = vmatpush1.bf16.xpose.msra.mxu0 0
      %642 = vmatprep.subr.bf16.mxu0 0
      %643 = vmatpush1.bf16.xpose.msra.mxu0 0
      %644 = vmatprep.subr.bf16.mxu0 0
      %645 = vmatpush1.bf16.xpose.msra.mxu0 0
      %646 = vmatprep.subr.bf16.mxu0 0
      %647 = vmatpush1.bf16.xpose.msra.mxu0 0
      %648 = vmatprep.subr.bf16.mxu0 0
      %649 = vmatpush1.bf16.xpose.msra.mxu0 0
      %650 = vmatprep.subr.bf16.mxu0 0
      %651 = vmatpush1.bf16.xpose.msra.mxu0 0
      %652 = vmatprep.subr.bf16.mxu0 0
      %653 = vmatpush1.bf16.xpose.msra.mxu0 0
      %654 = vmatprep.subr.bf16.mxu0 0
      %655 = vmatpush1.bf16.xpose.msra.mxu0 0
      %656 = vmatprep.subr.bf16.mxu0 0
      %657 = vmatpush1.bf16.xpose.msra.mxu0 0
      %658 = vmatprep.subr.bf16.mxu0 0
      %659 = vmatpush1.bf16.xpose.msra.mxu0 0
      %660 = vmatprep.subr.bf16.mxu0 0
      %661 = vmatpush1.bf16.xpose.msra.mxu0 0
      %662 = vmatprep.subr.bf16.mxu0 0
      %663 = vmatpush1.bf16.xpose.msra.mxu0 0
      %664 = vmatprep.subr.bf16.mxu0 0
      %665 = vmatpush1.bf16.xpose.msra.mxu0 0
      %666 = vmatprep.subr.bf16.mxu0 0
      %667 = vmatpush1.bf16.xpose.msra.mxu0 0
      %668 = vmatprep.mubr.bf16.mxu0 0
      %669 = vmatmul.mubr.bf16.gmra.mrb[0].mxu0 %v632
      %v670 = vpop.f32.mrb[0].mxu0
      %v671 = vadd.f32 0.0, %v670
      %v672 = vpop.f32.mrb[0].mxu0
      %v673 = vpop.f32.mrb[0].mxu0
      %v674 = vpop.f32.mrb[0].mxu0
      %675 = vdwg.mxu0
      %v676 = vmul.f32 %v671, 0.35355338
      %v677 = vadd.f32 %v676, %v516
      %s678 = scalar_lea.vmem [#allocation2], 8
      %v679 = vld [vmem:[%s678] sm:$0xff]
      %v680 = vsel %vm440, %v677, -inf
      %681 = vmax.xlane.f32.xlu0 %v680
      %v682 = vpop.xlane.xlu0 %681
      %v683 = vmax.f32 %v679, %v682
      %v684 = vsub.f32 %v679, %v683
      %v685 = vmul.f32 %v684, 1.442695
      %v686 = vpow.pop %v685
      %688 = vset.pattern.permute.xlu0 0
      %689 = vperm.xlu0 %688, %v683
      %v690 = vpop.permute.xlu0 %689
      %v692 = vsub.f32 %v677, %v690
      %v693 = vmul.f32 %v692, 1.442695
      %v694 = vpow.pop %v693
      %s695 = scalar_lea.vmem [#allocation3], 8
      %v696 = vld [vmem:[%s695] sm:$0xff]
      %v697 = vmul.f32 %v686, %v696
      %v698 = vsel %vm440, %v694, 0.0
      %699 = vadd.xlane.f32.xlu0 %v698
      %v700 = vpop.xlane.xlu0 %699
      %v701 = vadd.f32 %v697, %v700
      %702 = vst.msk [vmem:[%s695] sm:$0xff] %vm541, %v701
      %s703 = scalar_lea.vmem [#allocation4], 8
      %v704 = vld [vmem:[%s703] sm:$0xff]
      %706 = vset.pattern.permute.xlu0 0
      %707 = vperm.xlu0 %706, %v686
      %v708 = vpop.permute.xlu0 %707
      %v710 = vmul.f32 %v708, %v704
      %v711 = vpack.c.bf16 %v694, %v694
      %v713 = vsel %vm440, %v711, 0
      %v715 = vsel %vm554, %v631, 0
      %717 = vmatprep.subr.bf16.mxu0 0
      %718 = vmatpush1.bf16.msra.mxu0 %v715
      %719 = vmatprep.subr.bf16.mxu0 0
      %720 = vmatpush1.bf16.msra.mxu0 0
      %721 = vmatprep.subr.bf16.mxu0 0
      %722 = vmatpush1.bf16.msra.mxu0 0
      %723 = vmatprep.subr.bf16.mxu0 0
      %724 = vmatpush1.bf16.msra.mxu0 0
      %725 = vmatprep.subr.bf16.mxu0 0
      %726 = vmatpush1.bf16.msra.mxu0 0
      %727 = vmatprep.subr.bf16.mxu0 0
      %728 = vmatpush1.bf16.msra.mxu0 0
      %729 = vmatprep.subr.bf16.mxu0 0
      %730 = vmatpush1.bf16.msra.mxu0 0
      %731 = vmatprep.subr.bf16.mxu0 0
      %732 = vmatpush1.bf16.msra.mxu0 0
      %733 = vmatprep.subr.bf16.mxu0 0
      %734 = vmatpush1.bf16.msra.mxu0 0
      %735 = vmatprep.subr.bf16.mxu0 0
      %736 = vmatpush1.bf16.msra.mxu0 0
      %737 = vmatprep.subr.bf16.mxu0 0
      %738 = vmatpush1.bf16.msra.mxu0 0
      %739 = vmatprep.subr.bf16.mxu0 0
      %740 = vmatpush1.bf16.msra.mxu0 0
      %741 = vmatprep.subr.bf16.mxu0 0
      %742 = vmatpush1.bf16.msra.mxu0 0
      %743 = vmatprep.subr.bf16.mxu0 0
      %744 = vmatpush1.bf16.msra.mxu0 0
      %745 = vmatprep.subr.bf16.mxu0 0
      %746 = vmatpush1.bf16.msra.mxu0 0
      %747 = vmatprep.subr.bf16.mxu0 0
      %748 = vmatpush1.bf16.msra.mxu0 0
      %749 = vmatprep.mubr.bf16.mxu0 0
      %750 = vmatmul.mubr.bf16.gmra.mrb[0].mxu0 %v713
      %v751 = vpop.f32.mrb[0].mxu0
      %v752 = vadd.f32 0.0, %v751
      %v753 = vpop.f32.mrb[0].mxu0
      %v754 = vpop.f32.mrb[0].mxu0
      %v755 = vpop.f32.mrb[0].mxu0
      %756 = vdwg.mxu0
      %v757 = vadd.f32 %v710, %v752
      %758 = vst.msk [vmem:[%s703] sm:$0xff] %vm466, %v757
      %759 = vst.msk [vmem:[%s678] sm:$0xff] %vm541, %v683
      %v760 = vld [vmem:[%s371] sm:$0xf]
      %v761 = vld [vmem:[%s378] sm:$0xf]
      %v763 = vunpack.c.l.b16 %v760
      %v764 = vpack.c.b16 %v763, %v763
      %765 = vrot.lane.b32.xlu0 %v764, 112
      %v766 = vpop.permute.xlu0 %765
      %v768 = vunpack.c.l.b16 %v761
      %v769 = vpack.c.b16 %v768, %v768
      %770 = vrot.lane.b32.xlu0 %v769, 120
      %v771 = vpop.permute.xlu0 %770
      %v774 = vsel %vm440, %v766, %v771
      %v775 = vld [vmem:[%s385] sm:$0xf]
      %v776 = vld [vmem:[%s392] sm:$0xf]
      %v778 = vunpack.c.l.b16 %v775
      %v779 = vpack.c.b16 %v778, %v778
      %780 = vrot.lane.b32.xlu0 %v779, 80
      %v781 = vpop.permute.xlu0 %780
      %v783 = vunpack.c.l.b16 %v776
      %v784 = vpack.c.b16 %v783, %v783
      %785 = vrot.lane.b32.xlu0 %v784, 88
      %v786 = vpop.permute.xlu0 %785
      %v789 = vsel %vm440, %v781, %v786
      %790 = vrot.lane.b32.xlu0 %v779, 48
      %v791 = vpop.permute.xlu0 %790
      %792 = vrot.lane.b32.xlu0 %v784, 56
      %v793 = vpop.permute.xlu0 %792
      %v796 = vsel %vm440, %v791, %v793
      %v797 = vsel %vm466, %v774, 0
      %v799 = vsel %vm466, %v789, 0
      %801 = vmatprep.subr.bf16.mxu0 0
      %802 = vmatpush1.bf16.xpose.msra.mxu0 %v799
      %803 = vmatprep.subr.bf16.mxu0 0
      %804 = vmatpush1.bf16.xpose.msra.mxu0 0
      %805 = vmatprep.subr.bf16.mxu0 0
      %806 = vmatpush1.bf16.xpose.msra.mxu0 0
      %807 = vmatprep.subr.bf16.mxu0 0
      %808 = vmatpush1.bf16.xpose.msra.mxu0 0
      %809 = vmatprep.subr.bf16.mxu0 0
      %810 = vmatpush1.bf16.xpose.msra.mxu0 0
      %811 = vmatprep.subr.bf16.mxu0 0
      %812 = vmatpush1.bf16.xpose.msra.mxu0 0
      %813 = vmatprep.subr.bf16.mxu0 0
      %814 = vmatpush1.bf16.xpose.msra.mxu0 0
      %815 = vmatprep.subr.bf16.mxu0 0
      %816 = vmatpush1.bf16.xpose.msra.mxu0 0
      %817 = vmatprep.subr.bf16.mxu0 0
      %818 = vmatpush1.bf16.xpose.msra.mxu0 0
      %819 = vmatprep.subr.bf16.mxu0 0
      %820 = vmatpush1.bf16.xpose.msra.mxu0 0
      %821 = vmatprep.subr.bf16.mxu0 0
      %822 = vmatpush1.bf16.xpose.msra.mxu0 0
      %823 = vmatprep.subr.bf16.mxu0 0
      %824 = vmatpush1.bf16.xpose.msra.mxu0 0
      %825 = vmatprep.subr.bf16.mxu0 0
      %826 = vmatpush1.bf16.xpose.msra.mxu0 0
      %827 = vmatprep.subr.bf16.mxu0 0
      %828 = vmatpush1.bf16.xpose.msra.mxu0 0
      %829 = vmatprep.subr.bf16.mxu0 0
      %830 = vmatpush1.bf16.xpose.msra.mxu0 0
      %831 = vmatprep.subr.bf16.mxu0 0
      %832 = vmatpush1.bf16.xpose.msra.mxu0 0
      %833 = vmatprep.mubr.bf16.mxu0 0
      %834 = vmatmul.mubr.bf16.gmra.mrb[0].mxu0 %v797
      %v835 = vpop.f32.mrb[0].mxu0
      %v836 = vadd.f32 0.0, %v835
      %v837 = vpop.f32.mrb[0].mxu0
      %v838 = vpop.f32.mrb[0].mxu0
      %v839 = vpop.f32.mrb[0].mxu0
      %840 = vdwg.mxu0
      %v841 = vmul.f32 %v836, 0.35355338
      %v842 = vadd.f32 %v841, %v516
      %s843 = scalar_lea.vmem [#allocation2], 16
      %v844 = vld [vmem:[%s843] sm:$0xff]
      %v845 = vsel %vm440, %v842, -inf
      %846 = vmax.xlane.f32.xlu0 %v845
      %v847 = vpop.xlane.xlu0 %846
      %v848 = vmax.f32 %v844, %v847
      %v849 = vsub.f32 %v844, %v848
      %v850 = vmul.f32 %v849, 1.442695
      %v851 = vpow.pop %v850
      %853 = vset.pattern.permute.xlu0 0
      %854 = vperm.xlu0 %853, %v848
      %v855 = vpop.permute.xlu0 %854
      %v857 = vsub.f32 %v842, %v855
      %v858 = vmul.f32 %v857, 1.442695
      %v859 = vpow.pop %v858
      %s860 = scalar_lea.vmem [#allocation3], 16
      %v861 = vld [vmem:[%s860] sm:$0xff]
      %v862 = vmul.f32 %v851, %v861
      %v863 = vsel %vm440, %v859, 0.0
      %864 = vadd.xlane.f32.xlu0 %v863
      %v865 = vpop.xlane.xlu0 %864
      %v866 = vadd.f32 %v862, %v865
      %867 = vst.msk [vmem:[%s860] sm:$0xff] %vm541, %v866
      %s868 = scalar_lea.vmem [#allocation4], 16
      %v869 = vld [vmem:[%s868] sm:$0xff]
      %871 = vset.pattern.permute.xlu0 0
      %872 = vperm.xlu0 %871, %v851
      %v873 = vpop.permute.xlu0 %872
      %v875 = vmul.f32 %v873, %v869
      %v876 = vpack.c.bf16 %v859, %v859
      %v878 = vsel %vm440, %v876, 0
      %v880 = vsel %vm554, %v796, 0
      %882 = vmatprep.subr.bf16.mxu0 0
      %883 = vmatpush1.bf16.msra.mxu0 %v880
      %884 = vmatprep.subr.bf16.mxu0 0
      %885 = vmatpush1.bf16.msra.mxu0 0
      %886 = vmatprep.subr.bf16.mxu0 0
      %887 = vmatpush1.bf16.msra.mxu0 0
      %888 = vmatprep.subr.bf16.mxu0 0
      %889 = vmatpush1.bf16.msra.mxu0 0
      %890 = vmatprep.subr.bf16.mxu0 0
      %891 = vmatpush1.bf16.msra.mxu0 0
      %892 = vmatprep.subr.bf16.mxu0 0
      %893 = vmatpush1.bf16.msra.mxu0 0
      %894 = vmatprep.subr.bf16.mxu0 0
      %895 = vmatpush1.bf16.msra.mxu0 0
      %896 = vmatprep.subr.bf16.mxu0 0
      %897 = vmatpush1.bf16.msra.mxu0 0
      %898 = vmatprep.subr.bf16.mxu0 0
      %899 = vmatpush1.bf16.msra.mxu0 0
      %900 = vmatprep.subr.bf16.mxu0 0
      %901 = vmatpush1.bf16.msra.mxu0 0
      %902 = vmatprep.subr.bf16.mxu0 0
      %903 = vmatpush1.bf16.msra.mxu0 0
      %904 = vmatprep.subr.bf16.mxu0 0
      %905 = vmatpush1.bf16.msra.mxu0 0
      %906 = vmatprep.subr.bf16.mxu0 0
      %907 = vmatpush1.bf16.msra.mxu0 0
      %908 = vmatprep.subr.bf16.mxu0 0
      %909 = vmatpush1.bf16.msra.mxu0 0
      %910 = vmatprep.subr.bf16.mxu0 0
      %911 = vmatpush1.bf16.msra.mxu0 0
      %912 = vmatprep.subr.bf16.mxu0 0
      %913 = vmatpush1.bf16.msra.mxu0 0
      %914 = vmatprep.mubr.bf16.mxu0 0
      %915 = vmatmul.mubr.bf16.gmra.mrb[0].mxu0 %v878
      %v916 = vpop.f32.mrb[0].mxu0
      %v917 = vadd.f32 0.0, %v916
      %v918 = vpop.f32.mrb[0].mxu0
      %v919 = vpop.f32.mrb[0].mxu0
      %v920 = vpop.f32.mrb[0].mxu0
      %921 = vdwg.mxu0
      %v922 = vadd.f32 %v875, %v917
      %923 = vst.msk [vmem:[%s868] sm:$0xff] %vm466, %v922
      %924 = vst.msk [vmem:[%s843] sm:$0xff] %vm541, %v848
      %v925 = vld [vmem:[%s371] sm:$0xf]
      %v926 = vld [vmem:[%s378] sm:$0xf]
      %v928 = vunpack.c.l.b16 %v925
      %v929 = vpack.c.b16 %v928, %v928
      %930 = vrot.lane.b32.xlu0 %v929, 104
      %v931 = vpop.permute.xlu0 %930
      %v933 = vunpack.c.l.b16 %v926
      %v934 = vpack.c.b16 %v933, %v933
      %935 = vrot.lane.b32.xlu0 %v934, 112
      %v936 = vpop.permute.xlu0 %935
      %v939 = vsel %vm440, %v931, %v936
      %v940 = vld [vmem:[%s385] sm:$0xf]
      %v941 = vld [vmem:[%s392] sm:$0xf]
      %v943 = vunpack.c.l.b16 %v940
      %v944 = vpack.c.b16 %v943, %v943
      %945 = vrot.lane.b32.xlu0 %v944, 72
      %v946 = vpop.permute.xlu0 %945
      %v948 = vunpack.c.l.b16 %v941
      %v949 = vpack.c.b16 %v948, %v948
      %950 = vrot.lane.b32.xlu0 %v949, 80
      %v951 = vpop.permute.xlu0 %950
      %v954 = vsel %vm440, %v946, %v951
      %955 = vrot.lane.b32.xlu0 %v944, 40
      %v956 = vpop.permute.xlu0 %955
      %957 = vrot.lane.b32.xlu0 %v949, 48
      %v958 = vpop.permute.xlu0 %957
      %v961 = vsel %vm440, %v956, %v958
      %v962 = vsel %vm466, %v939, 0
      %v964 = vsel %vm466, %v954, 0
      %966 = vmatprep.subr.bf16.mxu0 0
      %967 = vmatpush1.bf16.xpose.msra.mxu0 %v964
      %968 = vmatprep.subr.bf16.mxu0 0
      %969 = vmatpush1.bf16.xpose.msra.mxu0 0
      %970 = vmatprep.subr.bf16.mxu0 0
      %971 = vmatpush1.bf16.xpose.msra.mxu0 0
      %972 = vmatprep.subr.bf16.mxu0 0
      %973 = vmatpush1.bf16.xpose.msra.mxu0 0
      %974 = vmatprep.subr.bf16.mxu0 0
      %975 = vmatpush1.bf16.xpose.msra.mxu0 0
      %976 = vmatprep.subr.bf16.mxu0 0
      %977 = vmatpush1.bf16.xpose.msra.mxu0 0
      %978 = vmatprep.subr.bf16.mxu0 0
      %979 = vmatpush1.bf16.xpose.msra.mxu0 0
      %980 = vmatprep.subr.bf16.mxu0 0
      %981 = vmatpush1.bf16.xpose.msra.mxu0 0
      %982 = vmatprep.subr.bf16.mxu0 0
      %983 = vmatpush1.bf16.xpose.msra.mxu0 0
      %984 = vmatprep.subr.bf16.mxu0 0
      %985 = vmatpush1.bf16.xpose.msra.mxu0 0
      %986 = vmatprep.subr.bf16.mxu0 0
      %987 = vmatpush1.bf16.xpose.msra.mxu0 0
      %988 = vmatprep.subr.bf16.mxu0 0
      %989 = vmatpush1.bf16.xpose.msra.mxu0 0
      %990 = vmatprep.subr.bf16.mxu0 0
      %991 = vmatpush1.bf16.xpose.msra.mxu0 0
      %992 = vmatprep.subr.bf16.mxu0 0
      %993 = vmatpush1.bf16.xpose.msra.mxu0 0
      %994 = vmatprep.subr.bf16.mxu0 0
      %995 = vmatpush1.bf16.xpose.msra.mxu0 0
      %996 = vmatprep.subr.bf16.mxu0 0
      %997 = vmatpush1.bf16.xpose.msra.mxu0 0
      %998 = vmatprep.mubr.bf16.mxu0 0
      %999 = vmatmul.mubr.bf16.gmra.mrb[0].mxu0 %v962
      %v1000 = vpop.f32.mrb[0].mxu0
      %v1001 = vadd.f32 0.0, %v1000
      %v1002 = vpop.f32.mrb[0].mxu0
      %v1003 = vpop.f32.mrb[0].mxu0
      %v1004 = vpop.f32.mrb[0].mxu0
      %1005 = vdwg.mxu0
      %v1006 = vmul.f32 %v1001, 0.35355338
      %v1007 = vadd.f32 %v1006, %v516
      %s1008 = scalar_lea.vmem [#allocation2], 24
      %v1009 = vld [vmem:[%s1008] sm:$0xff]
      %v1010 = vsel %vm440, %v1007, -inf
      %1011 = vmax.xlane.f32.xlu0 %v1010
      %v1012 = vpop.xlane.xlu0 %1011
      %v1013 = vmax.f32 %v1009, %v1012
      %v1014 = vsub.f32 %v1009, %v1013
      %v1015 = vmul.f32 %v1014, 1.442695
      %v1016 = vpow.pop %v1015
      %1018 = vset.pattern.permute.xlu0 0
      %1019 = vperm.xlu0 %1018, %v1013
      %v1020 = vpop.permute.xlu0 %1019
      %v1022 = vsub.f32 %v1007, %v1020
      %v1023 = vmul.f32 %v1022, 1.442695
      %v1024 = vpow.pop %v1023
      %s1025 = scalar_lea.vmem [#allocation3], 24
      %v1026 = vld [vmem:[%s1025] sm:$0xff]
      %v1027 = vmul.f32 %v1016, %v1026
      %v1028 = vsel %vm440, %v1024, 0.0
      %1029 = vadd.xlane.f32.xlu0 %v1028
      %v1030 = vpop.xlane.xlu0 %1029
      %v1031 = vadd.f32 %v1027, %v1030
      %1032 = vst.msk [vmem:[%s1025] sm:$0xff] %vm541, %v1031
      %s1033 = scalar_lea.vmem [#allocation4], 24
      %v1034 = vld [vmem:[%s1033] sm:$0xff]
      %1036 = vset.pattern.permute.xlu0 0
      %1037 = vperm.xlu0 %1036, %v1016
      %v1038 = vpop.permute.xlu0 %1037
      %v1040 = vmul.f32 %v1038, %v1034
      %v1041 = vpack.c.bf16 %v1024, %v1024
      %v1043 = vsel %vm440, %v1041, 0
      %v1045 = vsel %vm554, %v961, 0
      %1047 = vmatprep.subr.bf16.mxu0 0
      %1048 = vmatpush1.bf16.msra.mxu0 %v1045
      %1049 = vmatprep.subr.bf16.mxu0 0
      %1050 = vmatpush1.bf16.msra.mxu0 0
      %1051 = vmatprep.subr.bf16.mxu0 0
      %1052 = vmatpush1.bf16.msra.mxu0 0
      %1053 = vmatprep.subr.bf16.mxu0 0
      %1054 = vmatpush1.bf16.msra.mxu0 0
      %1055 = vmatprep.subr.bf16.mxu0 0
      %1056 = vmatpush1.bf16.msra.mxu0 0
      %1057 = vmatprep.subr.bf16.mxu0 0
      %1058 = vmatpush1.bf16.msra.mxu0 0
      %1059 = vmatprep.subr.bf16.mxu0 0
      %1060 = vmatpush1.bf16.msra.mxu0 0
      %1061 = vmatprep.subr.bf16.mxu0 0
      %1062 = vmatpush1.bf16.msra.mxu0 0
      %1063 = vmatprep.subr.bf16.mxu0 0
      %1064 = vmatpush1.bf16.msra.mxu0 0
      %1065 = vmatprep.subr.bf16.mxu0 0
      %1066 = vmatpush1.bf16.msra.mxu0 0
      %1067 = vmatprep.subr.bf16.mxu0 0
      %1068 = vmatpush1.bf16.msra.mxu0 0
      %1069 = vmatprep.subr.bf16.mxu0 0
      %1070 = vmatpush1.bf16.msra.mxu0 0
      %1071 = vmatprep.subr.bf16.mxu0 0
      %1072 = vmatpush1.bf16.msra.mxu0 0
      %1073 = vmatprep.subr.bf16.mxu0 0
      %1074 = vmatpush1.bf16.msra.mxu0 0
      %1075 = vmatprep.subr.bf16.mxu0 0
      %1076 = vmatpush1.bf16.msra.mxu0 0
      %1077 = vmatprep.subr.bf16.mxu0 0
      %1078 = vmatpush1.bf16.msra.mxu0 0
      %1079 = vmatprep.mubr.bf16.mxu0 0
      %1080 = vmatmul.mubr.bf16.gmra.mrb[0].mxu0 %v1043
      %v1081 = vpop.f32.mrb[0].mxu0
      %v1082 = vadd.f32 0.0, %v1081
      %v1083 = vpop.f32.mrb[0].mxu0
      %v1084 = vpop.f32.mrb[0].mxu0
      %v1085 = vpop.f32.mrb[0].mxu0
      %1086 = vdwg.mxu0
      %v1087 = vadd.f32 %v1040, %v1082
      %1088 = vst.msk [vmem:[%s1033] sm:$0xff] %vm466, %v1087
      %1089 = vst.msk [vmem:[%s1008] sm:$0xff] %vm541, %v1013
      // Predicated region
      $region45: #{bert_polar_forward.11} parent=39 // pred_check
        %p1090 = pneg %p414
      $region46: #{bert_polar_forward.11} parent=39 // pred_check_branch
        %1092 = sbr.rel (%p1090) target = $region48
      $region47: #{bert_polar_forward.11} parent=39 // pred_region
        %v1093 = vld [vmem:[#allocation3] sm:$0xff]
        %v1094 = vrcp.pop %v1093
        %v1095 = vld [vmem:[#allocation4] sm:$0xff]
        %1097 = vset.pattern.permute.xlu0 0
        %1098 = vperm.xlu0 %1097, %v1094
        %v1099 = vpop.permute.xlu0 %1098
        %v1101 = vmul.f32 %v1095, %v1099
        %v1102 = vld [vmem:[%s695] sm:$0xff]
        %v1103 = vrcp.pop %v1102
        %v1104 = vld [vmem:[%s703] sm:$0xff]
        %1106 = vset.pattern.permute.xlu0 0
        %1107 = vperm.xlu0 %1106, %v1103
        %v1108 = vpop.permute.xlu0 %1107
        %v1110 = vmul.f32 %v1104, %v1108
        %v1111 = vld [vmem:[%s860] sm:$0xff]
        %v1112 = vrcp.pop %v1111
        %v1113 = vld [vmem:[%s868] sm:$0xff]
        %1115 = vset.pattern.permute.xlu0 0
        %1116 = vperm.xlu0 %1115, %v1112
        %v1117 = vpop.permute.xlu0 %1116
        %v1119 = vmul.f32 %v1113, %v1117
        %v1120 = vld [vmem:[%s1025] sm:$0xff]
        %v1121 = vrcp.pop %v1120
        %v1122 = vld [vmem:[%s1033] sm:$0xff]
        %1124 = vset.pattern.permute.xlu0 0
        %1125 = vperm.xlu0 %1124, %v1121
        %v1126 = vpop.permute.xlu0 %1125
        %v1128 = vmul.f32 %v1122, %v1126
        %1130 = vrot.lane.b32.xlu0 %v1110, 8
        %v1131 = vpop.permute.xlu0 %1130
        %1134 = vrot.lane.b32.xlu0 %v1119, 16
        %v1135 = vpop.permute.xlu0 %1134
        %1138 = vrot.lane.b32.xlu0 %v1128, 24
        %v1139 = vpop.permute.xlu0 %1138
        %v1141 = vsel %vm440, %v1101, %v1131
        %v1142 = vsel %vm466, %v1141, %v1135
        %vm1143 = vcmask 195584
        %v1144 = vsel %vm1143, %v1142, %v1139
        %v1145 = vpack.c.bf16 %v1144, %v1144
        %vm1146 = vcmask 257024
        %1147 = vst.msk [vmem:[%s405] sm:$0xf] %vm1146, %v1145
        %1149 = vrot.lane.b32.xlu0 %v1101, 120
        %v1150 = vpop.permute.xlu0 %1149
        %1152 = vrot.lane.b32.xlu0 %v1119, 8
        %v1153 = vpop.permute.xlu0 %1152
        %1155 = vrot.lane.b32.xlu0 %v1128, 16
        %v1156 = vpop.permute.xlu0 %1155
        %v1158 = vsel %vm440, %v1150, %v1110
        %v1159 = vsel %vm466, %v1158, %v1153
        %v1160 = vsel %vm1143, %v1159, %v1156
        %v1161 = vpack.c.bf16 %v1160, %v1160
        %1162 = vst.msk [vmem:[%s412] sm:$0xf] %vm1146, %v1161
      $region48: #{bert_polar_forward.11} parent=39 // pred_fallthru
        _
      %p1163 = scmp.lt.s32.totalorder %s23, 1
      %s1164 = scalar_select %p1163, %s23, 1
      %p1165 = scmp.lt.s32.totalorder %s24, 0
      %s1166 = scalar_select %p1165, %s24, 0
      %s1167 = sadd.s32 %s1166, %s1164
      %s1168 = smul.addr %s1167, 4
      %s1169 = scalar_lea.vmem %s5, %s1168
      %p1170 = scmp.lt.s32.totalorder %s23, 1
      %s1171 = scalar_select %p1170, %s23, 1
      %p1172 = scmp.lt.s32.totalorder %s24, 0
      %s1173 = scalar_select %p1172, %s24, 0
      %s1174 = sadd.s32 %s1173, %s1171
      %s1175 = smul.addr %s1174, 4
      %s1176 = scalar_lea.vmem %s6, %s1175
      // Predicated region
      $region49: #{bert_polar_forward.11} parent=39 // pred_check
        %p1177 = pneg %p197
      $region50: #{bert_polar_forward.11} parent=39 // pred_check_branch
        %1179 = sbr.rel (%p1177) target = $region52
      $region51: #{bert_polar_forward.11} parent=39 // pred_region
        _
      $region52: #{bert_polar_forward.11} parent=39 // pred_fallthru
        _
      // Predicated region
      $region53: #{bert_polar_forward.11} parent=39 // pred_check
        %p1180 = pneg %p225
      $region54: #{bert_polar_forward.11} parent=39 // pred_check_branch
        %1182 = sbr.rel (%p1180) target = $region56
      $region55: #{bert_polar_forward.11} parent=39 // pred_region
        _
      $region56: #{bert_polar_forward.11} parent=39 // pred_fallthru
        _
    $region40: #{bert_polar_forward.11} parent=5 // pred_fallthru
      _
    %p1183 = scmp.le.s32.totalorder 2, %s13
    // Predicated region
    $region57: #{bert_polar_forward.11} parent=5 // pred_check
      %p1184 = pneg %p1183
    $region58: #{bert_polar_forward.11} parent=5 // pred_check_branch
      %1186 = sbr.rel (%p1184) target = $region60
    $region59: #{bert_polar_forward.11} parent=5 // pred_region
      %s1187 = ssub.s32 %s13, 2
      // Predicated region
      $region61: #{bert_polar_forward.11} parent=59 // pred_check
        %p1188 = pneg %p203
      $region62: #{bert_polar_forward.11} parent=59 // pred_check_branch
        %1190 = sbr.rel (%p1188) target = $region64
      $region63: #{bert_polar_forward.11} parent=59 // pred_region
        %p1191 = scmp.lt.s32.totalorder %s26, 1
        %s1192 = scalar_select %p1191, %s26, 1
        %p1193 = scmp.lt.s32.totalorder %s27, 0
        %s1194 = scalar_select %p1193, %s27, 0
        %s1195 = sadd.s32 %s1194, %s1192
        %s1196 = smul.addr %s1195, 4
        %s1197 = scalar_lea.vmem %s5, %s1196
      $region64: #{bert_polar_forward.11} parent=59 // pred_fallthru
        _
      // Predicated region
      $region65: #{bert_polar_forward.11} parent=59 // pred_check
        %p1198 = pneg %p231
      $region66: #{bert_polar_forward.11} parent=59 // pred_check_branch
        %1200 = sbr.rel (%p1198) target = $region68
      $region67: #{bert_polar_forward.11} parent=59 // pred_region
        %p1201 = scmp.lt.s32.totalorder %s26, 1
        %s1202 = scalar_select %p1201, %s26, 1
        %p1203 = scmp.lt.s32.totalorder %s27, 0
        %s1204 = scalar_select %p1203, %s27, 0
        %s1205 = sadd.s32 %s1204, %s1202
        %s1206 = smul.addr %s1205, 4
        %s1207 = scalar_lea.vmem %s6, %s1206
      $region68: #{bert_polar_forward.11} parent=59 // pred_fallthru
        _
    $region60: #{bert_polar_forward.11} parent=5 // pred_fallthru
      _
  $region6: #{bert_polar_forward.11} parent=0 // loop_footer
    %s17 = sadd.s32 1, %s13
  $region7: #{bert_polar_forward.11} parent=0 // loop_footer_branch
    %12 = sbr.rel target = $region3
  $region8: #{bert_polar_forward.11} parent=0 // loop_exit
    _

// kernel: bert_polar_forward.14
$region0: #{bert_polar_forward.14}
  #allocation0 [shape = 'u32[]', space=smem, size = 0x4, offset = 0x4, fixed_abs, tag = 'smem constant byte address 0x4 - core index']
  #allocation1 [shape = 'u32[144,128]{1,0:T(1,128)}', space=vmem, size = 0x12000, scoped, tag = 'internal scratch']
  %s0 = inlined_call_operand.vmem [shape: bf16[16,128], index: 0, kind: input, shape index: {}]
  %s1 = inlined_call_operand.vmem [shape: bf16[16,128], index: 1, kind: input, shape index: {}]
  %s2 = inlined_call_operand.vmem [shape: bf16[128,32], index: 2, kind: input, shape index: {}]
  %s3 = inlined_call_operand.vmem [shape: bf16[128,32], index: 3, kind: input, shape index: {}]
  %s4 = inlined_call_operand.vmem [shape: f32[1,32], index: 4, kind: input, shape index: {}]
  %s5 = inlined_call_operand.vmem [shape: f32[1,32], index: 5, kind: input, shape index: {}]
  %s6 = inlined_call_operand.vmem [shape: f32[16,32], index: 6, kind: input, shape index: {}]
  %s7 = inlined_call_operand.vmem [shape: f32[16,32], index: 7, kind: input, shape index: {}]
  %s8 = inlined_call_operand.vmem [shape: f32[16,32], index: 8, kind: output, shape index: {0}]
  %s9 = inlined_call_operand.vmem [shape: f32[16,32], index: 9, kind: output, shape index: {1}]
  %10 = xla_tuple %s8, %s9
  %s11 = sld [smem:[#allocation0]]
  $region50: #{bert_polar_forward.14} parent=0
    _
  %s13 = ssub.s32 1, %s11
  %s14 = scalar_select 0, %s13, %s11
  // Predicated region
  $region2: #{bert_polar_forward.14} parent=0 // pred_check
    _
  $region3: #{bert_polar_forward.14} parent=0 // pred_check_branch
    %16 = sbr.rel (0) target = $region5
  $region4: #{bert_polar_forward.14} parent=0 // pred_region
    _
  $region5: #{bert_polar_forward.14} parent=0 // pred_fallthru
    _
  // Predicated region
  $region6: #{bert_polar_forward.14} parent=0 // pred_check
    _
  $region7: #{bert_polar_forward.14} parent=0 // pred_check_branch
    %18 = sbr.rel (0) target = $region9
  $region8: #{bert_polar_forward.14} parent=0 // pred_region
    _
  $region9: #{bert_polar_forward.14} parent=0 // pred_fallthru
    _
  // Predicated region
  $region10: #{bert_polar_forward.14} parent=0 // pred_check
    _
  $region11: #{bert_polar_forward.14} parent=0 // pred_check_branch
    %20 = sbr.rel (0) target = $region13
  $region12: #{bert_polar_forward.14} parent=0 // pred_region
    _
  $region13: #{bert_polar_forward.14} parent=0 // pred_fallthru
    _
  // Predicated region
  $region14: #{bert_polar_forward.14} parent=0 // pred_check
    _
  $region15: #{bert_polar_forward.14} parent=0 // pred_check_branch
    %22 = sbr.rel (0) target = $region17
  $region16: #{bert_polar_forward.14} parent=0 // pred_region
    _
  $region17: #{bert_polar_forward.14} parent=0 // pred_fallthru
    _
  // Predicated region
  $region18: #{bert_polar_forward.14} parent=0 // pred_check
    _
  $region19: #{bert_polar_forward.14} parent=0 // pred_check_branch
    %24 = sbr.rel (0) target = $region21
  $region20: #{bert_polar_forward.14} parent=0 // pred_region
    _
  $region21: #{bert_polar_forward.14} parent=0 // pred_fallthru
    _
  // Predicated region
  $region22: #{bert_polar_forward.14} parent=0 // pred_check
    _
  $region23: #{bert_polar_forward.14} parent=0 // pred_check_branch
    %26 = sbr.rel (0) target = $region25
  $region24: #{bert_polar_forward.14} parent=0 // pred_region
    _
  $region25: #{bert_polar_forward.14} parent=0 // pred_fallthru
    _
  // Predicated region
  $region26: #{bert_polar_forward.14} parent=0 // pred_check
    _
  $region27: #{bert_polar_forward.14} parent=0 // pred_check_branch
    %28 = sbr.rel (0) target = $region29
  $region28: #{bert_polar_forward.14} parent=0 // pred_region
    _
  $region29: #{bert_polar_forward.14} parent=0 // pred_fallthru
    _
  // Predicated region
  $region30: #{bert_polar_forward.14} parent=0 // pred_check
    _
  $region31: #{bert_polar_forward.14} parent=0 // pred_check_branch
    %30 = sbr.rel (0) target = $region33
  $region32: #{bert_polar_forward.14} parent=0 // pred_region
    _
  $region33: #{bert_polar_forward.14} parent=0 // pred_fallthru
    _
  %v32 = vld [vmem:[%s0] sm:$0xf]
  %v33 = vld [vmem:[%s0 + $0x4] sm:$0xf]
  %v34 = vld [vmem:[%s1] sm:$0xf]
  %v35 = vld [vmem:[%s1 + $0x4] sm:$0xf]
  %v36 = vld [vmem:[%s2] sm:$0xf]
  %v37 = vld [vmem:[%s2 + $0x4] sm:$0xf]
  %v38 = vld [vmem:[%s2 + $0x8] sm:$0xf]
  %v39 = vld [vmem:[%s2 + $0xc] sm:$0xf]
  %v40 = vld [vmem:[%s2 + $0x10] sm:$0xf]
  %v41 = vld [vmem:[%s2 + $0x14] sm:$0xf]
  %v42 = vld [vmem:[%s2 + $0x18] sm:$0xf]
  %v43 = vld [vmem:[%s2 + $0x1c] sm:$0xf]
  %v44 = vld [vmem:[%s2 + $0x20] sm:$0xf]
  %v45 = vld [vmem:[%s2 + $0x24] sm:$0xf]
  %v46 = vld [vmem:[%s2 + $0x28] sm:$0xf]
  %v47 = vld [vmem:[%s2 + $0x2c] sm:$0xf]
  %v48 = vld [vmem:[%s2 + $0x30] sm:$0xf]
  %v49 = vld [vmem:[%s2 + $0x34] sm:$0xf]
  %v50 = vld [vmem:[%s2 + $0x38] sm:$0xf]
  %v51 = vld [vmem:[%s2 + $0x3c] sm:$0xf]
  %v52 = vld [vmem:[%s3] sm:$0xf]
  %v53 = vld [vmem:[%s3 + $0x4] sm:$0xf]
  %v54 = vld [vmem:[%s3 + $0x8] sm:$0xf]
  %v55 = vld [vmem:[%s3 + $0xc] sm:$0xf]
  %v56 = vld [vmem:[%s3 + $0x10] sm:$0xf]
  %v57 = vld [vmem:[%s3 + $0x14] sm:$0xf]
  %v58 = vld [vmem:[%s3 + $0x18] sm:$0xf]
  %v59 = vld [vmem:[%s3 + $0x1c] sm:$0xf]
  %v60 = vld [vmem:[%s3 + $0x20] sm:$0xf]
  %v61 = vld [vmem:[%s3 + $0x24] sm:$0xf]
  %v62 = vld [vmem:[%s3 + $0x28] sm:$0xf]
  %v63 = vld [vmem:[%s3 + $0x2c] sm:$0xf]
  %v64 = vld [vmem:[%s3 + $0x30] sm:$0xf]
  %v65 = vld [vmem:[%s3 + $0x34] sm:$0xf]
  %v66 = vld [vmem:[%s3 + $0x38] sm:$0xf]
  %v67 = vld [vmem:[%s3 + $0x3c] sm:$0xf]
  %v70 = vunpack.c.l.b16 %v32
  %v71 = vunpack.c.l.b16 %v33
  %v72 = vpack.c.b16 %v71, %v70
  %v90 = vunpack.c.l.b16 %v36
  %v91 = vunpack.c.l.b16 %v37
  %v92 = vunpack.c.l.b16 %v38
  %v93 = vunpack.c.l.b16 %v39
  %v94 = vunpack.c.l.b16 %v40
  %v95 = vunpack.c.l.b16 %v41
  %v96 = vunpack.c.l.b16 %v42
  %v97 = vunpack.c.l.b16 %v43
  %v98 = vunpack.c.l.b16 %v44
  %v99 = vunpack.c.l.b16 %v45
  %v100 = vunpack.c.l.b16 %v46
  %v101 = vunpack.c.l.b16 %v47
  %v102 = vunpack.c.l.b16 %v48
  %v103 = vunpack.c.l.b16 %v49
  %v104 = vunpack.c.l.b16 %v50
  %v105 = vunpack.c.l.b16 %v51
  %v106 = vpack.c.b16 %v91, %v90
  %v107 = vpack.c.b16 %v93, %v92
  %v108 = vpack.c.b16 %v95, %v94
  %v109 = vpack.c.b16 %v97, %v96
  %v110 = vpack.c.b16 %v99, %v98
  %v111 = vpack.c.b16 %v101, %v100
  %v112 = vpack.c.b16 %v103, %v102
  %v113 = vpack.c.b16 %v105, %v104
  %122 = vmatprep.subr.bf16.mxu0 0
  %123 = vmatpush1.bf16.msra.mxu0 %v106
  %124 = vmatprep.subr.bf16.mxu0 0
  %125 = vmatpush1.bf16.msra.mxu0 %v107
  %126 = vmatprep.subr.bf16.mxu0 0
  %127 = vmatpush1.bf16.msra.mxu0 %v108
  %128 = vmatprep.subr.bf16.mxu0 0
  %129 = vmatpush1.bf16.msra.mxu0 %v109
  %130 = vmatprep.subr.bf16.mxu0 0
  %131 = vmatpush1.bf16.msra.mxu0 %v110
  %132 = vmatprep.subr.bf16.mxu0 0
  %133 = vmatpush1.bf16.msra.mxu0 %v111
  %134 = vmatprep.subr.bf16.mxu0 0
  %135 = vmatpush1.bf16.msra.mxu0 %v112
  %136 = vmatprep.subr.bf16.mxu0 0
  %137 = vmatpush1.bf16.msra.mxu0 %v113
  %138 = vmatprep.subr.bf16.mxu0 0
  %139 = vmatpush1.bf16.msra.mxu0 0
  %140 = vmatprep.subr.bf16.mxu0 0
  %141 = vmatpush1.bf16.msra.mxu0 0
  %142 = vmatprep.subr.bf16.mxu0 0
  %143 = vmatpush1.bf16.msra.mxu0 0
  %144 = vmatprep.subr.bf16.mxu0 0
  %145 = vmatpush1.bf16.msra.mxu0 0
  %146 = vmatprep.subr.bf16.mxu0 0
  %147 = vmatpush1.bf16.msra.mxu0 0
  %148 = vmatprep.subr.bf16.mxu0 0
  %149 = vmatpush1.bf16.msra.mxu0 0
  %150 = vmatprep.subr.bf16.mxu0 0
  %151 = vmatpush1.bf16.msra.mxu0 0
  %152 = vmatprep.subr.bf16.mxu0 0
  %153 = vmatpush1.bf16.msra.mxu0 0
  %154 = vmatprep.mubr.bf16.mxu0 0
  %155 = vmatmul.mubr.bf16.gmra.mrb[0].mxu0 %v72
  %v156 = vpop.f32.mrb[0].mxu0
  %v157 = vadd.f32 0.0, %v156
  %v158 = vpop.f32.mrb[0].mxu0
  %v159 = vpop.f32.mrb[0].mxu0
  %v160 = vadd.f32 0.0, %v159
  %v161 = vpop.f32.mrb[0].mxu0
  %162 = vdwg.mxu0
  %v165 = vunpack.c.l.b16 %v34
  %v166 = vunpack.c.l.b16 %v35
  %v167 = vpack.c.b16 %v166, %v165
  %v185 = vunpack.c.l.b16 %v52
  %v186 = vunpack.c.l.b16 %v53
  %v187 = vunpack.c.l.b16 %v54
  %v188 = vunpack.c.l.b16 %v55
  %v189 = vunpack.c.l.b16 %v56
  %v190 = vunpack.c.l.b16 %v57
  %v191 = vunpack.c.l.b16 %v58
  %v192 = vunpack.c.l.b16 %v59
  %v193 = vunpack.c.l.b16 %v60
  %v194 = vunpack.c.l.b16 %v61
  %v195 = vunpack.c.l.b16 %v62
  %v196 = vunpack.c.l.b16 %v63
  %v197 = vunpack.c.l.b16 %v64
  %v198 = vunpack.c.l.b16 %v65
  %v199 = vunpack.c.l.b16 %v66
  %v200 = vunpack.c.l.b16 %v67
  %v201 = vpack.c.b16 %v186, %v185
  %v202 = vpack.c.b16 %v188, %v187
  %v203 = vpack.c.b16 %v190, %v189
  %v204 = vpack.c.b16 %v192, %v191
  %v205 = vpack.c.b16 %v194, %v193
  %v206 = vpack.c.b16 %v196, %v195
  %v207 = vpack.c.b16 %v198, %v197
  %v208 = vpack.c.b16 %v200, %v199
  %217 = vmatprep.subr.bf16.mxu0 0
  %218 = vmatpush1.bf16.msra.mxu0 %v201
  %219 = vmatprep.subr.bf16.mxu0 0
  %220 = vmatpush1.bf16.msra.mxu0 %v202
  %221 = vmatprep.subr.bf16.mxu0 0
  %222 = vmatpush1.bf16.msra.mxu0 %v203
  %223 = vmatprep.subr.bf16.mxu0 0
  %224 = vmatpush1.bf16.msra.mxu0 %v204
  %225 = vmatprep.subr.bf16.mxu0 0
  %226 = vmatpush1.bf16.msra.mxu0 %v205
  %227 = vmatprep.subr.bf16.mxu0 0
  %228 = vmatpush1.bf16.msra.mxu0 %v206
  %229 = vmatprep.subr.bf16.mxu0 0
  %230 = vmatpush1.bf16.msra.mxu0 %v207
  %231 = vmatprep.subr.bf16.mxu0 0
  %232 = vmatpush1.bf16.msra.mxu0 %v208
  %233 = vmatprep.subr.bf16.mxu0 0
  %234 = vmatpush1.bf16.msra.mxu0 0
  %235 = vmatprep.subr.bf16.mxu0 0
  %236 = vmatpush1.bf16.msra.mxu0 0
  %237 = vmatprep.subr.bf16.mxu0 0
  %238 = vmatpush1.bf16.msra.mxu0 0
  %239 = vmatprep.subr.bf16.mxu0 0
  %240 = vmatpush1.bf16.msra.mxu0 0
  %241 = vmatprep.subr.bf16.mxu0 0
  %242 = vmatpush1.bf16.msra.mxu0 0
  %243 = vmatprep.subr.bf16.mxu0 0
  %244 = vmatpush1.bf16.msra.mxu0 0
  %245 = vmatprep.subr.bf16.mxu0 0
  %246 = vmatpush1.bf16.msra.mxu0 0
  %247 = vmatprep.subr.bf16.mxu0 0
  %248 = vmatpush1.bf16.msra.mxu0 0
  %249 = vmatprep.mubr.bf16.mxu0 0
  %250 = vmatmul.mubr.bf16.gmra.mrb[0].mxu0 %v167
  %v251 = vpop.f32.mrb[0].mxu0
  %v252 = vadd.f32 0.0, %v251
  %v253 = vpop.f32.mrb[0].mxu0
  %v254 = vpop.f32.mrb[0].mxu0
  %v255 = vadd.f32 0.0, %v254
  %v256 = vpop.f32.mrb[0].mxu0
  %257 = vdwg.mxu0
  %258 = vmatprep.subr.bf16.mxu0 0
  %259 = vmatpush1.bf16.msra.mxu0 %v106
  %260 = vmatprep.subr.bf16.mxu0 0
  %261 = vmatpush1.bf16.msra.mxu0 %v107
  %262 = vmatprep.subr.bf16.mxu0 0
  %263 = vmatpush1.bf16.msra.mxu0 %v108
  %264 = vmatprep.subr.bf16.mxu0 0
  %265 = vmatpush1.bf16.msra.mxu0 %v109
  %266 = vmatprep.subr.bf16.mxu0 0
  %267 = vmatpush1.bf16.msra.mxu0 %v110
  %268 = vmatprep.subr.bf16.mxu0 0
  %269 = vmatpush1.bf16.msra.mxu0 %v111
  %270 = vmatprep.subr.bf16.mxu0 0
  %271 = vmatpush1.bf16.msra.mxu0 %v112
  %272 = vmatprep.subr.bf16.mxu0 0
  %273 = vmatpush1.bf16.msra.mxu0 %v113
  %274 = vmatprep.subr.bf16.mxu0 0
  %275 = vmatpush1.bf16.msra.mxu0 0
  %276 = vmatprep.subr.bf16.mxu0 0
  %277 = vmatpush1.bf16.msra.mxu0 0
  %278 = vmatprep.subr.bf16.mxu0 0
  %279 = vmatpush1.bf16.msra.mxu0 0
  %280 = vmatprep.subr.bf16.mxu0 0
  %281 = vmatpush1.bf16.msra.mxu0 0
  %282 = vmatprep.subr.bf16.mxu0 0
  %283 = vmatpush1.bf16.msra.mxu0 0
  %284 = vmatprep.subr.bf16.mxu0 0
  %285 = vmatpush1.bf16.msra.mxu0 0
  %286 = vmatprep.subr.bf16.mxu0 0
  %287 = vmatpush1.bf16.msra.mxu0 0
  %288 = vmatprep.subr.bf16.mxu0 0
  %289 = vmatpush1.bf16.msra.mxu0 0
  %290 = vmatprep.mubr.bf16.mxu0 0
  %291 = vmatmul.mubr.bf16.gmra.mrb[0].mxu0 %v167
  %v292 = vpop.f32.mrb[0].mxu0
  %v293 = vadd.f32 0.0, %v292
  %v294 = vpop.f32.mrb[0].mxu0
  %v295 = vpop.f32.mrb[0].mxu0
  %v296 = vadd.f32 0.0, %v295
  %v297 = vpop.f32.mrb[0].mxu0
  %298 = vdwg.mxu0
  %v299 = vsub.f32 %v157, %v252
  %v300 = vsub.f32 %v160, %v255
  %301 = vmatprep.subr.bf16.mxu0 0
  %302 = vmatpush1.bf16.msra.mxu0 %v201
  %303 = vmatprep.subr.bf16.mxu0 0
  %304 = vmatpush1.bf16.msra.mxu0 %v202
  %305 = vmatprep.subr.bf16.mxu0 0
  %306 = vmatpush1.bf16.msra.mxu0 %v203
  %307 = vmatprep.subr.bf16.mxu0 0
  %308 = vmatpush1.bf16.msra.mxu0 %v204
  %309 = vmatprep.subr.bf16.mxu0 0
  %310 = vmatpush1.bf16.msra.mxu0 %v205
  %311 = vmatprep.subr.bf16.mxu0 0
  %312 = vmatpush1.bf16.msra.mxu0 %v206
  %313 = vmatprep.subr.bf16.mxu0 0
  %314 = vmatpush1.bf16.msra.mxu0 %v207
  %315 = vmatprep.subr.bf16.mxu0 0
  %316 = vmatpush1.bf16.msra.mxu0 %v208
  %317 = vmatprep.subr.bf16.mxu0 0
  %318 = vmatpush1.bf16.msra.mxu0 0
  %319 = vmatprep.subr.bf16.mxu0 0
  %320 = vmatpush1.bf16.msra.mxu0 0
  %321 = vmatprep.subr.bf16.mxu0 0
  %322 = vmatpush1.bf16.msra.mxu0 0
  %323 = vmatprep.subr.bf16.mxu0 0
  %324 = vmatpush1.bf16.msra.mxu0 0
  %325 = vmatprep.subr.bf16.mxu0 0
  %326 = vmatpush1.bf16.msra.mxu0 0
  %327 = vmatprep.subr.bf16.mxu0 0
  %328 = vmatpush1.bf16.msra.mxu0 0
  %329 = vmatprep.subr.bf16.mxu0 0
  %330 = vmatpush1.bf16.msra.mxu0 0
  %331 = vmatprep.subr.bf16.mxu0 0
  %332 = vmatpush1.bf16.msra.mxu0 0
  %333 = vmatprep.mubr.bf16.mxu0 0
  %334 = vmatmul.mubr.bf16.gmra.mrb[0].mxu0 %v72
  %v335 = vpop.f32.mrb[0].mxu0
  %v336 = vadd.f32 %v293, %v335
  %v337 = vpop.f32.mrb[0].mxu0
  %v338 = vpop.f32.mrb[0].mxu0
  %v339 = vadd.f32 %v296, %v338
  %v340 = vpop.f32.mrb[0].mxu0
  %341 = vdwg.mxu0
  %v342 = vld [vmem:[%s4] sm:$0x1]
  %v344 = vlaneseq
  %v345 = vshrl.u32 %v344, 7
  %v346 = vsub.s32 0, %v345
  %v347 = vrot.slane %v342, %v346
  %v349 = vadd.f32 %v299, %v347
  %v350 = vadd.f32 %v300, %v347
  %v351 = vld [vmem:[%s5] sm:$0x1]
  %v353 = vlaneseq
  %v354 = vshrl.u32 %v353, 7
  %v355 = vsub.s32 0, %v354
  %v356 = vrot.slane %v351, %v355
  %v358 = vadd.f32 %v336, %v356
  %v359 = vadd.f32 %v339, %v356
  %v360 = vld [vmem:[%s6] sm:$0xff]
  %v361 = vld [vmem:[%s6 + $0x8] sm:$0xff]
  %v362 = vadd.f32 %v349, %v360
  %v363 = vadd.f32 %v350, %v361
  %v364 = vld [vmem:[%s7] sm:$0xff]
  %v365 = vld [vmem:[%s7 + $0x8] sm:$0xff]
  %v366 = vadd.f32 %v358, %v364
  %v367 = vadd.f32 %v359, %v365
  %vm368 = vcmask 261120
  %369 = vst.msk [vmem:[%s8] sm:$0xff] %vm368, %v362
  %370 = vst.msk [vmem:[%s8 + $0x8] sm:$0xff] %vm368, %v363
  %371 = vst.msk [vmem:[%s9] sm:$0xff] %vm368, %v366
  %372 = vst.msk [vmem:[%s9 + $0x8] sm:$0xff] %vm368, %v367
  // Predicated region
  $region34: #{bert_polar_forward.14} parent=0 // pred_check
    _
  $region35: #{bert_polar_forward.14} parent=0 // pred_check_branch
    %374 = sbr.rel (0) target = $region37
  $region36: #{bert_polar_forward.14} parent=0 // pred_region
    _
  $region37: #{bert_polar_forward.14} parent=0 // pred_fallthru
    _
  // Predicated region
  $region38: #{bert_polar_forward.14} parent=0 // pred_check
    _
  $region39: #{bert_polar_forward.14} parent=0 // pred_check_branch
    %376 = sbr.rel (0) target = $region41
  $region40: #{bert_polar_forward.14} parent=0 // pred_region
    _
  $region41: #{bert_polar_forward.14} parent=0 // pred_fallthru
    _
  // Predicated region
  $region42: #{bert_polar_forward.14} parent=0 // pred_check
    _
  $region43: #{bert_polar_forward.14} parent=0 // pred_check_branch
    %378 = sbr.rel (0) target = $region45
  $region44: #{bert_polar_forward.14} parent=0 // pred_region
    _
  $region45: #{bert_polar_forward.14} parent=0 // pred_fallthru
    _
  // Predicated region
  $region46: #{bert_polar_forward.14} parent=0 // pred_check
    _
  $region47: #{bert_polar_forward.14} parent=0 // pred_check_branch
    %380 = sbr.rel (0) target = $region49
  $region48: #{bert_polar_forward.14} parent=0 // pred_region
    _
  $region49: #{bert_polar_forward.14} parent=0 // pred_fallthru
    _

// kernel: bert_polar_forward.19
$region0: #{bert_polar_forward.19}
  #allocation0 [shape = 'u32[]', space=smem, size = 0x4, offset = 0x4, fixed_abs, tag = 'smem constant byte address 0x4 - core index']
  #allocation1 [shape = 'u32[144,128]{1,0:T(1,128)}', space=vmem, size = 0x12000, scoped, tag = 'internal scratch']
  %s0 = inlined_call_operand.vmem [shape: bf16[16,128], index: 0, kind: input, shape index: {}]
  %s1 = inlined_call_operand.vmem [shape: bf16[16,128], index: 1, kind: input, shape index: {}]
  %s2 = inlined_call_operand.vmem [shape: bf16[128,32], index: 2, kind: input, shape index: {}]
  %s3 = inlined_call_operand.vmem [shape: bf16[128,32], index: 3, kind: input, shape index: {}]
  %s4 = inlined_call_operand.vmem [shape: f32[1,32], index: 4, kind: input, shape index: {}]
  %s5 = inlined_call_operand.vmem [shape: f32[1,32], index: 5, kind: input, shape index: {}]
  %s6 = inlined_call_operand.vmem [shape: f32[16,32], index: 6, kind: input, shape index: {}]
  %s7 = inlined_call_operand.vmem [shape: f32[16,32], index: 7, kind: input, shape index: {}]
  %s8 = inlined_call_operand.hbm [shape: f32[16,32], index: 8, kind: output, shape index: {0}]
  %s9 = inlined_call_operand.hbm [shape: f32[16,32], index: 9, kind: output, shape index: {1}]
  %10 = xla_tuple %s8, %s9
  %s11 = sld [smem:[#allocation0]]
  $region50: #{bert_polar_forward.19} parent=0
    _
  %s13 = ssub.s32 1, %s11
  %s14 = scalar_select 0, %s13, %s11
  $region1: #{bert_polar_forward.19} parent=0
    #allocation2 [shape = 'u8[8192]{0}', space=vmem, size = 0x2000, scoped, tag = 'output window, operand 0, single buffered']
    #allocation3 [shape = 's32[1]{0}', space=sflag, size = 0x4, scoped, tag = 'scoped memory for bert_polar_forward.19']
    #allocation4 [shape = 'u8[8192]{0}', space=vmem, size = 0x2000, scoped, tag = 'output window, operand 1, single buffered']
    #allocation5 [shape = 's32[1]{0}', space=sflag, size = 0x4, scoped, tag = 'scoped memory for bert_polar_forward.19']
    %15 = vsyncpa [#allocation3], 0
    %16 = vsyncpa [#allocation5], 0
    // Predicated region
    $region2: #{bert_polar_forward.19} parent=1 // pred_check
      _
    $region3: #{bert_polar_forward.19} parent=1 // pred_check_branch
      %18 = sbr.rel (0) target = $region5
    $region4: #{bert_polar_forward.19} parent=1 // pred_region
      _
    $region5: #{bert_polar_forward.19} parent=1 // pred_fallthru
      _
    // Predicated region
    $region6: #{bert_polar_forward.19} parent=1 // pred_check
      _
    $region7: #{bert_polar_forward.19} parent=1 // pred_check_branch
      %20 = sbr.rel (0) target = $region9
    $region8: #{bert_polar_forward.19} parent=1 // pred_region
      _
    $region9: #{bert_polar_forward.19} parent=1 // pred_fallthru
      _
    // Predicated region
    $region10: #{bert_polar_forward.19} parent=1 // pred_check
      _
    $region11: #{bert_polar_forward.19} parent=1 // pred_check_branch
      %22 = sbr.rel (0) target = $region13
    $region12: #{bert_polar_forward.19} parent=1 // pred_region
      _
    $region13: #{bert_polar_forward.19} parent=1 // pred_fallthru
      _
    // Predicated region
    $region14: #{bert_polar_forward.19} parent=1 // pred_check
      _
    $region15: #{bert_polar_forward.19} parent=1 // pred_check_branch
      %24 = sbr.rel (0) target = $region17
    $region16: #{bert_polar_forward.19} parent=1 // pred_region
      _
    $region17: #{bert_polar_forward.19} parent=1 // pred_fallthru
      _
    // Predicated region
    $region18: #{bert_polar_forward.19} parent=1 // pred_check
      _
    $region19: #{bert_polar_forward.19} parent=1 // pred_check_branch
      %26 = sbr.rel (0) target = $region21
    $region20: #{bert_polar_forward.19} parent=1 // pred_region
      _
    $region21: #{bert_polar_forward.19} parent=1 // pred_fallthru
      _
    // Predicated region
    $region22: #{bert_polar_forward.19} parent=1 // pred_check
      _
    $region23: #{bert_polar_forward.19} parent=1 // pred_check_branch
      %28 = sbr.rel (0) target = $region25
    $region24: #{bert_polar_forward.19} parent=1 // pred_region
      _
    $region25: #{bert_polar_forward.19} parent=1 // pred_fallthru
      _
    // Predicated region
    $region26: #{bert_polar_forward.19} parent=1 // pred_check
      _
    $region27: #{bert_polar_forward.19} parent=1 // pred_check_branch
      %30 = sbr.rel (0) target = $region29
    $region28: #{bert_polar_forward.19} parent=1 // pred_region
      _
    $region29: #{bert_polar_forward.19} parent=1 // pred_fallthru
      _
    // Predicated region
    $region30: #{bert_polar_forward.19} parent=1 // pred_check
      _
    $region31: #{bert_polar_forward.19} parent=1 // pred_check_branch
      %32 = sbr.rel (0) target = $region33
    $region32: #{bert_polar_forward.19} parent=1 // pred_region
      _
    $region33: #{bert_polar_forward.19} parent=1 // pred_fallthru
      _
    %v34 = vld [vmem:[%s0] sm:$0xf]
    %v35 = vld [vmem:[%s0 + $0x4] sm:$0xf]
    %v36 = vld [vmem:[%s1] sm:$0xf]
    %v37 = vld [vmem:[%s1 + $0x4] sm:$0xf]
    %v38 = vld [vmem:[%s2] sm:$0xf]
    %v39 = vld [vmem:[%s2 + $0x4] sm:$0xf]
    %v40 = vld [vmem:[%s2 + $0x8] sm:$0xf]
    %v41 = vld [vmem:[%s2 + $0xc] sm:$0xf]
    %v42 = vld [vmem:[%s2 + $0x10] sm:$0xf]
    %v43 = vld [vmem:[%s2 + $0x14] sm:$0xf]
    %v44 = vld [vmem:[%s2 + $0x18] sm:$0xf]
    %v45 = vld [vmem:[%s2 + $0x1c] sm:$0xf]
    %v46 = vld [vmem:[%s2 + $0x20] sm:$0xf]
    %v47 = vld [vmem:[%s2 + $0x24] sm:$0xf]
    %v48 = vld [vmem:[%s2 + $0x28] sm:$0xf]
    %v49 = vld [vmem:[%s2 + $0x2c] sm:$0xf]
    %v50 = vld [vmem:[%s2 + $0x30] sm:$0xf]
    %v51 = vld [vmem:[%s2 + $0x34] sm:$0xf]
    %v52 = vld [vmem:[%s2 + $0x38] sm:$0xf]
    %v53 = vld [vmem:[%s2 + $0x3c] sm:$0xf]
    %v54 = vld [vmem:[%s3] sm:$0xf]
    %v55 = vld [vmem:[%s3 + $0x4] sm:$0xf]
    %v56 = vld [vmem:[%s3 + $0x8] sm:$0xf]
    %v57 = vld [vmem:[%s3 + $0xc] sm:$0xf]
    %v58 = vld [vmem:[%s3 + $0x10] sm:$0xf]
    %v59 = vld [vmem:[%s3 + $0x14] sm:$0xf]
    %v60 = vld [vmem:[%s3 + $0x18] sm:$0xf]
    %v61 = vld [vmem:[%s3 + $0x1c] sm:$0xf]
    %v62 = vld [vmem:[%s3 + $0x20] sm:$0xf]
    %v63 = vld [vmem:[%s3 + $0x24] sm:$0xf]
    %v64 = vld [vmem:[%s3 + $0x28] sm:$0xf]
    %v65 = vld [vmem:[%s3 + $0x2c] sm:$0xf]
    %v66 = vld [vmem:[%s3 + $0x30] sm:$0xf]
    %v67 = vld [vmem:[%s3 + $0x34] sm:$0xf]
    %v68 = vld [vmem:[%s3 + $0x38] sm:$0xf]
    %v69 = vld [vmem:[%s3 + $0x3c] sm:$0xf]
    %v72 = vunpack.c.l.b16 %v34
    %v73 = vunpack.c.l.b16 %v35
    %v74 = vpack.c.b16 %v73, %v72
    %v92 = vunpack.c.l.b16 %v38
    %v93 = vunpack.c.l.b16 %v39
    %v94 = vunpack.c.l.b16 %v40
    %v95 = vunpack.c.l.b16 %v41
    %v96 = vunpack.c.l.b16 %v42
    %v97 = vunpack.c.l.b16 %v43
    %v98 = vunpack.c.l.b16 %v44
    %v99 = vunpack.c.l.b16 %v45
    %v100 = vunpack.c.l.b16 %v46
    %v101 = vunpack.c.l.b16 %v47
    %v102 = vunpack.c.l.b16 %v48
    %v103 = vunpack.c.l.b16 %v49
    %v104 = vunpack.c.l.b16 %v50
    %v105 = vunpack.c.l.b16 %v51
    %v106 = vunpack.c.l.b16 %v52
    %v107 = vunpack.c.l.b16 %v53
    %v108 = vpack.c.b16 %v93, %v92
    %v109 = vpack.c.b16 %v95, %v94
    %v110 = vpack.c.b16 %v97, %v96
    %v111 = vpack.c.b16 %v99, %v98
    %v112 = vpack.c.b16 %v101, %v100
    %v113 = vpack.c.b16 %v103, %v102
    %v114 = vpack.c.b16 %v105, %v104
    %v115 = vpack.c.b16 %v107, %v106
    %124 = vmatprep.subr.bf16.mxu0 0
    %125 = vmatpush1.bf16.msra.mxu0 %v108
    %126 = vmatprep.subr.bf16.mxu0 0
    %127 = vmatpush1.bf16.msra.mxu0 %v109
    %128 = vmatprep.subr.bf16.mxu0 0
    %129 = vmatpush1.bf16.msra.mxu0 %v110
    %130 = vmatprep.subr.bf16.mxu0 0
    %131 = vmatpush1.bf16.msra.mxu0 %v111
    %132 = vmatprep.subr.bf16.mxu0 0
    %133 = vmatpush1.bf16.msra.mxu0 %v112
    %134 = vmatprep.subr.bf16.mxu0 0
    %135 = vmatpush1.bf16.msra.mxu0 %v113
    %136 = vmatprep.subr.bf16.mxu0 0
    %137 = vmatpush1.bf16.msra.mxu0 %v114
    %138 = vmatprep.subr.bf16.mxu0 0
    %139 = vmatpush1.bf16.msra.mxu0 %v115
    %140 = vmatprep.subr.bf16.mxu0 0
    %141 = vmatpush1.bf16.msra.mxu0 0
    %142 = vmatprep.subr.bf16.mxu0 0
    %143 = vmatpush1.bf16.msra.mxu0 0
    %144 = vmatprep.subr.bf16.mxu0 0
    %145 = vmatpush1.bf16.msra.mxu0 0
    %146 = vmatprep.subr.bf16.mxu0 0
    %147 = vmatpush1.bf16.msra.mxu0 0
    %148 = vmatprep.subr.bf16.mxu0 0
    %149 = vmatpush1.bf16.msra.mxu0 0
    %150 = vmatprep.subr.bf16.mxu0 0
    %151 = vmatpush1.bf16.msra.mxu0 0
    %152 = vmatprep.subr.bf16.mxu0 0
    %153 = vmatpush1.bf16.msra.mxu0 0
    %154 = vmatprep.subr.bf16.mxu0 0
    %155 = vmatpush1.bf16.msra.mxu0 0
    %156 = vmatprep.mubr.bf16.mxu0 0
    %157 = vmatmul.mubr.bf16.gmra.mrb[0].mxu0 %v74
    %v158 = vpop.f32.mrb[0].mxu0
    %v159 = vadd.f32 0.0, %v158
    %v160 = vpop.f32.mrb[0].mxu0
    %v161 = vpop.f32.mrb[0].mxu0
    %v162 = vadd.f32 0.0, %v161
    %v163 = vpop.f32.mrb[0].mxu0
    %164 = vdwg.mxu0
    %v167 = vunpack.c.l.b16 %v36
    %v168 = vunpack.c.l.b16 %v37
    %v169 = vpack.c.b16 %v168, %v167
    %v187 = vunpack.c.l.b16 %v54
    %v188 = vunpack.c.l.b16 %v55
    %v189 = vunpack.c.l.b16 %v56
    %v190 = vunpack.c.l.b16 %v57
    %v191 = vunpack.c.l.b16 %v58
    %v192 = vunpack.c.l.b16 %v59
    %v193 = vunpack.c.l.b16 %v60
    %v194 = vunpack.c.l.b16 %v61
    %v195 = vunpack.c.l.b16 %v62
    %v196 = vunpack.c.l.b16 %v63
    %v197 = vunpack.c.l.b16 %v64
    %v198 = vunpack.c.l.b16 %v65
    %v199 = vunpack.c.l.b16 %v66
    %v200 = vunpack.c.l.b16 %v67
    %v201 = vunpack.c.l.b16 %v68
    %v202 = vunpack.c.l.b16 %v69
    %v203 = vpack.c.b16 %v188, %v187
    %v204 = vpack.c.b16 %v190, %v189
    %v205 = vpack.c.b16 %v192, %v191
    %v206 = vpack.c.b16 %v194, %v193
    %v207 = vpack.c.b16 %v196, %v195
    %v208 = vpack.c.b16 %v198, %v197
    %v209 = vpack.c.b16 %v200, %v199
    %v210 = vpack.c.b16 %v202, %v201
    %219 = vmatprep.subr.bf16.mxu0 0
    %220 = vmatpush1.bf16.msra.mxu0 %v203
    %221 = vmatprep.subr.bf16.mxu0 0
    %222 = vmatpush1.bf16.msra.mxu0 %v204
    %223 = vmatprep.subr.bf16.mxu0 0
    %224 = vmatpush1.bf16.msra.mxu0 %v205
    %225 = vmatprep.subr.bf16.mxu0 0
    %226 = vmatpush1.bf16.msra.mxu0 %v206
    %227 = vmatprep.subr.bf16.mxu0 0
    %228 = vmatpush1.bf16.msra.mxu0 %v207
    %229 = vmatprep.subr.bf16.mxu0 0
    %230 = vmatpush1.bf16.msra.mxu0 %v208
    %231 = vmatprep.subr.bf16.mxu0 0
    %232 = vmatpush1.bf16.msra.mxu0 %v209
    %233 = vmatprep.subr.bf16.mxu0 0
    %234 = vmatpush1.bf16.msra.mxu0 %v210
    %235 = vmatprep.subr.bf16.mxu0 0
    %236 = vmatpush1.bf16.msra.mxu0 0
    %237 = vmatprep.subr.bf16.mxu0 0
    %238 = vmatpush1.bf16.msra.mxu0 0
    %239 = vmatprep.subr.bf16.mxu0 0
    %240 = vmatpush1.bf16.msra.mxu0 0
    %241 = vmatprep.subr.bf16.mxu0 0
    %242 = vmatpush1.bf16.msra.mxu0 0
    %243 = vmatprep.subr.bf16.mxu0 0
    %244 = vmatpush1.bf16.msra.mxu0 0
    %245 = vmatprep.subr.bf16.mxu0 0
    %246 = vmatpush1.bf16.msra.mxu0 0
    %247 = vmatprep.subr.bf16.mxu0 0
    %248 = vmatpush1.bf16.msra.mxu0 0
    %249 = vmatprep.subr.bf16.mxu0 0
    %250 = vmatpush1.bf16.msra.mxu0 0
    %251 = vmatprep.mubr.bf16.mxu0 0
    %252 = vmatmul.mubr.bf16.gmra.mrb[0].mxu0 %v169
    %v253 = vpop.f32.mrb[0].mxu0
    %v254 = vadd.f32 0.0, %v253
    %v255 = vpop.f32.mrb[0].mxu0
    %v256 = vpop.f32.mrb[0].mxu0
    %v257 = vadd.f32 0.0, %v256
    %v258 = vpop.f32.mrb[0].mxu0
    %259 = vdwg.mxu0
    %260 = vmatprep.subr.bf16.mxu0 0
    %261 = vmatpush1.bf16.msra.mxu0 %v108
    %262 = vmatprep.subr.bf16.mxu0 0
    %263 = vmatpush1.bf16.msra.mxu0 %v109
    %264 = vmatprep.subr.bf16.mxu0 0
    %265 = vmatpush1.bf16.msra.mxu0 %v110
    %266 = vmatprep.subr.bf16.mxu0 0
    %267 = vmatpush1.bf16.msra.mxu0 %v111
    %268 = vmatprep.subr.bf16.mxu0 0
    %269 = vmatpush1.bf16.msra.mxu0 %v112
    %270 = vmatprep.subr.bf16.mxu0 0
    %271 = vmatpush1.bf16.msra.mxu0 %v113
    %272 = vmatprep.subr.bf16.mxu0 0
    %273 = vmatpush1.bf16.msra.mxu0 %v114
    %274 = vmatprep.subr.bf16.mxu0 0
    %275 = vmatpush1.bf16.msra.mxu0 %v115
    %276 = vmatprep.subr.bf16.mxu0 0
    %277 = vmatpush1.bf16.msra.mxu0 0
    %278 = vmatprep.subr.bf16.mxu0 0
    %279 = vmatpush1.bf16.msra.mxu0 0
    %280 = vmatprep.subr.bf16.mxu0 0
    %281 = vmatpush1.bf16.msra.mxu0 0
    %282 = vmatprep.subr.bf16.mxu0 0
    %283 = vmatpush1.bf16.msra.mxu0 0
    %284 = vmatprep.subr.bf16.mxu0 0
    %285 = vmatpush1.bf16.msra.mxu0 0
    %286 = vmatprep.subr.bf16.mxu0 0
    %287 = vmatpush1.bf16.msra.mxu0 0
    %288 = vmatprep.subr.bf16.mxu0 0
    %289 = vmatpush1.bf16.msra.mxu0 0
    %290 = vmatprep.subr.bf16.mxu0 0
    %291 = vmatpush1.bf16.msra.mxu0 0
    %292 = vmatprep.mubr.bf16.mxu0 0
    %293 = vmatmul.mubr.bf16.gmra.mrb[0].mxu0 %v169
    %v294 = vpop.f32.mrb[0].mxu0
    %v295 = vadd.f32 0.0, %v294
    %v296 = vpop.f32.mrb[0].mxu0
    %v297 = vpop.f32.mrb[0].mxu0
    %v298 = vadd.f32 0.0, %v297
    %v299 = vpop.f32.mrb[0].mxu0
    %300 = vdwg.mxu0
    %v301 = vsub.f32 %v159, %v254
    %v302 = vsub.f32 %v162, %v257
    %303 = vmatprep.subr.bf16.mxu0 0
    %304 = vmatpush1.bf16.msra.mxu0 %v203
    %305 = vmatprep.subr.bf16.mxu0 0
    %306 = vmatpush1.bf16.msra.mxu0 %v204
    %307 = vmatprep.subr.bf16.mxu0 0
    %308 = vmatpush1.bf16.msra.mxu0 %v205
    %309 = vmatprep.subr.bf16.mxu0 0
    %310 = vmatpush1.bf16.msra.mxu0 %v206
    %311 = vmatprep.subr.bf16.mxu0 0
    %312 = vmatpush1.bf16.msra.mxu0 %v207
    %313 = vmatprep.subr.bf16.mxu0 0
    %314 = vmatpush1.bf16.msra.mxu0 %v208
    %315 = vmatprep.subr.bf16.mxu0 0
    %316 = vmatpush1.bf16.msra.mxu0 %v209
    %317 = vmatprep.subr.bf16.mxu0 0
    %318 = vmatpush1.bf16.msra.mxu0 %v210
    %319 = vmatprep.subr.bf16.mxu0 0
    %320 = vmatpush1.bf16.msra.mxu0 0
    %321 = vmatprep.subr.bf16.mxu0 0
    %322 = vmatpush1.bf16.msra.mxu0 0
    %323 = vmatprep.subr.bf16.mxu0 0
    %324 = vmatpush1.bf16.msra.mxu0 0
    %325 = vmatprep.subr.bf16.mxu0 0
    %326 = vmatpush1.bf16.msra.mxu0 0
    %327 = vmatprep.subr.bf16.mxu0 0
    %328 = vmatpush1.bf16.msra.mxu0 0
    %329 = vmatprep.subr.bf16.mxu0 0
    %330 = vmatpush1.bf16.msra.mxu0 0
    %331 = vmatprep.subr.bf16.mxu0 0
    %332 = vmatpush1.bf16.msra.mxu0 0
    %333 = vmatprep.subr.bf16.mxu0 0
    %334 = vmatpush1.bf16.msra.mxu0 0
    %335 = vmatprep.mubr.bf16.mxu0 0
    %336 = vmatmul.mubr.bf16.gmra.mrb[0].mxu0 %v74
    %v337 = vpop.f32.mrb[0].mxu0
    %v338 = vadd.f32 %v295, %v337
    %v339 = vpop.f32.mrb[0].mxu0
    %v340 = vpop.f32.mrb[0].mxu0
    %v341 = vadd.f32 %v298, %v340
    %v342 = vpop.f32.mrb[0].mxu0
    %343 = vdwg.mxu0
    %v344 = vld [vmem:[%s4] sm:$0x1]
    %v346 = vlaneseq
    %v347 = vshrl.u32 %v346, 7
    %v348 = vsub.s32 0, %v347
    %v349 = vrot.slane %v344, %v348
    %v351 = vadd.f32 %v301, %v349
    %v352 = vadd.f32 %v302, %v349
    %v353 = vld [vmem:[%s5] sm:$0x1]
    %v355 = vlaneseq
    %v356 = vshrl.u32 %v355, 7
    %v357 = vsub.s32 0, %v356
    %v358 = vrot.slane %v353, %v357
    %v360 = vadd.f32 %v338, %v358
    %v361 = vadd.f32 %v341, %v358
    %v362 = vld [vmem:[%s6] sm:$0xff]
    %v363 = vld [vmem:[%s6 + $0x8] sm:$0xff]
    %v364 = vadd.f32 %v351, %v362
    %v365 = vadd.f32 %v352, %v363
    %v366 = vld [vmem:[%s7] sm:$0xff]
    %v367 = vld [vmem:[%s7 + $0x8] sm:$0xff]
    %v368 = vadd.f32 %v360, %v366
    %v369 = vadd.f32 %v361, %v367
    %vm370 = vcmask 261120
    %371 = vst.msk [vmem:[#allocation2] sm:$0xff] %vm370, %v364
    %372 = vst.msk [vmem:[#allocation2 + $0x8] sm:$0xff] %vm370, %v365
    %373 = vst.msk [vmem:[#allocation4] sm:$0xff] %vm370, %v368
    %374 = vst.msk [vmem:[#allocation4 + $0x8] sm:$0xff] %vm370, %v369
    // Predicated region
    $region34: #{bert_polar_forward.19} parent=1 // pred_check
      _
    $region35: #{bert_polar_forward.19} parent=1 // pred_check_branch
      %376 = sbr.rel (0) target = $region37
    $region36: #{bert_polar_forward.19} parent=1 // pred_region
      %s378 = ssub.s32 256, 256
      %379 = vsyncadd [#allocation3], %s378
      %s380 = sshll.u32 [#allocation2], 4
      %s381 = int_to_ptr.vmem [resolvable:$true] %s380
      %386 = dma.vmem_to_hbm [thread:$0]  %s381, 256, %s8, [#allocation3], 128, 128, 8
    $region37: #{bert_polar_forward.19} parent=1 // pred_fallthru
      _
    // Predicated region
    $region38: #{bert_polar_forward.19} parent=1 // pred_check
      _
    $region39: #{bert_polar_forward.19} parent=1 // pred_check_branch
      %388 = sbr.rel (0) target = $region41
    $region40: #{bert_polar_forward.19} parent=1 // pred_region
      %s390 = ssub.s32 256, 256
      %391 = vsyncadd [#allocation5], %s390
      %s392 = sshll.u32 [#allocation4], 4
      %s393 = int_to_ptr.vmem [resolvable:$true] %s392
      %398 = dma.vmem_to_hbm [thread:$0]  %s393, 256, %s9, [#allocation5], 128, 128, 8
    $region41: #{bert_polar_forward.19} parent=1 // pred_fallthru
      _
    // Predicated region
    $region42: #{bert_polar_forward.19} parent=1 // pred_check
      _
    $region43: #{bert_polar_forward.19} parent=1 // pred_check_branch
      %400 = sbr.rel (0) target = $region45
    $region44: #{bert_polar_forward.19} parent=1 // pred_region
      %401 = dma.done [#allocation3], 256
    $region45: #{bert_polar_forward.19} parent=1 // pred_fallthru
      _
    // Predicated region
    $region46: #{bert_polar_forward.19} parent=1 // pred_check
      _
    $region47: #{bert_polar_forward.19} parent=1 // pred_check_branch
      %403 = sbr.rel (0) target = $region49
    $region48: #{bert_polar_forward.19} parent=1 // pred_region
      %404 = dma.done [#allocation5], 256
    $region49: #{bert_polar_forward.19} parent=1 // pred_fallthru
      _
    %405 = vsyncpa [#allocation3], 1
    %406 = vsyncpa [#allocation5], 1

</llo_original>
